<compile_context>
chip_gen: v6e
topology: v6e:2x2x1
jax: 0.10.0
libtpu: 0.0.40
codegen_flags: <defaults>
</compile_context>

<pallas_src>
import math
import numpy as np
import jax
import jax.numpy as jnp
from jax.experimental import pallas as pl
from jax.experimental.pallas import tpu as pltpu

# ----------------------- model geometry (from the PyTorch spec) -----------------------
NUM_LIDAR, NUM_GOAL, NUM_WAYPOINT = 20, 2, 12
NUM_INPUTS = NUM_LIDAR + NUM_GOAL + NUM_WAYPOINT        # 34
NUM_ACTIONS = 2
HIDDEN = 256                                            # forced by linear1 in_features
CONV_CH = 32
L0, L1, L2, L3 = 20, 9, 5, 3                            # lidar lengths through the convs
F1, F2, F3 = CONV_CH * L1, CONV_CH * L2, CONV_CH * L3   # 288, 160, 96 (flattened C*L)

# ----------------------- padded kernel layout -----------------------
D_U = 64                      # input tile width: [lidar 0:20 | goal 20:22 | wp 22:34 | act 34:36 | 0]
H2 = 2 * HIDDEN               # 512 (both heads along lanes for the fused stage-1 outputs)
# fused stage-1 matrix column layout (all offsets multiples of 128):
A_OFF_W, A_OFF_G, A_OFF_ACT = 0, 512, 1024
A_OFF_C1 = (1536, 1920)       # per-head conv1 columns (288 used, 96 pad each)
W_A = 2304                    # 18 * 128
D_OUT = 128                   # lane-dense output tile: q1 in col 0, q2 in col 1


# ----------------------- Pallas kernel -----------------------
def qnet_kernel(u_ref, a_ref, s256_ref, m2_ref, m3_ref, bias_ref, out_ref):
    u = u_ref[...]                                        # (tile_b, 64) f32
    b = bias_ref[...]                                     # (16, 512)   f32

    def mm(x, w_bf16):
        # f32 activations -> bf16 at the MXU operand, f32 accumulation.
        return jnp.dot(x.astype(jnp.bfloat16), w_bf16,
                       preferred_element_type=jnp.float32)

    relu = lambda v: jnp.maximum(v, 0.0)

    # Fused stage 1: one matmul computes waypoint/goal projections, the action part of
    # linear1/linear4 and conv1 of both heads.
    s1 = mm(u, a_ref[...])                                # (tile_b, 2304) f32
    w_both = relu(s1[:, A_OFF_W:A_OFF_W + H2] + b[0:1, :])
    g_both = relu(s1[:, A_OFF_G:A_OFF_G + H2] + b[1:2, :])
    act_both = s1[:, A_OFF_ACT:A_OFF_ACT + H2]            # linear1/4 action contribution

    qs = []
    for h in range(2):                                    # per-head dense blocks (no zeros)
        c = h * HIDDEN
        # conv path as exact dense matrices
        l1 = relu(s1[:, A_OFF_C1[h]:A_OFF_C1[h] + F1] + b[5 + h:6 + h, 0:F1])
        l2 = relu(mm(l1, m2_ref[h * F1:(h + 1) * F1, :]) + b[7 + h:8 + h, 0:F2])
        l3 = relu(mm(l2, m3_ref[h * F2:(h + 1) * F2, :]) + b[9 + h:10 + h, 0:F3])
        # linear1 / linear4 split by input block (no concat needed)
        r0 = h * 864
        x = relu(mm(w_both[:, c:c + HIDDEN], s256_ref[r0:r0 + 256, :])
                 + mm(g_both[:, c:c + HIDDEN], s256_ref[r0 + 256:r0 + 512, :])
                 + mm(l3, s256_ref[r0 + 512:r0 + 608, :])
                 + act_both[:, c:c + HIDDEN] + b[2:3, c:c + HIDDEN])
        # linear2 / linear5
        hdn = relu(mm(x, s256_ref[r0 + 608:r0 + 864, :]) + b[3:4, c:c + HIDDEN])
        # linear3 / linear6: f32 VPU multiply + lane reduce (weights live in bias row 4)
        q = jnp.sum(hdn * b[4:5, c:c + HIDDEN], axis=-1, keepdims=True) + b[11:12, h:h + 1]
        qs.append(q)

    col = jax.lax.broadcasted_iota(jnp.int32, out_ref.shape, 1)
    out_ref[...] = jnp.where(col == 0, qs[0], jnp.where(col == 1, qs[1], 0.0))


def qnetwork_forward(state, action, params, max_tile_b=128):
    """Pallas forward of QNetwork_PATH_ICRA2019. Returns (q1, q2), each (B, 1)."""
    B = state.shape[0]
    tile_b = min(max_tile_b, 8 * ((B + 7) // 8))          # sublane-aligned batch tile
    nt = (B + tile_b - 1) // tile_b
    b_pad = nt * tile_b

    u = jnp.zeros((b_pad, D_U), jnp.float32)
    u = u.at[:B, :NUM_INPUTS].set(state.astype(jnp.float32))
    u = u.at[:B, NUM_INPUTS:NUM_INPUTS + NUM_ACTIONS].set(action.astype(jnp.float32))

    a_all, s256, m2, m3, bias = params
    const_spec = lambda arr: pl.BlockSpec(arr.shape, lambda i: (0, 0))  # VMEM-resident

    q = pl.pallas_call(
        qnet_kernel,
        out_shape=jax.ShapeDtypeStruct((b_pad, D_OUT), jnp.float32),
        grid=(nt,),
        in_specs=[pl.BlockSpec((tile_b, D_U), lambda i: (i, 0)),
                  const_spec(a_all), const_spec(s256),
                  const_spec(m2), const_spec(m3), const_spec(bias)],
        out_specs=pl.BlockSpec((tile_b, D_OUT), lambda i: (i, 0)),
        compiler_params=pltpu.CompilerParams(
            dimension_semantics=("parallel",),
            vmem_limit_bytes=16 * 1024 * 1024),
    )(u, a_all, s256, m2, m3, bias)
    return q[:B, 0:1], q[:B, 1:2]


# ----------------------- parameter construction -----------------------
def xavier(key, fan_in, fan_out):
    limit = math.sqrt(6.0 / (fan_in + fan_out))
    return jax.random.uniform(key, (fan_in, fan_out), jnp.float32, -limit, limit)


def conv_init(key, c_out, c_in, k):
    bound = 1.0 / math.sqrt(c_in * k)
    kw, kb = jax.random.split(key)
    w = jax.random.uniform(kw, (c_out, c_in, k), jnp.float32, -bound, bound)
    b = jax.random.uniform(kb, (c_out,), jnp.float32, -bound, bound)
    return w, b


def init_head(key):
    ks = jax.random.split(key, 8)
    cv1_w, cv1_b = conv_init(ks[2], CONV_CH, 1, 5)
    cv2_w, cv2_b = conv_init(ks[3], CONV_CH, CONV_CH, 3)
    cv3_w, cv3_b = conv_init(ks[4], CONV_CH, CONV_CH, 3)
    return dict(
        wp_w=xavier(ks[0], NUM_WAYPOINT, HIDDEN), wp_b=jnp.zeros((HIDDEN,), jnp.float32),
        g_w=xavier(ks[1], NUM_GOAL, HIDDEN), g_b=jnp.zeros((HIDDEN,), jnp.float32),
        cv1_w=cv1_w, cv1_b=cv1_b, cv2_w=cv2_w, cv2_b=cv2_b, cv3_w=cv3_w, cv3_b=cv3_b,
        l1_w=xavier(ks[5], 2 * HIDDEN + F3 + NUM_ACTIONS, HIDDEN),
        l1_b=jnp.zeros((HIDDEN,), jnp.float32),
        l2_w=xavier(ks[6], HIDDEN, HIDDEN), l2_b=jnp.zeros((HIDDEN,), jnp.float32),
        l3_w=xavier(ks[7], HIDDEN, 1), l3_b=jnp.zeros((1,), jnp.float32),
    )


def dense_conv1d(w, stride, padding, l_in):
    """Exact dense matrix M (C_in*L_in, C_out*L_out): flat_CL(conv(x)) = flat_CL(x) @ M."""
    w = np.asarray(w, np.float32)
    c_out, c_in, k = w.shape
    l_out = (l_in + 2 * padding - k) // stride + 1
    m = np.zeros((c_in * l_in, c_out * l_out), np.float32)
    for co in range(c_out):
        for ci in range(c_in):
            for kk in range(k):
                for o in range(l_out):
                    i = stride * o + kk - padding
                    if 0 <= i < l_in:
                        m[ci * l_in + i, co * l_out + o] = w[co, ci, kk]
    return m


def build_params(heads):
    """Pack both heads densely: bf16 weight slabs + a small f32 bias/final-weight array."""
    a_all = np.zeros((D_U, W_A), np.float32)     # fused stage-1 matrix
    s256 = np.zeros((1728, HIDDEN), np.float32)  # per-head linear1(split)/linear2 blocks
    m2 = np.zeros((2 * F1, F2), np.float32)      # dense conv2, per head (row-stacked)
    m3 = np.zeros((2 * F2, F3), np.float32)      # dense conv3, per head (row-stacked)
    bias = np.zeros((16, H2), np.float32)
    for hi, h in enumerate(heads):
        c = hi * HIDDEN
        l1w = np.asarray(h['l1_w'])                                  # (610, 256)
        # fused stage-1 matrix: u = [lidar 0:20 | goal 20:22 | waypoint 22:34 | act 34:36]
        a_all[22:34, A_OFF_W + c:A_OFF_W + c + HIDDEN] = np.asarray(h['wp_w'])
        a_all[20:22, A_OFF_G + c:A_OFF_G + c + HIDDEN] = np.asarray(h['g_w'])
        a_all[34:36, A_OFF_ACT + c:A_OFF_ACT + c + HIDDEN] = l1w[2 * HIDDEN + F3:, :]
        a_all[0:L0, A_OFF_C1[hi]:A_OFF_C1[hi] + F1] = dense_conv1d(h['cv1_w'], 2, 1, L0)
        # conv2 / conv3 dense matrices (per head, dense — no block-diagonal zeros)
        m2[hi * F1:(hi + 1) * F1, :] = dense_conv1d(h['cv2_w'], 2, 1, L1)
        m3[hi * F2:(hi + 1) * F2, :] = dense_conv1d(h['cv3_w'], 2, 1, L2)
        # linear1 / linear4 split by input block, linear2 / linear5
        r0 = hi * 864
        s256[r0:r0 + 256, :] = l1w[0:HIDDEN, :]
        s256[r0 + 256:r0 + 512, :] = l1w[HIDDEN:2 * HIDDEN, :]
        s256[r0 + 512:r0 + 608, :] = l1w[2 * HIDDEN:2 * HIDDEN + F3, :]
        s256[r0 + 608:r0 + 864, :] = np.asarray(h['l2_w'])
        # biases + final-layer weights (kept f32)
        bias[0, c:c + HIDDEN] = np.asarray(h['wp_b'])
        bias[1, c:c + HIDDEN] = np.asarray(h['g_b'])
        bias[2, c:c + HIDDEN] = np.asarray(h['l1_b'])
        bias[3, c:c + HIDDEN] = np.asarray(h['l2_b'])
        bias[4, c:c + HIDDEN] = np.asarray(h['l3_w'])[:, 0]
        bias[5 + hi, 0:F1] = np.repeat(np.asarray(h['cv1_b']), L1)
        bias[7 + hi, 0:F2] = np.repeat(np.asarray(h['cv2_b']), L2)
        bias[9 + hi, 0:F3] = np.repeat(np.asarray(h['cv3_b']), L3)
        bias[11, hi] = np.asarray(h['l3_b'])[0]
    return (jnp.asarray(a_all, jnp.bfloat16), jnp.asarray(s256, jnp.bfloat16),
            jnp.asarray(m2, jnp.bfloat16), jnp.asarray(m3, jnp.bfloat16),
            jnp.asarray(bias, jnp.float32))


# ----------------------- pure-JAX reference (independent path, full f32) -----------------------
def _mm(a, b):
    return jnp.dot(a, b, precision=jax.lax.Precision.HIGHEST)


def conv1d_ref(x, w, b, stride, padding):
    _, _, l_in = x.shape
    c_out, _, k = w.shape
    l_out = (l_in + 2 * padding - k) // stride + 1
    xp = jnp.pad(x, ((0, 0), (0, 0), (padding, padding)))
    cols = []
    for o in range(l_out):
        patch = xp[:, :, o * stride:o * stride + k]
        cols.append(jnp.einsum('bik,oik->bo', patch, w,
                               precision=jax.lax.Precision.HIGHEST))
    return jnp.stack(cols, axis=-1) + b[None, :, None]


def head_ref(h, state, action):
    relu = lambda v: jnp.maximum(v, 0.0)
    waypoint = state[:, -12:]
    lidar = state[:, :20][:, None, :]
    goal = state[:, 20:22]
    w = relu(_mm(waypoint, h['wp_w']) + h['wp_b'])
    g = relu(_mm(goal, h['g_w']) + h['g_b'])
    l = relu(conv1d_ref(lidar, h['cv1_w'], h['cv1_b'], 2, 1))
    l = relu(conv1d_ref(l, h['cv2_w'], h['cv2_b'], 2, 1))
    l = relu(conv1d_ref(l, h['cv3_w'], h['cv3_b'], 2, 1))
    l = l.reshape(l.shape[0], -1)
    xu = jnp.concatenate([w, g, l, action], axis=1)
    x = relu(_mm(xu, h['l1_w']) + h['l1_b'])
    x = relu(_mm(x, h['l2_w']) + h['l2_b'])
    return _mm(x, h['l3_w']) + h['l3_b']


# ----------------------- main -----------------------
if __name__ == "__main__":
    key = jax.random.PRNGKey(0)
    k_data, k_h1, k_h2 = jax.random.split(key, 3)

    head1 = init_head(k_h1)
    head2 = init_head(k_h2)
    params = build_params((head1, head2))

    # small batch (single tile) and a >8 batch (multi-tile / parallel grid) smoke tests
    for batch in (4, 20):
        ks, ka = jax.random.split(jax.random.fold_in(k_data, batch))
        state = jax.random.normal(ks, (batch, NUM_INPUTS), jnp.float32)
        action = jax.random.normal(ka, (batch, NUM_ACTIONS), jnp.float32)

        q1, q2 = qnetwork_forward(state, action, params)
        q1, q2 = jax.block_until_ready((q1, q2))

        r1 = head_ref(head1, state, action)
        r2 = head_ref(head2, state, action)

        assert q1.shape == (batch, 1) and q2.shape == (batch, 1)
        # bf16 weights/activation operands (f32 accumulation) vs full-f32 reference
        assert jnp.allclose(q1, r1, atol=5e-2, rtol=5e-2), (batch, q1, r1)
        assert jnp.allclose(q2, r2, atol=5e-2, rtol=5e-2), (batch, q2, r2)

    print("KERNEL_OK")
</pallas_src>

<mosaic_0001>
module attributes {stable_mosaic.version = 11 : i64} {
  func.func @qnet_kernel(%arg0: i32, %arg1: memref<8x64xf32, #tpu.memory_space<vmem>>, %arg2: memref<64x2304xbf16, #tpu.memory_space<vmem>>, %arg3: memref<1728x256xbf16, #tpu.memory_space<vmem>>, %arg4: memref<576x160xbf16, #tpu.memory_space<vmem>>, %arg5: memref<320x96xbf16, #tpu.memory_space<vmem>>, %arg6: memref<16x512xf32, #tpu.memory_space<vmem>>, %arg7: memref<8x128xf32, #tpu.memory_space<vmem>>) attributes {dimension_semantics = [#tpu.dimension_semantics<parallel>], iteration_bounds = array<i64: 1>, scalar_prefetch = 0 : i64, scratch_operands = 0 : i64, tpu.core_type = #tpu.core_type<tc>, window_params = [{transform_indices = @transform_0, window_bounds = array<i64: 8, 64>}, {pipeline_mode = #tpu.pipeline_mode<synchronous>, transform_indices = @transform_1, window_bounds = array<i64: 64, 2304>}, {pipeline_mode = #tpu.pipeline_mode<synchronous>, transform_indices = @transform_2, window_bounds = array<i64: 1728, 256>}, {pipeline_mode = #tpu.pipeline_mode<synchronous>, transform_indices = @transform_3, window_bounds = array<i64: 576, 160>}, {pipeline_mode = #tpu.pipeline_mode<synchronous>, transform_indices = @transform_4, window_bounds = array<i64: 320, 96>}, {pipeline_mode = #tpu.pipeline_mode<synchronous>, transform_indices = @transform_5, window_bounds = array<i64: 16, 512>}, {transform_indices = @transform_6, window_bounds = array<i64: 8, 128>}]} {
    %c0 = arith.constant 0 : index
    %c0_0 = arith.constant 0 : index
    %0 = vector.load %arg1[%c0, %c0_0] : memref<8x64xf32, #tpu.memory_space<vmem>>, vector<8x64xf32>
    %c0_1 = arith.constant 0 : index
    %c0_2 = arith.constant 0 : index
    %1 = vector.load %arg6[%c0_1, %c0_2] : memref<16x512xf32, #tpu.memory_space<vmem>>, vector<16x512xf32>
    %c0_3 = arith.constant 0 : index
    %c0_4 = arith.constant 0 : index
    %2 = vector.load %arg2[%c0_3, %c0_4] : memref<64x2304xbf16, #tpu.memory_space<vmem>>, vector<64x2304xbf16>
    %3 = arith.truncf %0 : vector<8x64xf32> to vector<8x64xbf16>
    %cst = arith.constant dense<0.000000e+00> : vector<8x2304xf32>
    %4 = tpu.matmul %3, %2, %cst {dimension_numbers = #tpu.dot_dimension_numbers<[1], [0], [0], [1], [0, 0, 1, 1], [], []>} : vector<8x64xbf16>, vector<64x2304xbf16>, vector<8x2304xf32> -> vector<8x2304xf32>
    %5 = vector.extract_strided_slice %4 {offsets = [0, 0], sizes = [8, 512], strides = [1, 1]} : vector<8x2304xf32> to vector<8x512xf32>
    %6 = vector.extract_strided_slice %1 {offsets = [0, 0], sizes = [1, 512], strides = [1, 1]} : vector<16x512xf32> to vector<1x512xf32>
    %7 = vector.broadcast %6 : vector<1x512xf32> to vector<8x512xf32>
    %8 = arith.addf %5, %7 : vector<8x512xf32>
    %cst_5 = arith.constant 0.000000e+00 : f32
    %9 = vector.broadcast %cst_5 : f32 to vector<8x512xf32>
    %10 = arith.maximumf %8, %9 : vector<8x512xf32>
    %11 = vector.extract_strided_slice %4 {offsets = [0, 512], sizes = [8, 512], strides = [1, 1]} : vector<8x2304xf32> to vector<8x512xf32>
    %12 = vector.extract_strided_slice %1 {offsets = [1, 0], sizes = [1, 512], strides = [1, 1]} : vector<16x512xf32> to vector<1x512xf32>
    %13 = vector.broadcast %12 : vector<1x512xf32> to vector<8x512xf32>
    %14 = arith.addf %11, %13 : vector<8x512xf32>
    %cst_6 = arith.constant 0.000000e+00 : f32
    %15 = vector.broadcast %cst_6 : f32 to vector<8x512xf32>
    %16 = arith.maximumf %14, %15 : vector<8x512xf32>
    %17 = vector.extract_strided_slice %4 {offsets = [0, 1024], sizes = [8, 512], strides = [1, 1]} : vector<8x2304xf32> to vector<8x512xf32>
    %18 = vector.extract_strided_slice %4 {offsets = [0, 1536], sizes = [8, 288], strides = [1, 1]} : vector<8x2304xf32> to vector<8x288xf32>
    %19 = vector.extract_strided_slice %1 {offsets = [5, 0], sizes = [1, 288], strides = [1, 1]} : vector<16x512xf32> to vector<1x288xf32>
    %20 = vector.broadcast %19 : vector<1x288xf32> to vector<8x288xf32>
    %21 = arith.addf %18, %20 : vector<8x288xf32>
    %cst_7 = arith.constant 0.000000e+00 : f32
    %22 = vector.broadcast %cst_7 : f32 to vector<8x288xf32>
    %23 = arith.maximumf %21, %22 : vector<8x288xf32>
    %c0_8 = arith.constant 0 : index
    %c0_9 = arith.constant 0 : index
    %24 = vector.load %arg4[%c0_8, %c0_9] : memref<576x160xbf16, #tpu.memory_space<vmem>>, vector<288x160xbf16>
    %25 = arith.truncf %23 : vector<8x288xf32> to vector<8x288xbf16>
    %cst_10 = arith.constant dense<0.000000e+00> : vector<8x160xf32>
    %26 = tpu.matmul %25, %24, %cst_10 {dimension_numbers = #tpu.dot_dimension_numbers<[1], [0], [0], [1], [0, 0, 1, 1], [], []>} : vector<8x288xbf16>, vector<288x160xbf16>, vector<8x160xf32> -> vector<8x160xf32>
    %27 = vector.extract_strided_slice %1 {offsets = [7, 0], sizes = [1, 160], strides = [1, 1]} : vector<16x512xf32> to vector<1x160xf32>
    %28 = vector.broadcast %27 : vector<1x160xf32> to vector<8x160xf32>
    %29 = arith.addf %26, %28 : vector<8x160xf32>
    %cst_11 = arith.constant 0.000000e+00 : f32
    %30 = vector.broadcast %cst_11 : f32 to vector<8x160xf32>
    %31 = arith.maximumf %29, %30 : vector<8x160xf32>
    %c0_12 = arith.constant 0 : index
    %c0_13 = arith.constant 0 : index
    %32 = vector.load %arg5[%c0_12, %c0_13] : memref<320x96xbf16, #tpu.memory_space<vmem>>, vector<160x96xbf16>
    %33 = arith.truncf %31 : vector<8x160xf32> to vector<8x160xbf16>
    %cst_14 = arith.constant dense<0.000000e+00> : vector<8x96xf32>
    %34 = tpu.matmul %33, %32, %cst_14 {dimension_numbers = #tpu.dot_dimension_numbers<[1], [0], [0], [1], [0, 0, 1, 1], [], []>} : vector<8x160xbf16>, vector<160x96xbf16>, vector<8x96xf32> -> vector<8x96xf32>
    %35 = vector.extract_strided_slice %1 {offsets = [9, 0], sizes = [1, 96], strides = [1, 1]} : vector<16x512xf32> to vector<1x96xf32>
    %36 = vector.broadcast %35 : vector<1x96xf32> to vector<8x96xf32>
    %37 = arith.addf %34, %36 : vector<8x96xf32>
    %cst_15 = arith.constant 0.000000e+00 : f32
    %38 = vector.broadcast %cst_15 : f32 to vector<8x96xf32>
    %39 = arith.maximumf %37, %38 : vector<8x96xf32>
    %40 = vector.extract_strided_slice %10 {offsets = [0, 0], sizes = [8, 256], strides = [1, 1]} : vector<8x512xf32> to vector<8x256xf32>
    %c0_16 = arith.constant 0 : index
    %c0_17 = arith.constant 0 : index
    %41 = vector.load %arg3[%c0_16, %c0_17] : memref<1728x256xbf16, #tpu.memory_space<vmem>>, vector<256x256xbf16>
    %42 = arith.truncf %40 : vector<8x256xf32> to vector<8x256xbf16>
    %cst_18 = arith.constant dense<0.000000e+00> : vector<8x256xf32>
    %43 = tpu.matmul %42, %41, %cst_18 {dimension_numbers = #tpu.dot_dimension_numbers<[1], [0], [0], [1], [0, 0, 1, 1], [], []>} : vector<8x256xbf16>, vector<256x256xbf16>, vector<8x256xf32> -> vector<8x256xf32>
    %44 = vector.extract_strided_slice %16 {offsets = [0, 0], sizes = [8, 256], strides = [1, 1]} : vector<8x512xf32> to vector<8x256xf32>
    %c256 = arith.constant 256 : index
    %c0_19 = arith.constant 0 : index
    %45 = vector.load %arg3[%c256, %c0_19] : memref<1728x256xbf16, #tpu.memory_space<vmem>>, vector<256x256xbf16>
    %46 = arith.truncf %44 : vector<8x256xf32> to vector<8x256xbf16>
    %cst_20 = arith.constant dense<0.000000e+00> : vector<8x256xf32>
    %47 = tpu.matmul %46, %45, %cst_20 {dimension_numbers = #tpu.dot_dimension_numbers<[1], [0], [0], [1], [0, 0, 1, 1], [], []>} : vector<8x256xbf16>, vector<256x256xbf16>, vector<8x256xf32> -> vector<8x256xf32>
    %48 = arith.addf %43, %47 : vector<8x256xf32>
    %c512 = arith.constant 512 : index
    %c0_21 = arith.constant 0 : index
    %49 = vector.load %arg3[%c512, %c0_21] : memref<1728x256xbf16, #tpu.memory_space<vmem>>, vector<96x256xbf16>
    %50 = arith.truncf %39 : vector<8x96xf32> to vector<8x96xbf16>
    %cst_22 = arith.constant dense<0.000000e+00> : vector<8x256xf32>
    %51 = tpu.matmul %50, %49, %cst_22 {dimension_numbers = #tpu.dot_dimension_numbers<[1], [0], [0], [1], [0, 0, 1, 1], [], []>} : vector<8x96xbf16>, vector<96x256xbf16>, vector<8x256xf32> -> vector<8x256xf32>
    %52 = arith.addf %48, %51 : vector<8x256xf32>
    %53 = vector.extract_strided_slice %17 {offsets = [0, 0], sizes = [8, 256], strides = [1, 1]} : vector<8x512xf32> to vector<8x256xf32>
    %54 = arith.addf %52, %53 : vector<8x256xf32>
    %55 = vector.extract_strided_slice %1 {offsets = [2, 0], sizes = [1, 256], strides = [1, 1]} : vector<16x512xf32> to vector<1x256xf32>
    %56 = vector.broadcast %55 : vector<1x256xf32> to vector<8x256xf32>
    %57 = arith.addf %54, %56 : vector<8x256xf32>
    %cst_23 = arith.constant 0.000000e+00 : f32
    %58 = vector.broadcast %cst_23 : f32 to vector<8x256xf32>
    %59 = arith.maximumf %57, %58 : vector<8x256xf32>
    %c608 = arith.constant 608 : index
    %c0_24 = arith.constant 0 : index
    %60 = vector.load %arg3[%c608, %c0_24] : memref<1728x256xbf16, #tpu.memory_space<vmem>>, vector<256x256xbf16>
    %61 = arith.truncf %59 : vector<8x256xf32> to vector<8x256xbf16>
    %cst_25 = arith.constant dense<0.000000e+00> : vector<8x256xf32>
    %62 = tpu.matmul %61, %60, %cst_25 {dimension_numbers = #tpu.dot_dimension_numbers<[1], [0], [0], [1], [0, 0, 1, 1], [], []>} : vector<8x256xbf16>, vector<256x256xbf16>, vector<8x256xf32> -> vector<8x256xf32>
    %63 = vector.extract_strided_slice %1 {offsets = [3, 0], sizes = [1, 256], strides = [1, 1]} : vector<16x512xf32> to vector<1x256xf32>
    %64 = vector.broadcast %63 : vector<1x256xf32> to vector<8x256xf32>
    %65 = arith.addf %62, %64 : vector<8x256xf32>
    %cst_26 = arith.constant 0.000000e+00 : f32
    %66 = vector.broadcast %cst_26 : f32 to vector<8x256xf32>
    %67 = arith.maximumf %65, %66 : vector<8x256xf32>
    %68 = vector.extract_strided_slice %1 {offsets = [4, 0], sizes = [1, 256], strides = [1, 1]} : vector<16x512xf32> to vector<1x256xf32>
    %69 = vector.broadcast %68 : vector<1x256xf32> to vector<8x256xf32>
    %70 = arith.mulf %67, %69 : vector<8x256xf32>
    %cst_27 = arith.constant dense<0.000000e+00> : vector<8xf32>
    %71 = vector.multi_reduction <add>, %70, %cst_27 [1] : vector<8x256xf32> to vector<8xf32>
    %72 = vector.shape_cast %71 : vector<8xf32> to vector<8x1xf32>
    %73 = vector.extract_strided_slice %1 {offsets = [11, 0], sizes = [1, 1], strides = [1, 1]} : vector<16x512xf32> to vector<1x1xf32>
    %74 = vector.broadcast %73 : vector<1x1xf32> to vector<8x1xf32>
    %75 = arith.addf %72, %74 : vector<8x1xf32>
    %76 = vector.extract_strided_slice %4 {offsets = [0, 1920], sizes = [8, 288], strides = [1, 1]} : vector<8x2304xf32> to vector<8x288xf32>
    %77 = vector.extract_strided_slice %1 {offsets = [6, 0], sizes = [1, 288], strides = [1, 1]} : vector<16x512xf32> to vector<1x288xf32>
    %78 = vector.broadcast %77 : vector<1x288xf32> to vector<8x288xf32>
    %79 = arith.addf %76, %78 : vector<8x288xf32>
    %cst_28 = arith.constant 0.000000e+00 : f32
    %80 = vector.broadcast %cst_28 : f32 to vector<8x288xf32>
    %81 = arith.maximumf %79, %80 : vector<8x288xf32>
    %c288 = arith.constant 288 : index
    %c0_29 = arith.constant 0 : index
    %82 = vector.load %arg4[%c288, %c0_29] : memref<576x160xbf16, #tpu.memory_space<vmem>>, vector<288x160xbf16>
    %83 = arith.truncf %81 : vector<8x288xf32> to vector<8x288xbf16>
    %cst_30 = arith.constant dense<0.000000e+00> : vector<8x160xf32>
    %84 = tpu.matmul %83, %82, %cst_30 {dimension_numbers = #tpu.dot_dimension_numbers<[1], [0], [0], [1], [0, 0, 1, 1], [], []>} : vector<8x288xbf16>, vector<288x160xbf16>, vector<8x160xf32> -> vector<8x160xf32>
    %85 = vector.extract_strided_slice %1 {offsets = [8, 0], sizes = [1, 160], strides = [1, 1]} : vector<16x512xf32> to vector<1x160xf32>
    %86 = vector.broadcast %85 : vector<1x160xf32> to vector<8x160xf32>
    %87 = arith.addf %84, %86 : vector<8x160xf32>
    %cst_31 = arith.constant 0.000000e+00 : f32
    %88 = vector.broadcast %cst_31 : f32 to vector<8x160xf32>
    %89 = arith.maximumf %87, %88 : vector<8x160xf32>
    %c160 = arith.constant 160 : index
    %c0_32 = arith.constant 0 : index
    %90 = vector.load %arg5[%c160, %c0_32] : memref<320x96xbf16, #tpu.memory_space<vmem>>, vector<160x96xbf16>
    %91 = arith.truncf %89 : vector<8x160xf32> to vector<8x160xbf16>
    %cst_33 = arith.constant dense<0.000000e+00> : vector<8x96xf32>
    %92 = tpu.matmul %91, %90, %cst_33 {dimension_numbers = #tpu.dot_dimension_numbers<[1], [0], [0], [1], [0, 0, 1, 1], [], []>} : vector<8x160xbf16>, vector<160x96xbf16>, vector<8x96xf32> -> vector<8x96xf32>
    %93 = vector.extract_strided_slice %1 {offsets = [10, 0], sizes = [1, 96], strides = [1, 1]} : vector<16x512xf32> to vector<1x96xf32>
    %94 = vector.broadcast %93 : vector<1x96xf32> to vector<8x96xf32>
    %95 = arith.addf %92, %94 : vector<8x96xf32>
    %cst_34 = arith.constant 0.000000e+00 : f32
    %96 = vector.broadcast %cst_34 : f32 to vector<8x96xf32>
    %97 = arith.maximumf %95, %96 : vector<8x96xf32>
    %98 = vector.extract_strided_slice %10 {offsets = [0, 256], sizes = [8, 256], strides = [1, 1]} : vector<8x512xf32> to vector<8x256xf32>
    %c864 = arith.constant 864 : index
    %c0_35 = arith.constant 0 : index
    %99 = vector.load %arg3[%c864, %c0_35] : memref<1728x256xbf16, #tpu.memory_space<vmem>>, vector<256x256xbf16>
    %100 = arith.truncf %98 : vector<8x256xf32> to vector<8x256xbf16>
    %cst_36 = arith.constant dense<0.000000e+00> : vector<8x256xf32>
    %101 = tpu.matmul %100, %99, %cst_36 {dimension_numbers = #tpu.dot_dimension_numbers<[1], [0], [0], [1], [0, 0, 1, 1], [], []>} : vector<8x256xbf16>, vector<256x256xbf16>, vector<8x256xf32> -> vector<8x256xf32>
    %102 = vector.extract_strided_slice %16 {offsets = [0, 256], sizes = [8, 256], strides = [1, 1]} : vector<8x512xf32> to vector<8x256xf32>
    %c1120 = arith.constant 1120 : index
    %c0_37 = arith.constant 0 : index
    %103 = vector.load %arg3[%c1120, %c0_37] : memref<1728x256xbf16, #tpu.memory_space<vmem>>, vector<256x256xbf16>
    %104 = arith.truncf %102 : vector<8x256xf32> to vector<8x256xbf16>
    %cst_38 = arith.constant dense<0.000000e+00> : vector<8x256xf32>
    %105 = tpu.matmul %104, %103, %cst_38 {dimension_numbers = #tpu.dot_dimension_numbers<[1], [0], [0], [1], [0, 0, 1, 1], [], []>} : vector<8x256xbf16>, vector<256x256xbf16>, vector<8x256xf32> -> vector<8x256xf32>
    %106 = arith.addf %101, %105 : vector<8x256xf32>
    %c1376 = arith.constant 1376 : index
    %c0_39 = arith.constant 0 : index
    %107 = vector.load %arg3[%c1376, %c0_39] : memref<1728x256xbf16, #tpu.memory_space<vmem>>, vector<96x256xbf16>
    %108 = arith.truncf %97 : vector<8x96xf32> to vector<8x96xbf16>
    %cst_40 = arith.constant dense<0.000000e+00> : vector<8x256xf32>
    %109 = tpu.matmul %108, %107, %cst_40 {dimension_numbers = #tpu.dot_dimension_numbers<[1], [0], [0], [1], [0, 0, 1, 1], [], []>} : vector<8x96xbf16>, vector<96x256xbf16>, vector<8x256xf32> -> vector<8x256xf32>
    %110 = arith.addf %106, %109 : vector<8x256xf32>
    %111 = vector.extract_strided_slice %17 {offsets = [0, 256], sizes = [8, 256], strides = [1, 1]} : vector<8x512xf32> to vector<8x256xf32>
    %112 = arith.addf %110, %111 : vector<8x256xf32>
    %113 = vector.extract_strided_slice %1 {offsets = [2, 256], sizes = [1, 256], strides = [1, 1]} : vector<16x512xf32> to vector<1x256xf32>
    %114 = vector.broadcast %113 : vector<1x256xf32> to vector<8x256xf32>
    %115 = arith.addf %112, %114 : vector<8x256xf32>
    %cst_41 = arith.constant 0.000000e+00 : f32
    %116 = vector.broadcast %cst_41 : f32 to vector<8x256xf32>
    %117 = arith.maximumf %115, %116 : vector<8x256xf32>
    %c1472 = arith.constant 1472 : index
    %c0_42 = arith.constant 0 : index
    %118 = vector.load %arg3[%c1472, %c0_42] : memref<1728x256xbf16, #tpu.memory_space<vmem>>, vector<256x256xbf16>
    %119 = arith.truncf %117 : vector<8x256xf32> to vector<8x256xbf16>
    %cst_43 = arith.constant dense<0.000000e+00> : vector<8x256xf32>
    %120 = tpu.matmul %119, %118, %cst_43 {dimension_numbers = #tpu.dot_dimension_numbers<[1], [0], [0], [1], [0, 0, 1, 1], [], []>} : vector<8x256xbf16>, vector<256x256xbf16>, vector<8x256xf32> -> vector<8x256xf32>
    %121 = vector.extract_strided_slice %1 {offsets = [3, 256], sizes = [1, 256], strides = [1, 1]} : vector<16x512xf32> to vector<1x256xf32>
    %122 = vector.broadcast %121 : vector<1x256xf32> to vector<8x256xf32>
    %123 = arith.addf %120, %122 : vector<8x256xf32>
    %cst_44 = arith.constant 0.000000e+00 : f32
    %124 = vector.broadcast %cst_44 : f32 to vector<8x256xf32>
    %125 = arith.maximumf %123, %124 : vector<8x256xf32>
    %126 = vector.extract_strided_slice %1 {offsets = [4, 256], sizes = [1, 256], strides = [1, 1]} : vector<16x512xf32> to vector<1x256xf32>
    %127 = vector.broadcast %126 : vector<1x256xf32> to vector<8x256xf32>
    %128 = arith.mulf %125, %127 : vector<8x256xf32>
    %cst_45 = arith.constant dense<0.000000e+00> : vector<8xf32>
    %129 = vector.multi_reduction <add>, %128, %cst_45 [1] : vector<8x256xf32> to vector<8xf32>
    %130 = vector.shape_cast %129 : vector<8xf32> to vector<8x1xf32>
    %131 = vector.extract_strided_slice %1 {offsets = [11, 1], sizes = [1, 1], strides = [1, 1]} : vector<16x512xf32> to vector<1x1xf32>
    %132 = vector.broadcast %131 : vector<1x1xf32> to vector<8x1xf32>
    %133 = arith.addf %130, %132 : vector<8x1xf32>
    %134 = tpu.iota {dimensions = array<i32: 1>} : vector<8x128xi32>
    %c0_i32 = arith.constant 0 : i32
    %135 = vector.broadcast %c0_i32 : i32 to vector<8x128xi32>
    %136 = arith.cmpi eq, %134, %135 : vector<8x128xi32>
    %c1_i32 = arith.constant 1 : i32
    %137 = vector.broadcast %c1_i32 : i32 to vector<8x128xi32>
    %138 = arith.cmpi eq, %134, %137 : vector<8x128xi32>
    %cst_46 = arith.constant 0.000000e+00 : f32
    %139 = vector.shape_cast %133 : vector<8x1xf32> to vector<8x1xf32>
    %140 = vector.broadcast %139 : vector<8x1xf32> to vector<8x128xf32>
    %141 = vector.broadcast %cst_46 : f32 to vector<8x128xf32>
    %142 = arith.select %138, %140, %141 : vector<8x128xi1>, vector<8x128xf32>
    %143 = vector.shape_cast %75 : vector<8x1xf32> to vector<8x1xf32>
    %144 = vector.broadcast %143 : vector<8x1xf32> to vector<8x128xf32>
    %145 = arith.select %136, %144, %142 : vector<8x128xi1>, vector<8x128xf32>
    %c0_47 = arith.constant 0 : index
    %c0_48 = arith.constant 0 : index
    %146 = vector.load %arg7[%c0_47, %c0_48] : memref<8x128xf32, #tpu.memory_space<vmem>>, vector<8x128xf32>
    tpu.vector_store %arg7[%c0_47, %c0_48], %145 {strides = array<i32>} : memref<8x128xf32, #tpu.memory_space<vmem>>, vector<8x128xf32>,
    return
  }
  func.func @transform_0(%arg0: i32) -> (i32, i32) {
    %c0_i32 = arith.constant 0 : i32
    %c0_i32_0 = arith.constant 0 : i32
    return %arg0, %c0_i32 : i32, i32
  }
  func.func @transform_1(%arg0: i32) -> (i32, i32) {
    %c0_i32 = arith.constant 0 : i32
    %c0_i32_0 = arith.constant 0 : i32
    %c0_i32_1 = arith.constant 0 : i32
    return %c0_i32, %c0_i32_0 : i32, i32
  }
  func.func @transform_2(%arg0: i32) -> (i32, i32) {
    %c0_i32 = arith.constant 0 : i32
    %c0_i32_0 = arith.constant 0 : i32
    %c0_i32_1 = arith.constant 0 : i32
    return %c0_i32, %c0_i32_0 : i32, i32
  }
  func.func @transform_3(%arg0: i32) -> (i32, i32) {
    %c0_i32 = arith.constant 0 : i32
    %c0_i32_0 = arith.constant 0 : i32
    %c0_i32_1 = arith.constant 0 : i32
    return %c0_i32, %c0_i32_0 : i32, i32
  }
  func.func @transform_4(%arg0: i32) -> (i32, i32) {
    %c0_i32 = arith.constant 0 : i32
    %c0_i32_0 = arith.constant 0 : i32
    %c0_i32_1 = arith.constant 0 : i32
    return %c0_i32, %c0_i32_0 : i32, i32
  }
  func.func @transform_5(%arg0: i32) -> (i32, i32) {
    %c0_i32 = arith.constant 0 : i32
    %c0_i32_0 = arith.constant 0 : i32
    %c0_i32_1 = arith.constant 0 : i32
    return %c0_i32, %c0_i32_0 : i32, i32
  }
  func.func @transform_6(%arg0: i32) -> (i32, i32) {
    %c0_i32 = arith.constant 0 : i32
    %c0_i32_0 = arith.constant 0 : i32
    return %arg0, %c0_i32 : i32, i32
  }
}

</mosaic_0001>

<llo_original>
// kernel: tpu_custom_call.1
$region0: #{tpu_custom_call.1}
  #allocation0 [shape = 'u32[]', space=smem, size = 0x4, offset = 0x4, fixed_abs, tag = 'smem constant byte address 0x4 - core index']
  #allocation1 [shape = 'u32[144,128]{1,0:T(1,128)}', space=vmem, size = 0x12000, scoped, tag = 'internal scratch']
  %s0 = inlined_call_operand.vmem [shape: f32[8,64], index: 0, kind: input, shape index: {}]
  %s1 = inlined_call_operand.vmem [shape: bf16[64,2304], index: 1, kind: input, shape index: {}]
  %s2 = inlined_call_operand.hbm [shape: bf16[1728,256], index: 2, kind: input, shape index: {}]
  %s3 = inlined_call_operand.vmem [shape: bf16[576,160], index: 3, kind: input, shape index: {}]
  %s4 = inlined_call_operand.vmem [shape: bf16[320,96], index: 4, kind: input, shape index: {}]
  %s5 = inlined_call_operand.vmem [shape: f32[16,512], index: 5, kind: input, shape index: {}]
  %s6 = inlined_call_operand.hbm [shape: f32[8,128], index: 6, kind: output, shape index: {}]
  %s7 = sld [smem:[#allocation0]]
  $region38: #{tpu_custom_call.1} parent=0
    _
  %s9 = ssub.s32 1, %s7
  %s10 = scalar_select 0, %s9, %s7
  $region1: #{tpu_custom_call.1} parent=0
    #allocation2 [shape = 'u8[884736]{0}', space=vmem, size = 0xd8000, scoped, tag = 'input window, operand 2, single buffered']
    #allocation3 [shape = 's32[1]{0}', space=sflag, size = 0x4, scoped, tag = 'scoped memory for tpu_custom_call.1']
    #allocation4 [shape = 's32[1]{0}', space=sflag, size = 0x4, scoped, tag = 'scoped memory for tpu_custom_call.1']
    #allocation5 [shape = 'u8[4096]{0}', space=vmem, size = 0x1000, scoped, tag = 'output window, operand 0, single buffered']
    %11 = vsyncpa [#allocation3], 0
    %12 = vsyncpa [#allocation4], 0
    // Predicated region
    $region2: #{tpu_custom_call.1} parent=1 // pred_check
      _
    $region3: #{tpu_custom_call.1} parent=1 // pred_check_branch
      %14 = sbr.rel (0) target = $region5
    $region4: #{tpu_custom_call.1} parent=1 // pred_region
      _
    $region5: #{tpu_custom_call.1} parent=1 // pred_fallthru
      _
    // Predicated region
    $region6: #{tpu_custom_call.1} parent=1 // pred_check
      _
    $region7: #{tpu_custom_call.1} parent=1 // pred_check_branch
      %16 = sbr.rel (0) target = $region9
    $region8: #{tpu_custom_call.1} parent=1 // pred_region
      _
    $region9: #{tpu_custom_call.1} parent=1 // pred_fallthru
      _
    // Predicated region
    $region10: #{tpu_custom_call.1} parent=1 // pred_check
      _
    $region11: #{tpu_custom_call.1} parent=1 // pred_check_branch
      %18 = sbr.rel (0) target = $region13
    $region12: #{tpu_custom_call.1} parent=1 // pred_region
      %s20 = ssub.s32 27648, 27648
      %21 = vsyncadd [#allocation3], %s20
      %s22 = sshll.u32 [#allocation2], 4
      %s23 = int_to_ptr.vmem [resolvable:$true] %s22
      %28 = dma.hbm_to_vmem [thread:$0]  %s2, 27648, %s23, [#allocation3], 128, 128, 8
    $region13: #{tpu_custom_call.1} parent=1 // pred_fallthru
      _
    // Predicated region
    $region14: #{tpu_custom_call.1} parent=1 // pred_check
      _
    $region15: #{tpu_custom_call.1} parent=1 // pred_check_branch
      %30 = sbr.rel (0) target = $region17
    $region16: #{tpu_custom_call.1} parent=1 // pred_region
      _
    $region17: #{tpu_custom_call.1} parent=1 // pred_fallthru
      _
    // Predicated region
    $region18: #{tpu_custom_call.1} parent=1 // pred_check
      _
    $region19: #{tpu_custom_call.1} parent=1 // pred_check_branch
      %32 = sbr.rel (0) target = $region21
    $region20: #{tpu_custom_call.1} parent=1 // pred_region
      _
    $region21: #{tpu_custom_call.1} parent=1 // pred_fallthru
      _
    // Predicated region
    $region22: #{tpu_custom_call.1} parent=1 // pred_check
      _
    $region23: #{tpu_custom_call.1} parent=1 // pred_check_branch
      %34 = sbr.rel (0) target = $region25
    $region24: #{tpu_custom_call.1} parent=1 // pred_region
      _
    $region25: #{tpu_custom_call.1} parent=1 // pred_fallthru
      _
    // Predicated region
    $region26: #{tpu_custom_call.1} parent=1 // pred_check
      _
    $region27: #{tpu_custom_call.1} parent=1 // pred_check_branch
      %36 = sbr.rel (0) target = $region29
    $region28: #{tpu_custom_call.1} parent=1 // pred_region
      %37 = dma.done [#allocation3], 27648
    $region29: #{tpu_custom_call.1} parent=1 // pred_fallthru
      _
    %v39 = vld [vmem:[%s0] sm:$0xff]
    %v40 = vld [vmem:[%s5] sm:$0xff]
    %v41 = vld [vmem:[%s5 + $0x8] sm:$0xff]
    %v42 = vld [vmem:[%s5 + $0x10] sm:$0xff]
    %v43 = vld [vmem:[%s5 + $0x18] sm:$0xff]
    %v44 = vld [vmem:[%s5 + $0x20] sm:$0xff]
    %v45 = vld [vmem:[%s5 + $0x28] sm:$0xff]
    %v46 = vld [vmem:[%s1] sm:$0xff]
    %v47 = vld [vmem:[%s1 + $0x8] sm:$0xff]
    %v48 = vld [vmem:[%s1 + $0x10] sm:$0xff]
    %v49 = vld [vmem:[%s1 + $0x18] sm:$0xff]
    %v50 = vld [vmem:[%s1 + $0x20] sm:$0xff]
    %v51 = vld [vmem:[%s1 + $0x28] sm:$0xff]
    %v52 = vld [vmem:[%s1 + $0x30] sm:$0xff]
    %v53 = vld [vmem:[%s1 + $0x38] sm:$0xff]
    %v54 = vld [vmem:[%s1 + $0x40] sm:$0xff]
    %v55 = vld [vmem:[%s1 + $0x48] sm:$0xff]
    %v56 = vld [vmem:[%s1 + $0x50] sm:$0xff]
    %v57 = vld [vmem:[%s1 + $0x58] sm:$0xff]
    %v58 = vld [vmem:[%s1 + $0x60] sm:$0xff]
    %v59 = vld [vmem:[%s1 + $0x68] sm:$0xff]
    %v60 = vld [vmem:[%s1 + $0x70] sm:$0xff]
    %v61 = vld [vmem:[%s1 + $0x78] sm:$0xff]
    %v62 = vld [vmem:[%s1 + $0x80] sm:$0xff]
    %v63 = vld [vmem:[%s1 + $0x88] sm:$0xff]
    %v64 = vld [vmem:[%s1 + $0x90] sm:$0xff]
    %v65 = vld [vmem:[%s1 + $0x98] sm:$0xff]
    %v66 = vld [vmem:[%s1 + $0xa0] sm:$0xff]
    %v67 = vld [vmem:[%s1 + $0xa8] sm:$0xff]
    %v68 = vld [vmem:[%s1 + $0xb0] sm:$0xff]
    %v69 = vld [vmem:[%s1 + $0xb8] sm:$0xff]
    %v70 = vld [vmem:[%s1 + $0xc0] sm:$0xff]
    %v71 = vld [vmem:[%s1 + $0xc8] sm:$0xff]
    %v72 = vld [vmem:[%s1 + $0xd0] sm:$0xff]
    %v73 = vld [vmem:[%s1 + $0xd8] sm:$0xff]
    %v74 = vld [vmem:[%s1 + $0xe0] sm:$0xff]
    %v75 = vld [vmem:[%s1 + $0xe8] sm:$0xff]
    %v76 = vld [vmem:[%s1 + $0xf0] sm:$0xff]
    %v77 = vld [vmem:[%s1 + $0xf8] sm:$0xff]
    %v78 = vld [vmem:[%s1 + $0x100] sm:$0xff]
    %v79 = vld [vmem:[%s1 + $0x108] sm:$0xff]
    %v80 = vld [vmem:[%s1 + $0x110] sm:$0xff]
    %v81 = vld [vmem:[%s1 + $0x118] sm:$0xff]
    %v82 = vld [vmem:[%s1 + $0x120] sm:$0xff]
    %v83 = vld [vmem:[%s1 + $0x128] sm:$0xff]
    %v84 = vld [vmem:[%s1 + $0x130] sm:$0xff]
    %v85 = vld [vmem:[%s1 + $0x138] sm:$0xff]
    %v86 = vld [vmem:[%s1 + $0x140] sm:$0xff]
    %v87 = vld [vmem:[%s1 + $0x148] sm:$0xff]
    %v88 = vld [vmem:[%s1 + $0x150] sm:$0xff]
    %v89 = vld [vmem:[%s1 + $0x158] sm:$0xff]
    %v90 = vld [vmem:[%s1 + $0x160] sm:$0xff]
    %v91 = vld [vmem:[%s1 + $0x168] sm:$0xff]
    %v92 = vld [vmem:[%s1 + $0x170] sm:$0xff]
    %v93 = vld [vmem:[%s1 + $0x178] sm:$0xff]
    %v94 = vld [vmem:[%s1 + $0x180] sm:$0xff]
    %v95 = vld [vmem:[%s1 + $0x188] sm:$0xff]
    %v96 = vld [vmem:[%s1 + $0x190] sm:$0xff]
    %v97 = vld [vmem:[%s1 + $0x198] sm:$0xff]
    %v98 = vld [vmem:[%s1 + $0x1a0] sm:$0xff]
    %v99 = vld [vmem:[%s1 + $0x1a8] sm:$0xff]
    %v100 = vld [vmem:[%s1 + $0x1b0] sm:$0xff]
    %v101 = vld [vmem:[%s1 + $0x1b8] sm:$0xff]
    %v102 = vld [vmem:[%s1 + $0x1c0] sm:$0xff]
    %v103 = vld [vmem:[%s1 + $0x1c8] sm:$0xff]
    %v104 = vld [vmem:[%s1 + $0x1d0] sm:$0xff]
    %v105 = vld [vmem:[%s1 + $0x1d8] sm:$0xff]
    %v106 = vld [vmem:[%s1 + $0x1e0] sm:$0xff]
    %v107 = vld [vmem:[%s1 + $0x1e8] sm:$0xff]
    %v108 = vld [vmem:[%s1 + $0x1f0] sm:$0xff]
    %v109 = vld [vmem:[%s1 + $0x1f8] sm:$0xff]
    %v110 = vld [vmem:[%s1 + $0x200] sm:$0xff]
    %v111 = vld [vmem:[%s1 + $0x208] sm:$0xff]
    %v112 = vld [vmem:[%s1 + $0x210] sm:$0xff]
    %v113 = vld [vmem:[%s1 + $0x218] sm:$0xff]
    %v114 = vld [vmem:[%s1 + $0x220] sm:$0xff]
    %v115 = vld [vmem:[%s1 + $0x228] sm:$0xff]
    %v116 = vld [vmem:[%s1 + $0x230] sm:$0xff]
    %v117 = vld [vmem:[%s1 + $0x238] sm:$0xff]
    %v118 = vpack.c.bf16 %v39, %v39
    %v191 = vunpack.c.l.b16 %v46
    %v192 = vunpack.c.h.b16 %v46
    %v193 = vunpack.c.l.b16 %v47
    %v194 = vunpack.c.h.b16 %v47
    %v195 = vunpack.c.l.b16 %v48
    %v196 = vunpack.c.h.b16 %v48
    %v197 = vunpack.c.l.b16 %v49
    %v198 = vunpack.c.h.b16 %v49
    %v199 = vunpack.c.l.b16 %v50
    %v200 = vunpack.c.h.b16 %v50
    %v201 = vunpack.c.l.b16 %v51
    %v202 = vunpack.c.h.b16 %v51
    %v203 = vunpack.c.l.b16 %v52
    %v204 = vunpack.c.h.b16 %v52
    %v205 = vunpack.c.l.b16 %v53
    %v206 = vunpack.c.h.b16 %v53
    %v207 = vunpack.c.l.b16 %v54
    %v208 = vunpack.c.h.b16 %v54
    %v209 = vunpack.c.l.b16 %v55
    %v210 = vunpack.c.h.b16 %v55
    %v211 = vunpack.c.l.b16 %v56
    %v212 = vunpack.c.h.b16 %v56
    %v213 = vunpack.c.l.b16 %v57
    %v214 = vunpack.c.h.b16 %v57
    %v215 = vunpack.c.l.b16 %v58
    %v216 = vunpack.c.h.b16 %v58
    %v217 = vunpack.c.l.b16 %v59
    %v218 = vunpack.c.h.b16 %v59
    %v219 = vunpack.c.l.b16 %v60
    %v220 = vunpack.c.h.b16 %v60
    %v221 = vunpack.c.l.b16 %v61
    %v222 = vunpack.c.h.b16 %v61
    %v223 = vunpack.c.l.b16 %v62
    %v224 = vunpack.c.h.b16 %v62
    %v225 = vunpack.c.l.b16 %v63
    %v226 = vunpack.c.h.b16 %v63
    %v227 = vunpack.c.l.b16 %v64
    %v228 = vunpack.c.h.b16 %v64
    %v229 = vunpack.c.l.b16 %v65
    %v230 = vunpack.c.h.b16 %v65
    %v231 = vunpack.c.l.b16 %v66
    %v232 = vunpack.c.h.b16 %v66
    %v233 = vunpack.c.l.b16 %v67
    %v234 = vunpack.c.h.b16 %v67
    %v235 = vunpack.c.l.b16 %v68
    %v236 = vunpack.c.h.b16 %v68
    %v237 = vunpack.c.l.b16 %v69
    %v238 = vunpack.c.h.b16 %v69
    %v239 = vunpack.c.l.b16 %v70
    %v240 = vunpack.c.h.b16 %v70
    %v241 = vunpack.c.l.b16 %v71
    %v242 = vunpack.c.h.b16 %v71
    %v243 = vunpack.c.l.b16 %v72
    %v244 = vunpack.c.h.b16 %v72
    %v245 = vunpack.c.l.b16 %v73
    %v246 = vunpack.c.h.b16 %v73
    %v247 = vunpack.c.l.b16 %v74
    %v248 = vunpack.c.h.b16 %v74
    %v249 = vunpack.c.l.b16 %v75
    %v250 = vunpack.c.h.b16 %v75
    %v251 = vunpack.c.l.b16 %v76
    %v252 = vunpack.c.h.b16 %v76
    %v253 = vunpack.c.l.b16 %v77
    %v254 = vunpack.c.h.b16 %v77
    %v255 = vunpack.c.l.b16 %v78
    %v256 = vunpack.c.h.b16 %v78
    %v257 = vunpack.c.l.b16 %v79
    %v258 = vunpack.c.h.b16 %v79
    %v259 = vunpack.c.l.b16 %v80
    %v260 = vunpack.c.h.b16 %v80
    %v261 = vunpack.c.l.b16 %v81
    %v262 = vunpack.c.h.b16 %v81
    %v263 = vunpack.c.l.b16 %v82
    %v264 = vunpack.c.h.b16 %v82
    %v265 = vunpack.c.l.b16 %v83
    %v266 = vunpack.c.h.b16 %v83
    %v267 = vunpack.c.l.b16 %v84
    %v268 = vunpack.c.h.b16 %v84
    %v269 = vunpack.c.l.b16 %v85
    %v270 = vunpack.c.h.b16 %v85
    %v271 = vunpack.c.l.b16 %v86
    %v272 = vunpack.c.h.b16 %v86
    %v273 = vunpack.c.l.b16 %v87
    %v274 = vunpack.c.h.b16 %v87
    %v275 = vunpack.c.l.b16 %v88
    %v276 = vunpack.c.h.b16 %v88
    %v277 = vunpack.c.l.b16 %v89
    %v278 = vunpack.c.h.b16 %v89
    %v279 = vunpack.c.l.b16 %v90
    %v280 = vunpack.c.h.b16 %v90
    %v281 = vunpack.c.l.b16 %v91
    %v282 = vunpack.c.h.b16 %v91
    %v283 = vunpack.c.l.b16 %v92
    %v284 = vunpack.c.h.b16 %v92
    %v285 = vunpack.c.l.b16 %v93
    %v286 = vunpack.c.h.b16 %v93
    %v287 = vunpack.c.l.b16 %v94
    %v288 = vunpack.c.h.b16 %v94
    %v289 = vunpack.c.l.b16 %v95
    %v290 = vunpack.c.h.b16 %v95
    %v291 = vunpack.c.l.b16 %v96
    %v292 = vunpack.c.h.b16 %v96
    %v293 = vunpack.c.l.b16 %v97
    %v294 = vunpack.c.h.b16 %v97
    %v295 = vunpack.c.l.b16 %v98
    %v296 = vunpack.c.h.b16 %v98
    %v297 = vunpack.c.l.b16 %v99
    %v298 = vunpack.c.h.b16 %v99
    %v299 = vunpack.c.l.b16 %v100
    %v300 = vunpack.c.h.b16 %v100
    %v301 = vunpack.c.l.b16 %v101
    %v302 = vunpack.c.h.b16 %v101
    %v303 = vunpack.c.l.b16 %v102
    %v304 = vunpack.c.h.b16 %v102
    %v305 = vunpack.c.l.b16 %v103
    %v306 = vunpack.c.h.b16 %v103
    %v307 = vunpack.c.l.b16 %v104
    %v308 = vunpack.c.h.b16 %v104
    %v309 = vunpack.c.l.b16 %v105
    %v310 = vunpack.c.h.b16 %v105
    %v311 = vunpack.c.l.b16 %v106
    %v312 = vunpack.c.h.b16 %v106
    %v313 = vunpack.c.l.b16 %v107
    %v314 = vunpack.c.h.b16 %v107
    %v315 = vunpack.c.l.b16 %v108
    %v316 = vunpack.c.h.b16 %v108
    %v317 = vunpack.c.l.b16 %v109
    %v318 = vunpack.c.h.b16 %v109
    %v319 = vunpack.c.l.b16 %v110
    %v320 = vunpack.c.h.b16 %v110
    %v321 = vunpack.c.l.b16 %v111
    %v322 = vunpack.c.h.b16 %v111
    %v323 = vunpack.c.l.b16 %v112
    %v324 = vunpack.c.h.b16 %v112
    %v325 = vunpack.c.l.b16 %v113
    %v326 = vunpack.c.h.b16 %v113
    %v327 = vunpack.c.l.b16 %v114
    %v328 = vunpack.c.h.b16 %v114
    %v329 = vunpack.c.l.b16 %v115
    %v330 = vunpack.c.h.b16 %v115
    %v331 = vunpack.c.l.b16 %v116
    %v332 = vunpack.c.h.b16 %v116
    %v333 = vunpack.c.l.b16 %v117
    %v334 = vunpack.c.h.b16 %v117
    %v335 = vpack.c.b16 %v209, %v191
    %v336 = vpack.c.b16 %v210, %v192
    %v337 = vpack.c.b16 %v211, %v193
    %v338 = vpack.c.b16 %v212, %v194
    %v339 = vpack.c.b16 %v213, %v195
    %v340 = vpack.c.b16 %v214, %v196
    %v341 = vpack.c.b16 %v215, %v197
    %v342 = vpack.c.b16 %v216, %v198
    %v343 = vpack.c.b16 %v217, %v199
    %v344 = vpack.c.b16 %v218, %v200
    %v345 = vpack.c.b16 %v219, %v201
    %v346 = vpack.c.b16 %v220, %v202
    %v347 = vpack.c.b16 %v221, %v203
    %v348 = vpack.c.b16 %v222, %v204
    %v349 = vpack.c.b16 %v223, %v205
    %v350 = vpack.c.b16 %v224, %v206
    %v351 = vpack.c.b16 %v225, %v207
    %v352 = vpack.c.b16 %v226, %v208
    %v353 = vpack.c.b16 %v245, %v227
    %v354 = vpack.c.b16 %v246, %v228
    %v355 = vpack.c.b16 %v247, %v229
    %v356 = vpack.c.b16 %v248, %v230
    %v357 = vpack.c.b16 %v249, %v231
    %v358 = vpack.c.b16 %v250, %v232
    %v359 = vpack.c.b16 %v251, %v233
    %v360 = vpack.c.b16 %v252, %v234
    %v361 = vpack.c.b16 %v253, %v235
    %v362 = vpack.c.b16 %v254, %v236
    %v363 = vpack.c.b16 %v255, %v237
    %v364 = vpack.c.b16 %v256, %v238
    %v365 = vpack.c.b16 %v257, %v239
    %v366 = vpack.c.b16 %v258, %v240
    %v367 = vpack.c.b16 %v259, %v241
    %v368 = vpack.c.b16 %v260, %v242
    %v369 = vpack.c.b16 %v261, %v243
    %v370 = vpack.c.b16 %v262, %v244
    %v371 = vpack.c.b16 %v281, %v263
    %v372 = vpack.c.b16 %v282, %v264
    %v373 = vpack.c.b16 %v283, %v265
    %v374 = vpack.c.b16 %v284, %v266
    %v375 = vpack.c.b16 %v285, %v267
    %v376 = vpack.c.b16 %v286, %v268
    %v377 = vpack.c.b16 %v287, %v269
    %v378 = vpack.c.b16 %v288, %v270
    %v379 = vpack.c.b16 %v289, %v271
    %v380 = vpack.c.b16 %v290, %v272
    %v381 = vpack.c.b16 %v291, %v273
    %v382 = vpack.c.b16 %v292, %v274
    %v383 = vpack.c.b16 %v293, %v275
    %v384 = vpack.c.b16 %v294, %v276
    %v385 = vpack.c.b16 %v295, %v277
    %v386 = vpack.c.b16 %v296, %v278
    %v387 = vpack.c.b16 %v297, %v279
    %v388 = vpack.c.b16 %v298, %v280
    %v389 = vpack.c.b16 %v317, %v299
    %v390 = vpack.c.b16 %v318, %v300
    %v391 = vpack.c.b16 %v319, %v301
    %v392 = vpack.c.b16 %v320, %v302
    %v393 = vpack.c.b16 %v321, %v303
    %v394 = vpack.c.b16 %v322, %v304
    %v395 = vpack.c.b16 %v323, %v305
    %v396 = vpack.c.b16 %v324, %v306
    %v397 = vpack.c.b16 %v325, %v307
    %v398 = vpack.c.b16 %v326, %v308
    %v399 = vpack.c.b16 %v327, %v309
    %v400 = vpack.c.b16 %v328, %v310
    %v401 = vpack.c.b16 %v329, %v311
    %v402 = vpack.c.b16 %v330, %v312
    %v403 = vpack.c.b16 %v331, %v313
    %v404 = vpack.c.b16 %v332, %v314
    %v405 = vpack.c.b16 %v333, %v315
    %v406 = vpack.c.b16 %v334, %v316
    %vm479 = vcmask 523264
    %v481 = vsel %vm479, %v118, 0
    %483 = vmatprep.subr.bf16.mxu0 0
    %484 = vmatpush1.bf16.msra.mxu0 0
    %485 = vmatprep.subr.bf16.mxu0 0
    %486 = vmatpush1.bf16.msra.mxu0 0
    %487 = vmatprep.subr.bf16.mxu0 0
    %488 = vmatpush1.bf16.msra.mxu0 0
    %489 = vmatprep.subr.bf16.mxu0 0
    %490 = vmatpush1.bf16.msra.mxu0 0
    %491 = vmatprep.subr.bf16.mxu0 %v390
    %492 = vmatpush1.bf16.msra.mxu0 %v389
    %493 = vmatprep.subr.bf16.mxu0 %v372
    %494 = vmatpush1.bf16.msra.mxu0 %v371
    %495 = vmatprep.subr.bf16.mxu0 %v354
    %496 = vmatpush1.bf16.msra.mxu0 %v353
    %497 = vmatprep.subr.bf16.mxu0 %v336
    %498 = vmatpush1.bf16.msra.mxu0 %v335
    %499 = vmatprep.subr.bf16.mxu0 0
    %500 = vmatpush2.bf16.msra.mxu0 0
    %501 = vmatprep.subr.bf16.mxu0 0
    %502 = vmatpush2.bf16.msra.mxu0 0
    %503 = vmatprep.subr.bf16.mxu0 0
    %504 = vmatpush2.bf16.msra.mxu0 0
    %505 = vmatprep.subr.bf16.mxu0 0
    %506 = vmatpush2.bf16.msra.mxu0 0
    %507 = vmatprep.subr.bf16.mxu0 0
    %508 = vmatpush2.bf16.msra.mxu0 0
    %509 = vmatprep.subr.bf16.mxu0 0
    %510 = vmatpush2.bf16.msra.mxu0 0
    %511 = vmatprep.subr.bf16.mxu0 0
    %512 = vmatpush2.bf16.msra.mxu0 0
    %513 = vmatprep.subr.bf16.mxu0 0
    %514 = vmatpush2.bf16.msra.mxu0 0
    %515 = vmatprep.mubr.bf16.mxu0 0
    %516 = vmatmul.mubr.bf16.gmra.mxu0 %v481
    %v517 = vpop.f32.mrf.mxu0
    %v518 = vadd.f32 0.0, %v517
    %v519 = vpop.f32.mrf.mxu0
    %v520 = vadd.f32 0.0, %v519
    %v521 = vpop.f32.mrf.mxu0
    %v522 = vpop.f32.mrf.mxu0
    %523 = vdwg.mxu0
    %524 = vmatprep.subr.bf16.mxu0 0
    %525 = vmatpush1.bf16.msra.mxu0 0
    %526 = vmatprep.subr.bf16.mxu0 0
    %527 = vmatpush1.bf16.msra.mxu0 0
    %528 = vmatprep.subr.bf16.mxu0 0
    %529 = vmatpush1.bf16.msra.mxu0 0
    %530 = vmatprep.subr.bf16.mxu0 0
    %531 = vmatpush1.bf16.msra.mxu0 0
    %532 = vmatprep.subr.bf16.mxu0 %v392
    %533 = vmatpush1.bf16.msra.mxu0 %v391
    %534 = vmatprep.subr.bf16.mxu0 %v374
    %535 = vmatpush1.bf16.msra.mxu0 %v373
    %536 = vmatprep.subr.bf16.mxu0 %v356
    %537 = vmatpush1.bf16.msra.mxu0 %v355
    %538 = vmatprep.subr.bf16.mxu0 %v338
    %539 = vmatpush1.bf16.msra.mxu0 %v337
    %540 = vmatprep.subr.bf16.mxu0 0
    %541 = vmatpush2.bf16.msra.mxu0 0
    %542 = vmatprep.subr.bf16.mxu0 0
    %543 = vmatpush2.bf16.msra.mxu0 0
    %544 = vmatprep.subr.bf16.mxu0 0
    %545 = vmatpush2.bf16.msra.mxu0 0
    %546 = vmatprep.subr.bf16.mxu0 0
    %547 = vmatpush2.bf16.msra.mxu0 0
    %548 = vmatprep.subr.bf16.mxu0 0
    %549 = vmatpush2.bf16.msra.mxu0 0
    %550 = vmatprep.subr.bf16.mxu0 0
    %551 = vmatpush2.bf16.msra.mxu0 0
    %552 = vmatprep.subr.bf16.mxu0 0
    %553 = vmatpush2.bf16.msra.mxu0 0
    %554 = vmatprep.subr.bf16.mxu0 0
    %555 = vmatpush2.bf16.msra.mxu0 0
    %556 = vmatprep.mubr.bf16.mxu0 0
    %557 = vmatmul.mubr.bf16.gmra.mxu0 %v481
    %v558 = vpop.f32.mrf.mxu0
    %v559 = vadd.f32 0.0, %v558
    %v560 = vpop.f32.mrf.mxu0
    %v561 = vadd.f32 0.0, %v560
    %v562 = vpop.f32.mrf.mxu0
    %v563 = vpop.f32.mrf.mxu0
    %564 = vdwg.mxu0
    %565 = vmatprep.subr.bf16.mxu0 0
    %566 = vmatpush1.bf16.msra.mxu0 0
    %567 = vmatprep.subr.bf16.mxu0 0
    %568 = vmatpush1.bf16.msra.mxu0 0
    %569 = vmatprep.subr.bf16.mxu0 0
    %570 = vmatpush1.bf16.msra.mxu0 0
    %571 = vmatprep.subr.bf16.mxu0 0
    %572 = vmatpush1.bf16.msra.mxu0 0
    %573 = vmatprep.subr.bf16.mxu0 %v394
    %574 = vmatpush1.bf16.msra.mxu0 %v393
    %575 = vmatprep.subr.bf16.mxu0 %v376
    %576 = vmatpush1.bf16.msra.mxu0 %v375
    %577 = vmatprep.subr.bf16.mxu0 %v358
    %578 = vmatpush1.bf16.msra.mxu0 %v357
    %579 = vmatprep.subr.bf16.mxu0 %v340
    %580 = vmatpush1.bf16.msra.mxu0 %v339
    %581 = vmatprep.subr.bf16.mxu0 0
    %582 = vmatpush2.bf16.msra.mxu0 0
    %583 = vmatprep.subr.bf16.mxu0 0
    %584 = vmatpush2.bf16.msra.mxu0 0
    %585 = vmatprep.subr.bf16.mxu0 0
    %586 = vmatpush2.bf16.msra.mxu0 0
    %587 = vmatprep.subr.bf16.mxu0 0
    %588 = vmatpush2.bf16.msra.mxu0 0
    %589 = vmatprep.subr.bf16.mxu0 0
    %590 = vmatpush2.bf16.msra.mxu0 0
    %591 = vmatprep.subr.bf16.mxu0 0
    %592 = vmatpush2.bf16.msra.mxu0 0
    %593 = vmatprep.subr.bf16.mxu0 0
    %594 = vmatpush2.bf16.msra.mxu0 0
    %595 = vmatprep.subr.bf16.mxu0 0
    %596 = vmatpush2.bf16.msra.mxu0 0
    %597 = vmatprep.mubr.bf16.mxu0 0
    %598 = vmatmul.mubr.bf16.gmra.mxu0 %v481
    %v599 = vpop.f32.mrf.mxu0
    %v600 = vadd.f32 0.0, %v599
    %v601 = vpop.f32.mrf.mxu0
    %v602 = vadd.f32 0.0, %v601
    %v603 = vpop.f32.mrf.mxu0
    %v604 = vpop.f32.mrf.mxu0
    %605 = vdwg.mxu0
    %606 = vmatprep.subr.bf16.mxu0 0
    %607 = vmatpush1.bf16.msra.mxu0 0
    %608 = vmatprep.subr.bf16.mxu0 0
    %609 = vmatpush1.bf16.msra.mxu0 0
    %610 = vmatprep.subr.bf16.mxu0 0
    %611 = vmatpush1.bf16.msra.mxu0 0
    %612 = vmatprep.subr.bf16.mxu0 0
    %613 = vmatpush1.bf16.msra.mxu0 0
    %614 = vmatprep.subr.bf16.mxu0 %v396
    %615 = vmatpush1.bf16.msra.mxu0 %v395
    %616 = vmatprep.subr.bf16.mxu0 %v378
    %617 = vmatpush1.bf16.msra.mxu0 %v377
    %618 = vmatprep.subr.bf16.mxu0 %v360
    %619 = vmatpush1.bf16.msra.mxu0 %v359
    %620 = vmatprep.subr.bf16.mxu0 %v342
    %621 = vmatpush1.bf16.msra.mxu0 %v341
    %622 = vmatprep.subr.bf16.mxu0 0
    %623 = vmatpush2.bf16.msra.mxu0 0
    %624 = vmatprep.subr.bf16.mxu0 0
    %625 = vmatpush2.bf16.msra.mxu0 0
    %626 = vmatprep.subr.bf16.mxu0 0
    %627 = vmatpush2.bf16.msra.mxu0 0
    %628 = vmatprep.subr.bf16.mxu0 0
    %629 = vmatpush2.bf16.msra.mxu0 0
    %630 = vmatprep.subr.bf16.mxu0 0
    %631 = vmatpush2.bf16.msra.mxu0 0
    %632 = vmatprep.subr.bf16.mxu0 0
    %633 = vmatpush2.bf16.msra.mxu0 0
    %634 = vmatprep.subr.bf16.mxu0 0
    %635 = vmatpush2.bf16.msra.mxu0 0
    %636 = vmatprep.subr.bf16.mxu0 0
    %637 = vmatpush2.bf16.msra.mxu0 0
    %638 = vmatprep.mubr.bf16.mxu0 0
    %639 = vmatmul.mubr.bf16.gmra.mxu0 %v481
    %v640 = vpop.f32.mrf.mxu0
    %v641 = vadd.f32 0.0, %v640
    %v642 = vpop.f32.mrf.mxu0
    %v643 = vadd.f32 0.0, %v642
    %v644 = vpop.f32.mrf.mxu0
    %v645 = vpop.f32.mrf.mxu0
    %646 = vdwg.mxu0
    %647 = vmatprep.subr.bf16.mxu0 0
    %648 = vmatpush1.bf16.msra.mxu0 0
    %649 = vmatprep.subr.bf16.mxu0 0
    %650 = vmatpush1.bf16.msra.mxu0 0
    %651 = vmatprep.subr.bf16.mxu0 0
    %652 = vmatpush1.bf16.msra.mxu0 0
    %653 = vmatprep.subr.bf16.mxu0 0
    %654 = vmatpush1.bf16.msra.mxu0 0
    %655 = vmatprep.subr.bf16.mxu0 %v398
    %656 = vmatpush1.bf16.msra.mxu0 %v397
    %657 = vmatprep.subr.bf16.mxu0 %v380
    %658 = vmatpush1.bf16.msra.mxu0 %v379
    %659 = vmatprep.subr.bf16.mxu0 %v362
    %660 = vmatpush1.bf16.msra.mxu0 %v361
    %661 = vmatprep.subr.bf16.mxu0 %v344
    %662 = vmatpush1.bf16.msra.mxu0 %v343
    %663 = vmatprep.subr.bf16.mxu0 0
    %664 = vmatpush2.bf16.msra.mxu0 0
    %665 = vmatprep.subr.bf16.mxu0 0
    %666 = vmatpush2.bf16.msra.mxu0 0
    %667 = vmatprep.subr.bf16.mxu0 0
    %668 = vmatpush2.bf16.msra.mxu0 0
    %669 = vmatprep.subr.bf16.mxu0 0
    %670 = vmatpush2.bf16.msra.mxu0 0
    %671 = vmatprep.subr.bf16.mxu0 0
    %672 = vmatpush2.bf16.msra.mxu0 0
    %673 = vmatprep.subr.bf16.mxu0 0
    %674 = vmatpush2.bf16.msra.mxu0 0
    %675 = vmatprep.subr.bf16.mxu0 0
    %676 = vmatpush2.bf16.msra.mxu0 0
    %677 = vmatprep.subr.bf16.mxu0 0
    %678 = vmatpush2.bf16.msra.mxu0 0
    %679 = vmatprep.mubr.bf16.mxu0 0
    %680 = vmatmul.mubr.bf16.gmra.mxu0 %v481
    %v681 = vpop.f32.mrf.mxu0
    %v682 = vadd.f32 0.0, %v681
    %v683 = vpop.f32.mrf.mxu0
    %v684 = vadd.f32 0.0, %v683
    %v685 = vpop.f32.mrf.mxu0
    %v686 = vpop.f32.mrf.mxu0
    %687 = vdwg.mxu0
    %688 = vmatprep.subr.bf16.mxu0 0
    %689 = vmatpush1.bf16.msra.mxu0 0
    %690 = vmatprep.subr.bf16.mxu0 0
    %691 = vmatpush1.bf16.msra.mxu0 0
    %692 = vmatprep.subr.bf16.mxu0 0
    %693 = vmatpush1.bf16.msra.mxu0 0
    %694 = vmatprep.subr.bf16.mxu0 0
    %695 = vmatpush1.bf16.msra.mxu0 0
    %696 = vmatprep.subr.bf16.mxu0 %v400
    %697 = vmatpush1.bf16.msra.mxu0 %v399
    %698 = vmatprep.subr.bf16.mxu0 %v382
    %699 = vmatpush1.bf16.msra.mxu0 %v381
    %700 = vmatprep.subr.bf16.mxu0 %v364
    %701 = vmatpush1.bf16.msra.mxu0 %v363
    %702 = vmatprep.subr.bf16.mxu0 %v346
    %703 = vmatpush1.bf16.msra.mxu0 %v345
    %704 = vmatprep.subr.bf16.mxu0 0
    %705 = vmatpush2.bf16.msra.mxu0 0
    %706 = vmatprep.subr.bf16.mxu0 0
    %707 = vmatpush2.bf16.msra.mxu0 0
    %708 = vmatprep.subr.bf16.mxu0 0
    %709 = vmatpush2.bf16.msra.mxu0 0
    %710 = vmatprep.subr.bf16.mxu0 0
    %711 = vmatpush2.bf16.msra.mxu0 0
    %712 = vmatprep.subr.bf16.mxu0 0
    %713 = vmatpush2.bf16.msra.mxu0 0
    %714 = vmatprep.subr.bf16.mxu0 0
    %715 = vmatpush2.bf16.msra.mxu0 0
    %716 = vmatprep.subr.bf16.mxu0 0
    %717 = vmatpush2.bf16.msra.mxu0 0
    %718 = vmatprep.subr.bf16.mxu0 0
    %719 = vmatpush2.bf16.msra.mxu0 0
    %720 = vmatprep.mubr.bf16.mxu0 0
    %721 = vmatmul.mubr.bf16.gmra.mxu0 %v481
    %v722 = vpop.f32.mrf.mxu0
    %v723 = vadd.f32 0.0, %v722
    %v724 = vpop.f32.mrf.mxu0
    %v725 = vadd.f32 0.0, %v724
    %v726 = vpop.f32.mrf.mxu0
    %v727 = vpop.f32.mrf.mxu0
    %728 = vdwg.mxu0
    %729 = vmatprep.subr.bf16.mxu0 0
    %730 = vmatpush1.bf16.msra.mxu0 0
    %731 = vmatprep.subr.bf16.mxu0 0
    %732 = vmatpush1.bf16.msra.mxu0 0
    %733 = vmatprep.subr.bf16.mxu0 0
    %734 = vmatpush1.bf16.msra.mxu0 0
    %735 = vmatprep.subr.bf16.mxu0 0
    %736 = vmatpush1.bf16.msra.mxu0 0
    %737 = vmatprep.subr.bf16.mxu0 %v402
    %738 = vmatpush1.bf16.msra.mxu0 %v401
    %739 = vmatprep.subr.bf16.mxu0 %v384
    %740 = vmatpush1.bf16.msra.mxu0 %v383
    %741 = vmatprep.subr.bf16.mxu0 %v366
    %742 = vmatpush1.bf16.msra.mxu0 %v365
    %743 = vmatprep.subr.bf16.mxu0 %v348
    %744 = vmatpush1.bf16.msra.mxu0 %v347
    %745 = vmatprep.subr.bf16.mxu0 0
    %746 = vmatpush2.bf16.msra.mxu0 0
    %747 = vmatprep.subr.bf16.mxu0 0
    %748 = vmatpush2.bf16.msra.mxu0 0
    %749 = vmatprep.subr.bf16.mxu0 0
    %750 = vmatpush2.bf16.msra.mxu0 0
    %751 = vmatprep.subr.bf16.mxu0 0
    %752 = vmatpush2.bf16.msra.mxu0 0
    %753 = vmatprep.subr.bf16.mxu0 0
    %754 = vmatpush2.bf16.msra.mxu0 0
    %755 = vmatprep.subr.bf16.mxu0 0
    %756 = vmatpush2.bf16.msra.mxu0 0
    %757 = vmatprep.subr.bf16.mxu0 0
    %758 = vmatpush2.bf16.msra.mxu0 0
    %759 = vmatprep.subr.bf16.mxu0 0
    %760 = vmatpush2.bf16.msra.mxu0 0
    %761 = vmatprep.mubr.bf16.mxu0 0
    %762 = vmatmul.mubr.bf16.gmra.mxu0 %v481
    %v763 = vpop.f32.mrf.mxu0
    %v764 = vadd.f32 0.0, %v763
    %v765 = vpop.f32.mrf.mxu0
    %v766 = vadd.f32 0.0, %v765
    %v767 = vpop.f32.mrf.mxu0
    %v768 = vpop.f32.mrf.mxu0
    %769 = vdwg.mxu0
    %770 = vmatprep.subr.bf16.mxu0 0
    %771 = vmatpush1.bf16.msra.mxu0 0
    %772 = vmatprep.subr.bf16.mxu0 0
    %773 = vmatpush1.bf16.msra.mxu0 0
    %774 = vmatprep.subr.bf16.mxu0 0
    %775 = vmatpush1.bf16.msra.mxu0 0
    %776 = vmatprep.subr.bf16.mxu0 0
    %777 = vmatpush1.bf16.msra.mxu0 0
    %778 = vmatprep.subr.bf16.mxu0 %v404
    %779 = vmatpush1.bf16.msra.mxu0 %v403
    %780 = vmatprep.subr.bf16.mxu0 %v386
    %781 = vmatpush1.bf16.msra.mxu0 %v385
    %782 = vmatprep.subr.bf16.mxu0 %v368
    %783 = vmatpush1.bf16.msra.mxu0 %v367
    %784 = vmatprep.subr.bf16.mxu0 %v350
    %785 = vmatpush1.bf16.msra.mxu0 %v349
    %786 = vmatprep.subr.bf16.mxu0 0
    %787 = vmatpush2.bf16.msra.mxu0 0
    %788 = vmatprep.subr.bf16.mxu0 0
    %789 = vmatpush2.bf16.msra.mxu0 0
    %790 = vmatprep.subr.bf16.mxu0 0
    %791 = vmatpush2.bf16.msra.mxu0 0
    %792 = vmatprep.subr.bf16.mxu0 0
    %793 = vmatpush2.bf16.msra.mxu0 0
    %794 = vmatprep.subr.bf16.mxu0 0
    %795 = vmatpush2.bf16.msra.mxu0 0
    %796 = vmatprep.subr.bf16.mxu0 0
    %797 = vmatpush2.bf16.msra.mxu0 0
    %798 = vmatprep.subr.bf16.mxu0 0
    %799 = vmatpush2.bf16.msra.mxu0 0
    %800 = vmatprep.subr.bf16.mxu0 0
    %801 = vmatpush2.bf16.msra.mxu0 0
    %802 = vmatprep.mubr.bf16.mxu0 0
    %803 = vmatmul.mubr.bf16.gmra.mxu0 %v481
    %v804 = vpop.f32.mrf.mxu0
    %v805 = vadd.f32 0.0, %v804
    %v806 = vpop.f32.mrf.mxu0
    %v807 = vadd.f32 0.0, %v806
    %v808 = vpop.f32.mrf.mxu0
    %v809 = vpop.f32.mrf.mxu0
    %810 = vdwg.mxu0
    %811 = vmatprep.subr.bf16.mxu0 0
    %812 = vmatpush1.bf16.msra.mxu0 0
    %813 = vmatprep.subr.bf16.mxu0 0
    %814 = vmatpush1.bf16.msra.mxu0 0
    %815 = vmatprep.subr.bf16.mxu0 0
    %816 = vmatpush1.bf16.msra.mxu0 0
    %817 = vmatprep.subr.bf16.mxu0 0
    %818 = vmatpush1.bf16.msra.mxu0 0
    %819 = vmatprep.subr.bf16.mxu0 %v406
    %820 = vmatpush1.bf16.msra.mxu0 %v405
    %821 = vmatprep.subr.bf16.mxu0 %v388
    %822 = vmatpush1.bf16.msra.mxu0 %v387
    %823 = vmatprep.subr.bf16.mxu0 %v370
    %824 = vmatpush1.bf16.msra.mxu0 %v369
    %825 = vmatprep.subr.bf16.mxu0 %v352
    %826 = vmatpush1.bf16.msra.mxu0 %v351
    %827 = vmatprep.subr.bf16.mxu0 0
    %828 = vmatpush2.bf16.msra.mxu0 0
    %829 = vmatprep.subr.bf16.mxu0 0
    %830 = vmatpush2.bf16.msra.mxu0 0
    %831 = vmatprep.subr.bf16.mxu0 0
    %832 = vmatpush2.bf16.msra.mxu0 0
    %833 = vmatprep.subr.bf16.mxu0 0
    %834 = vmatpush2.bf16.msra.mxu0 0
    %835 = vmatprep.subr.bf16.mxu0 0
    %836 = vmatpush2.bf16.msra.mxu0 0
    %837 = vmatprep.subr.bf16.mxu0 0
    %838 = vmatpush2.bf16.msra.mxu0 0
    %839 = vmatprep.subr.bf16.mxu0 0
    %840 = vmatpush2.bf16.msra.mxu0 0
    %841 = vmatprep.subr.bf16.mxu0 0
    %842 = vmatpush2.bf16.msra.mxu0 0
    %843 = vmatprep.mubr.bf16.mxu0 0
    %844 = vmatmul.mubr.bf16.gmra.mxu0 %v481
    %v845 = vpop.f32.mrf.mxu0
    %v846 = vadd.f32 0.0, %v845
    %v847 = vpop.f32.mrf.mxu0
    %v848 = vadd.f32 0.0, %v847
    %v849 = vpop.f32.mrf.mxu0
    %v850 = vpop.f32.mrf.mxu0
    %851 = vdwg.mxu0
    %v852 = vlaneseq
    %v853 = vshrl.u32 %v852, 7
    %v854 = vsub.s32 0, %v853
    %v855 = vrot.slane %v40, %v854
    %v856 = vlaneseq
    %v857 = vshrl.u32 %v856, 7
    %v858 = vsub.s32 0, %v857
    %v859 = vrot.slane %v41, %v858
    %v860 = vlaneseq
    %v861 = vshrl.u32 %v860, 7
    %v862 = vsub.s32 0, %v861
    %v863 = vrot.slane %v42, %v862
    %v864 = vlaneseq
    %v865 = vshrl.u32 %v864, 7
    %v866 = vsub.s32 0, %v865
    %v867 = vrot.slane %v43, %v866
    %v868 = vadd.f32 %v518, %v855
    %v869 = vadd.f32 %v520, %v859
    %v870 = vadd.f32 %v559, %v863
    %v871 = vadd.f32 %v561, %v867
    %v872 = vmax.f32 %v868, 0.0
    %v873 = vmax.f32 %v869, 0.0
    %v874 = vmax.f32 %v870, 0.0
    %v875 = vmax.f32 %v871, 0.0
    %v876 = vlaneseq
    %v877 = vshrl.u32 %v876, 7
    %v878 = vsub.s32 1, %v877
    %v879 = vrot.slane %v40, %v878
    %v880 = vlaneseq
    %v881 = vshrl.u32 %v880, 7
    %v882 = vsub.s32 1, %v881
    %v883 = vrot.slane %v41, %v882
    %v884 = vlaneseq
    %v885 = vshrl.u32 %v884, 7
    %v886 = vsub.s32 1, %v885
    %v887 = vrot.slane %v42, %v886
    %v888 = vlaneseq
    %v889 = vshrl.u32 %v888, 7
    %v890 = vsub.s32 1, %v889
    %v891 = vrot.slane %v43, %v890
    %v892 = vadd.f32 %v600, %v879
    %v893 = vadd.f32 %v602, %v883
    %v894 = vadd.f32 %v641, %v887
    %v895 = vadd.f32 %v643, %v891
    %v896 = vmax.f32 %v892, 0.0
    %v897 = vmax.f32 %v893, 0.0
    %v898 = vmax.f32 %v894, 0.0
    %v899 = vmax.f32 %v895, 0.0
    %v900 = vlaneseq
    %v901 = vshrl.u32 %v900, 7
    %v902 = vsub.s32 5, %v901
    %v903 = vrot.slane %v40, %v902
    %v904 = vlaneseq
    %v905 = vshrl.u32 %v904, 7
    %v906 = vsub.s32 5, %v905
    %v907 = vrot.slane %v41, %v906
    %v908 = vlaneseq
    %v909 = vshrl.u32 %v908, 7
    %v910 = vsub.s32 5, %v909
    %v911 = vrot.slane %v42, %v910
    %v912 = vadd.f32 %v764, %v903
    %v913 = vadd.f32 %v766, %v907
    %v914 = vadd.f32 %v805, %v911
    %v915 = vmax.f32 %v912, 0.0
    %v916 = vmax.f32 %v913, 0.0
    %v917 = vmax.f32 %v914, 0.0
    %v918 = vld [vmem:[%s3] sm:$0xff]
    %v919 = vld [vmem:[%s3 + $0x8] sm:$0xff]
    %v920 = vld [vmem:[%s3 + $0x10] sm:$0xff]
    %v921 = vld [vmem:[%s3 + $0x18] sm:$0xff]
    %v922 = vld [vmem:[%s3 + $0x20] sm:$0xff]
    %v923 = vld [vmem:[%s3 + $0x28] sm:$0xff]
    %v924 = vld [vmem:[%s3 + $0x30] sm:$0xff]
    %v925 = vld [vmem:[%s3 + $0x38] sm:$0xff]
    %v926 = vld [vmem:[%s3 + $0x40] sm:$0xff]
    %v927 = vld [vmem:[%s3 + $0x48] sm:$0xff]
    %v928 = vld [vmem:[%s3 + $0x50] sm:$0xff]
    %v929 = vld [vmem:[%s3 + $0x58] sm:$0xff]
    %v930 = vld [vmem:[%s3 + $0x60] sm:$0xff]
    %v931 = vld [vmem:[%s3 + $0x68] sm:$0xff]
    %v932 = vld [vmem:[%s3 + $0x70] sm:$0xff]
    %v933 = vld [vmem:[%s3 + $0x78] sm:$0xff]
    %v934 = vld [vmem:[%s3 + $0x80] sm:$0xff]
    %v935 = vld [vmem:[%s3 + $0x88] sm:$0xff]
    %v936 = vld [vmem:[%s3 + $0x90] sm:$0xff]
    %v937 = vld [vmem:[%s3 + $0x98] sm:$0xff]
    %v938 = vld [vmem:[%s3 + $0xa0] sm:$0xff]
    %v939 = vld [vmem:[%s3 + $0xa8] sm:$0xff]
    %v940 = vld [vmem:[%s3 + $0xb0] sm:$0xff]
    %v941 = vld [vmem:[%s3 + $0xb8] sm:$0xff]
    %v942 = vld [vmem:[%s3 + $0xc0] sm:$0xff]
    %v943 = vld [vmem:[%s3 + $0xc8] sm:$0xff]
    %v944 = vld [vmem:[%s3 + $0xd0] sm:$0xff]
    %v945 = vld [vmem:[%s3 + $0xd8] sm:$0xff]
    %v946 = vld [vmem:[%s3 + $0xe0] sm:$0xff]
    %v947 = vld [vmem:[%s3 + $0xe8] sm:$0xff]
    %v948 = vld [vmem:[%s3 + $0xf0] sm:$0xff]
    %v949 = vld [vmem:[%s3 + $0xf8] sm:$0xff]
    %v950 = vld [vmem:[%s3 + $0x100] sm:$0xff]
    %v951 = vld [vmem:[%s3 + $0x108] sm:$0xff]
    %v952 = vld [vmem:[%s3 + $0x110] sm:$0xff]
    %v953 = vld [vmem:[%s3 + $0x118] sm:$0xff]
    %v954 = vpack.c.bf16 %v915, %v915
    %v955 = vpack.c.bf16 %v916, %v916
    %v956 = vpack.c.bf16 %v917, %v917
    %v957 = vlaneseq
    %v958 = vshrl.u32 %v957, 7
    %v959 = vsub.s32 7, %v958
    %v960 = vrot.slane %v40, %v959
    %v961 = vlaneseq
    %v962 = vshrl.u32 %v961, 7
    %v963 = vsub.s32 7, %v962
    %v964 = vrot.slane %v41, %v963
    %v1001 = vunpack.c.l.b16 %v918
    %v1002 = vunpack.c.h.b16 %v918
    %v1003 = vunpack.c.l.b16 %v919
    %v1004 = vunpack.c.h.b16 %v919
    %v1005 = vunpack.c.l.b16 %v920
    %v1006 = vunpack.c.h.b16 %v920
    %v1007 = vunpack.c.l.b16 %v921
    %v1008 = vunpack.c.h.b16 %v921
    %v1009 = vunpack.c.l.b16 %v922
    %v1010 = vunpack.c.h.b16 %v922
    %v1011 = vunpack.c.l.b16 %v923
    %v1012 = vunpack.c.h.b16 %v923
    %v1013 = vunpack.c.l.b16 %v924
    %v1014 = vunpack.c.h.b16 %v924
    %v1015 = vunpack.c.l.b16 %v925
    %v1016 = vunpack.c.h.b16 %v925
    %v1017 = vunpack.c.l.b16 %v926
    %v1018 = vunpack.c.h.b16 %v926
    %v1019 = vunpack.c.l.b16 %v927
    %v1020 = vunpack.c.h.b16 %v927
    %v1021 = vunpack.c.l.b16 %v928
    %v1022 = vunpack.c.h.b16 %v928
    %v1023 = vunpack.c.l.b16 %v929
    %v1024 = vunpack.c.h.b16 %v929
    %v1025 = vunpack.c.l.b16 %v930
    %v1026 = vunpack.c.h.b16 %v930
    %v1027 = vunpack.c.l.b16 %v931
    %v1028 = vunpack.c.h.b16 %v931
    %v1029 = vunpack.c.l.b16 %v932
    %v1030 = vunpack.c.h.b16 %v932
    %v1031 = vunpack.c.l.b16 %v933
    %v1032 = vunpack.c.h.b16 %v933
    %v1033 = vunpack.c.l.b16 %v934
    %v1034 = vunpack.c.h.b16 %v934
    %v1035 = vunpack.c.l.b16 %v935
    %v1036 = vunpack.c.h.b16 %v935
    %v1037 = vunpack.c.l.b16 %v936
    %v1038 = vunpack.c.h.b16 %v936
    %v1039 = vunpack.c.l.b16 %v937
    %v1040 = vunpack.c.h.b16 %v937
    %v1041 = vunpack.c.l.b16 %v938
    %v1042 = vunpack.c.h.b16 %v938
    %v1043 = vunpack.c.l.b16 %v939
    %v1044 = vunpack.c.h.b16 %v939
    %v1045 = vunpack.c.l.b16 %v940
    %v1046 = vunpack.c.h.b16 %v940
    %v1047 = vunpack.c.l.b16 %v941
    %v1048 = vunpack.c.h.b16 %v941
    %v1049 = vunpack.c.l.b16 %v942
    %v1050 = vunpack.c.h.b16 %v942
    %v1051 = vunpack.c.l.b16 %v943
    %v1052 = vunpack.c.h.b16 %v943
    %v1053 = vunpack.c.l.b16 %v944
    %v1054 = vunpack.c.h.b16 %v944
    %v1055 = vunpack.c.l.b16 %v945
    %v1056 = vunpack.c.h.b16 %v945
    %v1057 = vunpack.c.l.b16 %v946
    %v1058 = vunpack.c.h.b16 %v946
    %v1059 = vunpack.c.l.b16 %v947
    %v1060 = vunpack.c.h.b16 %v947
    %v1061 = vunpack.c.l.b16 %v948
    %v1062 = vunpack.c.h.b16 %v948
    %v1063 = vunpack.c.l.b16 %v949
    %v1064 = vunpack.c.h.b16 %v949
    %v1065 = vunpack.c.l.b16 %v950
    %v1066 = vunpack.c.h.b16 %v950
    %v1067 = vunpack.c.l.b16 %v951
    %v1068 = vunpack.c.h.b16 %v951
    %v1069 = vunpack.c.l.b16 %v952
    %v1070 = vunpack.c.h.b16 %v952
    %v1071 = vunpack.c.l.b16 %v953
    %v1072 = vunpack.c.h.b16 %v953
    %v1073 = vpack.c.b16 %v1003, %v1001
    %v1074 = vpack.c.b16 %v1004, %v1002
    %v1075 = vpack.c.b16 %v1007, %v1005
    %v1076 = vpack.c.b16 %v1008, %v1006
    %v1077 = vpack.c.b16 %v1011, %v1009
    %v1078 = vpack.c.b16 %v1012, %v1010
    %v1079 = vpack.c.b16 %v1015, %v1013
    %v1080 = vpack.c.b16 %v1016, %v1014
    %v1081 = vpack.c.b16 %v1019, %v1017
    %v1082 = vpack.c.b16 %v1020, %v1018
    %v1083 = vpack.c.b16 %v1023, %v1021
    %v1084 = vpack.c.b16 %v1024, %v1022
    %v1085 = vpack.c.b16 %v1027, %v1025
    %v1086 = vpack.c.b16 %v1028, %v1026
    %v1087 = vpack.c.b16 %v1031, %v1029
    %v1088 = vpack.c.b16 %v1032, %v1030
    %v1089 = vpack.c.b16 %v1035, %v1033
    %v1090 = vpack.c.b16 %v1036, %v1034
    %v1091 = vpack.c.b16 %v1039, %v1037
    %v1092 = vpack.c.b16 %v1040, %v1038
    %v1093 = vpack.c.b16 %v1043, %v1041
    %v1094 = vpack.c.b16 %v1044, %v1042
    %v1095 = vpack.c.b16 %v1047, %v1045
    %v1096 = vpack.c.b16 %v1048, %v1046
    %v1097 = vpack.c.b16 %v1051, %v1049
    %v1098 = vpack.c.b16 %v1052, %v1050
    %v1099 = vpack.c.b16 %v1055, %v1053
    %v1100 = vpack.c.b16 %v1056, %v1054
    %v1101 = vpack.c.b16 %v1059, %v1057
    %v1102 = vpack.c.b16 %v1060, %v1058
    %v1103 = vpack.c.b16 %v1063, %v1061
    %v1104 = vpack.c.b16 %v1064, %v1062
    %v1105 = vpack.c.b16 %v1067, %v1065
    %v1106 = vpack.c.b16 %v1068, %v1066
    %v1107 = vpack.c.b16 %v1071, %v1069
    %v1108 = vpack.c.b16 %v1072, %v1070
    %vm1145 = vcmask 261120
    %v1147 = vsel %vm1145, %v956, 0
    %1149 = vmatprep.subr.bf16.mxu0 %v1088
    %1150 = vmatpush1.bf16.msra.mxu0 %v1087
    %1151 = vmatprep.subr.bf16.mxu0 %v1086
    %1152 = vmatpush1.bf16.msra.mxu0 %v1085
    %1153 = vmatprep.subr.bf16.mxu0 %v1084
    %1154 = vmatpush1.bf16.msra.mxu0 %v1083
    %1155 = vmatprep.subr.bf16.mxu0 %v1082
    %1156 = vmatpush1.bf16.msra.mxu0 %v1081
    %1157 = vmatprep.subr.bf16.mxu0 %v1080
    %1158 = vmatpush1.bf16.msra.mxu0 %v1079
    %1159 = vmatprep.subr.bf16.mxu0 %v1078
    %1160 = vmatpush1.bf16.msra.mxu0 %v1077
    %1161 = vmatprep.subr.bf16.mxu0 %v1076
    %1162 = vmatpush1.bf16.msra.mxu0 %v1075
    %1163 = vmatprep.subr.bf16.mxu0 %v1074
    %1164 = vmatpush1.bf16.msra.mxu0 %v1073
    %1165 = vmatprep.subr.bf16.mxu0 %v1104
    %1166 = vmatpush2.bf16.msra.mxu0 %v1103
    %1167 = vmatprep.subr.bf16.mxu0 %v1102
    %1168 = vmatpush2.bf16.msra.mxu0 %v1101
    %1169 = vmatprep.subr.bf16.mxu0 %v1100
    %1170 = vmatpush2.bf16.msra.mxu0 %v1099
    %1171 = vmatprep.subr.bf16.mxu0 %v1098
    %1172 = vmatpush2.bf16.msra.mxu0 %v1097
    %1173 = vmatprep.subr.bf16.mxu0 %v1096
    %1174 = vmatpush2.bf16.msra.mxu0 %v1095
    %1175 = vmatprep.subr.bf16.mxu0 %v1094
    %1176 = vmatpush2.bf16.msra.mxu0 %v1093
    %1177 = vmatprep.subr.bf16.mxu0 %v1092
    %1178 = vmatpush2.bf16.msra.mxu0 %v1091
    %1179 = vmatprep.subr.bf16.mxu0 %v1090
    %1180 = vmatpush2.bf16.msra.mxu0 %v1089
    %1181 = vmatprep.mubr.bf16.mxu0 %v955
    %1182 = vmatmul.mubr.bf16.gmra.mxu0 %v954
    %v1183 = vpop.f32.mrf.mxu0
    %v1184 = vadd.f32 %v960, %v1183
    %v1185 = vpop.f32.mrf.mxu0
    %v1186 = vadd.f32 %v964, %v1185
    %v1187 = vpop.f32.mrf.mxu0
    %v1188 = vpop.f32.mrf.mxu0
    %1189 = vdwg.mxu0
    %1190 = vmatprep.subr.bf16.mxu0 0
    %1191 = vmatpush1.bf16.msra.mxu0 0
    %1192 = vmatprep.subr.bf16.mxu0 0
    %1193 = vmatpush1.bf16.msra.mxu0 0
    %1194 = vmatprep.subr.bf16.mxu0 0
    %1195 = vmatpush1.bf16.msra.mxu0 0
    %1196 = vmatprep.subr.bf16.mxu0 0
    %1197 = vmatpush1.bf16.msra.mxu0 0
    %1198 = vmatprep.subr.bf16.mxu0 0
    %1199 = vmatpush1.bf16.msra.mxu0 0
    %1200 = vmatprep.subr.bf16.mxu0 0
    %1201 = vmatpush1.bf16.msra.mxu0 0
    %1202 = vmatprep.subr.bf16.mxu0 %v1108
    %1203 = vmatpush1.bf16.msra.mxu0 %v1107
    %1204 = vmatprep.subr.bf16.mxu0 %v1106
    %1205 = vmatpush1.bf16.msra.mxu0 %v1105
    %1206 = vmatprep.subr.bf16.mxu0 0
    %1207 = vmatpush2.bf16.msra.mxu0 0
    %1208 = vmatprep.subr.bf16.mxu0 0
    %1209 = vmatpush2.bf16.msra.mxu0 0
    %1210 = vmatprep.subr.bf16.mxu0 0
    %1211 = vmatpush2.bf16.msra.mxu0 0
    %1212 = vmatprep.subr.bf16.mxu0 0
    %1213 = vmatpush2.bf16.msra.mxu0 0
    %1214 = vmatprep.subr.bf16.mxu0 0
    %1215 = vmatpush2.bf16.msra.mxu0 0
    %1216 = vmatprep.subr.bf16.mxu0 0
    %1217 = vmatpush2.bf16.msra.mxu0 0
    %1218 = vmatprep.subr.bf16.mxu0 0
    %1219 = vmatpush2.bf16.msra.mxu0 0
    %1220 = vmatprep.subr.bf16.mxu0 0
    %1221 = vmatpush2.bf16.msra.mxu0 0
    %1222 = vmatprep.mubr.bf16.mxu0 0
    %1223 = vmatmul.mubr.bf16.gmra.mxu0 %v1147
    %v1224 = vpop.f32.mrf.mxu0
    %v1225 = vadd.f32 %v1184, %v1224
    %v1226 = vpop.f32.mrf.mxu0
    %v1227 = vadd.f32 %v1186, %v1226
    %v1228 = vpop.f32.mrf.mxu0
    %v1229 = vpop.f32.mrf.mxu0
    %1230 = vdwg.mxu0
    %v1231 = vmax.f32 %v1225, 0.0
    %v1232 = vmax.f32 %v1227, 0.0
    %v1233 = vld [vmem:[%s4] sm:$0xf]
    %v1234 = vld [vmem:[%s4 + $0x4] sm:$0xf]
    %v1235 = vld [vmem:[%s4 + $0x8] sm:$0xf]
    %v1236 = vld [vmem:[%s4 + $0xc] sm:$0xf]
    %v1237 = vld [vmem:[%s4 + $0x10] sm:$0xf]
    %v1238 = vld [vmem:[%s4 + $0x14] sm:$0xf]
    %v1239 = vld [vmem:[%s4 + $0x18] sm:$0xf]
    %v1240 = vld [vmem:[%s4 + $0x1c] sm:$0xf]
    %v1241 = vld [vmem:[%s4 + $0x20] sm:$0xf]
    %v1242 = vld [vmem:[%s4 + $0x24] sm:$0xf]
    %v1243 = vld [vmem:[%s4 + $0x28] sm:$0xf]
    %v1244 = vld [vmem:[%s4 + $0x2c] sm:$0xf]
    %v1245 = vld [vmem:[%s4 + $0x30] sm:$0xf]
    %v1246 = vld [vmem:[%s4 + $0x34] sm:$0xf]
    %v1247 = vld [vmem:[%s4 + $0x38] sm:$0xf]
    %v1248 = vld [vmem:[%s4 + $0x3c] sm:$0xf]
    %v1249 = vld [vmem:[%s4 + $0x40] sm:$0xf]
    %v1250 = vld [vmem:[%s4 + $0x44] sm:$0xf]
    %v1251 = vld [vmem:[%s4 + $0x48] sm:$0xf]
    %v1252 = vld [vmem:[%s4 + $0x4c] sm:$0xf]
    %v1253 = vpack.c.bf16 %v1231, %v1231
    %v1254 = vpack.c.bf16 %v1232, %v1232
    %v1255 = vlaneseq
    %v1256 = vshrl.u32 %v1255, 7
    %v1257 = vsub.s32 1, %v1256
    %v1258 = vrot.slane %v44, %v1257
    %v1279 = vunpack.c.l.b16 %v1233
    %v1280 = vunpack.c.l.b16 %v1234
    %v1281 = vunpack.c.l.b16 %v1235
    %v1282 = vunpack.c.l.b16 %v1236
    %v1283 = vunpack.c.l.b16 %v1237
    %v1284 = vunpack.c.l.b16 %v1238
    %v1285 = vunpack.c.l.b16 %v1239
    %v1286 = vunpack.c.l.b16 %v1240
    %v1287 = vunpack.c.l.b16 %v1241
    %v1288 = vunpack.c.l.b16 %v1242
    %v1289 = vunpack.c.l.b16 %v1243
    %v1290 = vunpack.c.l.b16 %v1244
    %v1291 = vunpack.c.l.b16 %v1245
    %v1292 = vunpack.c.l.b16 %v1246
    %v1293 = vunpack.c.l.b16 %v1247
    %v1294 = vunpack.c.l.b16 %v1248
    %v1295 = vunpack.c.l.b16 %v1249
    %v1296 = vunpack.c.l.b16 %v1250
    %v1297 = vunpack.c.l.b16 %v1251
    %v1298 = vunpack.c.l.b16 %v1252
    %v1299 = vpack.c.b16 %v1280, %v1279
    %v1300 = vpack.c.b16 %v1282, %v1281
    %v1301 = vpack.c.b16 %v1284, %v1283
    %v1302 = vpack.c.b16 %v1286, %v1285
    %v1303 = vpack.c.b16 %v1288, %v1287
    %v1304 = vpack.c.b16 %v1290, %v1289
    %v1305 = vpack.c.b16 %v1292, %v1291
    %v1306 = vpack.c.b16 %v1294, %v1293
    %v1307 = vpack.c.b16 %v1296, %v1295
    %v1308 = vpack.c.b16 %v1298, %v1297
    %v1320 = vsel %vm1145, %v1254, 0
    %1322 = vmatprep.subr.bf16.mxu0 0
    %1323 = vmatpush1.bf16.msra.mxu0 %v1306
    %1324 = vmatprep.subr.bf16.mxu0 0
    %1325 = vmatpush1.bf16.msra.mxu0 %v1305
    %1326 = vmatprep.subr.bf16.mxu0 0
    %1327 = vmatpush1.bf16.msra.mxu0 %v1304
    %1328 = vmatprep.subr.bf16.mxu0 0
    %1329 = vmatpush1.bf16.msra.mxu0 %v1303
    %1330 = vmatprep.subr.bf16.mxu0 0
    %1331 = vmatpush1.bf16.msra.mxu0 %v1302
    %1332 = vmatprep.subr.bf16.mxu0 0
    %1333 = vmatpush1.bf16.msra.mxu0 %v1301
    %1334 = vmatprep.subr.bf16.mxu0 0
    %1335 = vmatpush1.bf16.msra.mxu0 %v1300
    %1336 = vmatprep.subr.bf16.mxu0 0
    %1337 = vmatpush1.bf16.msra.mxu0 %v1299
    %1338 = vmatprep.subr.bf16.mxu0 0
    %1339 = vmatpush2.bf16.msra.mxu0 0
    %1340 = vmatprep.subr.bf16.mxu0 0
    %1341 = vmatpush2.bf16.msra.mxu0 0
    %1342 = vmatprep.subr.bf16.mxu0 0
    %1343 = vmatpush2.bf16.msra.mxu0 0
    %1344 = vmatprep.subr.bf16.mxu0 0
    %1345 = vmatpush2.bf16.msra.mxu0 0
    %1346 = vmatprep.subr.bf16.mxu0 0
    %1347 = vmatpush2.bf16.msra.mxu0 0
    %1348 = vmatprep.subr.bf16.mxu0 0
    %1349 = vmatpush2.bf16.msra.mxu0 0
    %1350 = vmatprep.subr.bf16.mxu0 0
    %1351 = vmatpush2.bf16.msra.mxu0 %v1308
    %1352 = vmatprep.subr.bf16.mxu0 0
    %1353 = vmatpush2.bf16.msra.mxu0 %v1307
    %1354 = vmatprep.mubr.bf16.mxu0 %v1320
    %1355 = vmatmul.mubr.bf16.gmra.mxu0 %v1253
    %v1356 = vpop.f32.mrf.mxu0
    %v1357 = vadd.f32 %v1258, %v1356
    %v1358 = vpop.f32.mrf.mxu0
    %v1359 = vpop.f32.mrf.mxu0
    %v1360 = vpop.f32.mrf.mxu0
    %1361 = vdwg.mxu0
    %v1362 = vmax.f32 %v1357, 0.0
    %v1363 = vld [vmem:[#allocation2] sm:$0xff]
    %v1364 = vld [vmem:[#allocation2 + $0x8] sm:$0xff]
    %v1365 = vld [vmem:[#allocation2 + $0x10] sm:$0xff]
    %v1366 = vld [vmem:[#allocation2 + $0x18] sm:$0xff]
    %v1367 = vld [vmem:[#allocation2 + $0x20] sm:$0xff]
    %v1368 = vld [vmem:[#allocation2 + $0x28] sm:$0xff]
    %v1369 = vld [vmem:[#allocation2 + $0x30] sm:$0xff]
    %v1370 = vld [vmem:[#allocation2 + $0x38] sm:$0xff]
    %v1371 = vld [vmem:[#allocation2 + $0x40] sm:$0xff]
    %v1372 = vld [vmem:[#allocation2 + $0x48] sm:$0xff]
    %v1373 = vld [vmem:[#allocation2 + $0x50] sm:$0xff]
    %v1374 = vld [vmem:[#allocation2 + $0x58] sm:$0xff]
    %v1375 = vld [vmem:[#allocation2 + $0x60] sm:$0xff]
    %v1376 = vld [vmem:[#allocation2 + $0x68] sm:$0xff]
    %v1377 = vld [vmem:[#allocation2 + $0x70] sm:$0xff]
    %v1378 = vld [vmem:[#allocation2 + $0x78] sm:$0xff]
    %v1379 = vld [vmem:[#allocation2 + $0x80] sm:$0xff]
    %v1380 = vld [vmem:[#allocation2 + $0x88] sm:$0xff]
    %v1381 = vld [vmem:[#allocation2 + $0x90] sm:$0xff]
    %v1382 = vld [vmem:[#allocation2 + $0x98] sm:$0xff]
    %v1383 = vld [vmem:[#allocation2 + $0xa0] sm:$0xff]
    %v1384 = vld [vmem:[#allocation2 + $0xa8] sm:$0xff]
    %v1385 = vld [vmem:[#allocation2 + $0xb0] sm:$0xff]
    %v1386 = vld [vmem:[#allocation2 + $0xb8] sm:$0xff]
    %v1387 = vld [vmem:[#allocation2 + $0xc0] sm:$0xff]
    %v1388 = vld [vmem:[#allocation2 + $0xc8] sm:$0xff]
    %v1389 = vld [vmem:[#allocation2 + $0xd0] sm:$0xff]
    %v1390 = vld [vmem:[#allocation2 + $0xd8] sm:$0xff]
    %v1391 = vld [vmem:[#allocation2 + $0xe0] sm:$0xff]
    %v1392 = vld [vmem:[#allocation2 + $0xe8] sm:$0xff]
    %v1393 = vld [vmem:[#allocation2 + $0xf0] sm:$0xff]
    %v1394 = vld [vmem:[#allocation2 + $0xf8] sm:$0xff]
    %v1395 = vpack.c.bf16 %v872, %v872
    %v1396 = vpack.c.bf16 %v873, %v873
    %v1397 = vld [vmem:[#allocation2 + $0x100] sm:$0xff]
    %v1398 = vld [vmem:[#allocation2 + $0x108] sm:$0xff]
    %v1399 = vld [vmem:[#allocation2 + $0x110] sm:$0xff]
    %v1400 = vld [vmem:[#allocation2 + $0x118] sm:$0xff]
    %v1401 = vld [vmem:[#allocation2 + $0x120] sm:$0xff]
    %v1402 = vld [vmem:[#allocation2 + $0x128] sm:$0xff]
    %v1403 = vld [vmem:[#allocation2 + $0x130] sm:$0xff]
    %v1404 = vld [vmem:[#allocation2 + $0x138] sm:$0xff]
    %v1405 = vld [vmem:[#allocation2 + $0x140] sm:$0xff]
    %v1406 = vld [vmem:[#allocation2 + $0x148] sm:$0xff]
    %v1407 = vld [vmem:[#allocation2 + $0x150] sm:$0xff]
    %v1408 = vld [vmem:[#allocation2 + $0x158] sm:$0xff]
    %v1409 = vld [vmem:[#allocation2 + $0x160] sm:$0xff]
    %v1410 = vld [vmem:[#allocation2 + $0x168] sm:$0xff]
    %v1411 = vld [vmem:[#allocation2 + $0x170] sm:$0xff]
    %v1412 = vld [vmem:[#allocation2 + $0x178] sm:$0xff]
    %v1413 = vld [vmem:[#allocation2 + $0x180] sm:$0xff]
    %v1414 = vld [vmem:[#allocation2 + $0x188] sm:$0xff]
    %v1415 = vld [vmem:[#allocation2 + $0x190] sm:$0xff]
    %v1416 = vld [vmem:[#allocation2 + $0x198] sm:$0xff]
    %v1417 = vld [vmem:[#allocation2 + $0x1a0] sm:$0xff]
    %v1418 = vld [vmem:[#allocation2 + $0x1a8] sm:$0xff]
    %v1419 = vld [vmem:[#allocation2 + $0x1b0] sm:$0xff]
    %v1420 = vld [vmem:[#allocation2 + $0x1b8] sm:$0xff]
    %v1421 = vld [vmem:[#allocation2 + $0x1c0] sm:$0xff]
    %v1422 = vld [vmem:[#allocation2 + $0x1c8] sm:$0xff]
    %v1423 = vld [vmem:[#allocation2 + $0x1d0] sm:$0xff]
    %v1424 = vld [vmem:[#allocation2 + $0x1d8] sm:$0xff]
    %v1425 = vld [vmem:[#allocation2 + $0x1e0] sm:$0xff]
    %v1426 = vld [vmem:[#allocation2 + $0x1e8] sm:$0xff]
    %v1427 = vld [vmem:[#allocation2 + $0x1f0] sm:$0xff]
    %v1428 = vld [vmem:[#allocation2 + $0x1f8] sm:$0xff]
    %v1429 = vpack.c.bf16 %v896, %v896
    %v1430 = vpack.c.bf16 %v897, %v897
    %v1463 = vunpack.c.l.b16 %v1397
    %v1464 = vunpack.c.h.b16 %v1397
    %v1465 = vunpack.c.l.b16 %v1398
    %v1466 = vunpack.c.h.b16 %v1398
    %v1467 = vunpack.c.l.b16 %v1399
    %v1468 = vunpack.c.h.b16 %v1399
    %v1469 = vunpack.c.l.b16 %v1400
    %v1470 = vunpack.c.h.b16 %v1400
    %v1471 = vunpack.c.l.b16 %v1401
    %v1472 = vunpack.c.h.b16 %v1401
    %v1473 = vunpack.c.l.b16 %v1402
    %v1474 = vunpack.c.h.b16 %v1402
    %v1475 = vunpack.c.l.b16 %v1403
    %v1476 = vunpack.c.h.b16 %v1403
    %v1477 = vunpack.c.l.b16 %v1404
    %v1478 = vunpack.c.h.b16 %v1404
    %v1479 = vunpack.c.l.b16 %v1405
    %v1480 = vunpack.c.h.b16 %v1405
    %v1481 = vunpack.c.l.b16 %v1406
    %v1482 = vunpack.c.h.b16 %v1406
    %v1483 = vunpack.c.l.b16 %v1407
    %v1484 = vunpack.c.h.b16 %v1407
    %v1485 = vunpack.c.l.b16 %v1408
    %v1486 = vunpack.c.h.b16 %v1408
    %v1487 = vunpack.c.l.b16 %v1409
    %v1488 = vunpack.c.h.b16 %v1409
    %v1489 = vunpack.c.l.b16 %v1410
    %v1490 = vunpack.c.h.b16 %v1410
    %v1491 = vunpack.c.l.b16 %v1411
    %v1492 = vunpack.c.h.b16 %v1411
    %v1493 = vunpack.c.l.b16 %v1412
    %v1494 = vunpack.c.h.b16 %v1412
    %v1495 = vunpack.c.l.b16 %v1413
    %v1496 = vunpack.c.h.b16 %v1413
    %v1497 = vunpack.c.l.b16 %v1414
    %v1498 = vunpack.c.h.b16 %v1414
    %v1499 = vunpack.c.l.b16 %v1415
    %v1500 = vunpack.c.h.b16 %v1415
    %v1501 = vunpack.c.l.b16 %v1416
    %v1502 = vunpack.c.h.b16 %v1416
    %v1503 = vunpack.c.l.b16 %v1417
    %v1504 = vunpack.c.h.b16 %v1417
    %v1505 = vunpack.c.l.b16 %v1418
    %v1506 = vunpack.c.h.b16 %v1418
    %v1507 = vunpack.c.l.b16 %v1419
    %v1508 = vunpack.c.h.b16 %v1419
    %v1509 = vunpack.c.l.b16 %v1420
    %v1510 = vunpack.c.h.b16 %v1420
    %v1511 = vunpack.c.l.b16 %v1421
    %v1512 = vunpack.c.h.b16 %v1421
    %v1513 = vunpack.c.l.b16 %v1422
    %v1514 = vunpack.c.h.b16 %v1422
    %v1515 = vunpack.c.l.b16 %v1423
    %v1516 = vunpack.c.h.b16 %v1423
    %v1517 = vunpack.c.l.b16 %v1424
    %v1518 = vunpack.c.h.b16 %v1424
    %v1519 = vunpack.c.l.b16 %v1425
    %v1520 = vunpack.c.h.b16 %v1425
    %v1521 = vunpack.c.l.b16 %v1426
    %v1522 = vunpack.c.h.b16 %v1426
    %v1523 = vunpack.c.l.b16 %v1427
    %v1524 = vunpack.c.h.b16 %v1427
    %v1525 = vunpack.c.l.b16 %v1428
    %v1526 = vunpack.c.h.b16 %v1428
    %v1527 = vpack.c.b16 %v1465, %v1463
    %v1528 = vpack.c.b16 %v1466, %v1464
    %v1529 = vpack.c.b16 %v1469, %v1467
    %v1530 = vpack.c.b16 %v1470, %v1468
    %v1531 = vpack.c.b16 %v1473, %v1471
    %v1532 = vpack.c.b16 %v1474, %v1472
    %v1533 = vpack.c.b16 %v1477, %v1475
    %v1534 = vpack.c.b16 %v1478, %v1476
    %v1535 = vpack.c.b16 %v1481, %v1479
    %v1536 = vpack.c.b16 %v1482, %v1480
    %v1537 = vpack.c.b16 %v1485, %v1483
    %v1538 = vpack.c.b16 %v1486, %v1484
    %v1539 = vpack.c.b16 %v1489, %v1487
    %v1540 = vpack.c.b16 %v1490, %v1488
    %v1541 = vpack.c.b16 %v1493, %v1491
    %v1542 = vpack.c.b16 %v1494, %v1492
    %v1543 = vpack.c.b16 %v1497, %v1495
    %v1544 = vpack.c.b16 %v1498, %v1496
    %v1545 = vpack.c.b16 %v1501, %v1499
    %v1546 = vpack.c.b16 %v1502, %v1500
    %v1547 = vpack.c.b16 %v1505, %v1503
    %v1548 = vpack.c.b16 %v1506, %v1504
    %v1549 = vpack.c.b16 %v1509, %v1507
    %v1550 = vpack.c.b16 %v1510, %v1508
    %v1551 = vpack.c.b16 %v1513, %v1511
    %v1552 = vpack.c.b16 %v1514, %v1512
    %v1553 = vpack.c.b16 %v1517, %v1515
    %v1554 = vpack.c.b16 %v1518, %v1516
    %v1555 = vpack.c.b16 %v1521, %v1519
    %v1556 = vpack.c.b16 %v1522, %v1520
    %v1557 = vpack.c.b16 %v1525, %v1523
    %v1558 = vpack.c.b16 %v1526, %v1524
    %1591 = vmatprep.subr.bf16.mxu0 %v1542
    %1592 = vmatpush1.bf16.msra.mxu0 %v1541
    %1593 = vmatprep.subr.bf16.mxu0 %v1540
    %1594 = vmatpush1.bf16.msra.mxu0 %v1539
    %1595 = vmatprep.subr.bf16.mxu0 %v1538
    %1596 = vmatpush1.bf16.msra.mxu0 %v1537
    %1597 = vmatprep.subr.bf16.mxu0 %v1536
    %1598 = vmatpush1.bf16.msra.mxu0 %v1535
    %1599 = vmatprep.subr.bf16.mxu0 %v1534
    %1600 = vmatpush1.bf16.msra.mxu0 %v1533
    %1601 = vmatprep.subr.bf16.mxu0 %v1532
    %1602 = vmatpush1.bf16.msra.mxu0 %v1531
    %1603 = vmatprep.subr.bf16.mxu0 %v1530
    %1604 = vmatpush1.bf16.msra.mxu0 %v1529
    %1605 = vmatprep.subr.bf16.mxu0 %v1528
    %1606 = vmatpush1.bf16.msra.mxu0 %v1527
    %1607 = vmatprep.subr.bf16.mxu0 %v1558
    %1608 = vmatpush2.bf16.msra.mxu0 %v1557
    %1609 = vmatprep.subr.bf16.mxu0 %v1556
    %1610 = vmatpush2.bf16.msra.mxu0 %v1555
    %1611 = vmatprep.subr.bf16.mxu0 %v1554
    %1612 = vmatpush2.bf16.msra.mxu0 %v1553
    %1613 = vmatprep.subr.bf16.mxu0 %v1552
    %1614 = vmatpush2.bf16.msra.mxu0 %v1551
    %1615 = vmatprep.subr.bf16.mxu0 %v1550
    %1616 = vmatpush2.bf16.msra.mxu0 %v1549
    %1617 = vmatprep.subr.bf16.mxu0 %v1548
    %1618 = vmatpush2.bf16.msra.mxu0 %v1547
    %1619 = vmatprep.subr.bf16.mxu0 %v1546
    %1620 = vmatpush2.bf16.msra.mxu0 %v1545
    %1621 = vmatprep.subr.bf16.mxu0 %v1544
    %1622 = vmatpush2.bf16.msra.mxu0 %v1543
    %1623 = vmatprep.mubr.bf16.mxu0 %v1430
    %1624 = vmatmul.mubr.bf16.gmra.mxu0 %v1429
    %v1625 = vpop.f32.mrf.mxu0
    %v1626 = vadd.f32 0.0, %v1625
    %v1627 = vpop.f32.mrf.mxu0
    %v1628 = vadd.f32 0.0, %v1627
    %v1629 = vpop.f32.mrf.mxu0
    %v1630 = vpop.f32.mrf.mxu0
    %1631 = vdwg.mxu0
    %v1664 = vunpack.c.l.b16 %v1363
    %v1665 = vunpack.c.h.b16 %v1363
    %v1666 = vunpack.c.l.b16 %v1364
    %v1667 = vunpack.c.h.b16 %v1364
    %v1668 = vunpack.c.l.b16 %v1365
    %v1669 = vunpack.c.h.b16 %v1365
    %v1670 = vunpack.c.l.b16 %v1366
    %v1671 = vunpack.c.h.b16 %v1366
    %v1672 = vunpack.c.l.b16 %v1367
    %v1673 = vunpack.c.h.b16 %v1367
    %v1674 = vunpack.c.l.b16 %v1368
    %v1675 = vunpack.c.h.b16 %v1368
    %v1676 = vunpack.c.l.b16 %v1369
    %v1677 = vunpack.c.h.b16 %v1369
    %v1678 = vunpack.c.l.b16 %v1370
    %v1679 = vunpack.c.h.b16 %v1370
    %v1680 = vunpack.c.l.b16 %v1371
    %v1681 = vunpack.c.h.b16 %v1371
    %v1682 = vunpack.c.l.b16 %v1372
    %v1683 = vunpack.c.h.b16 %v1372
    %v1684 = vunpack.c.l.b16 %v1373
    %v1685 = vunpack.c.h.b16 %v1373
    %v1686 = vunpack.c.l.b16 %v1374
    %v1687 = vunpack.c.h.b16 %v1374
    %v1688 = vunpack.c.l.b16 %v1375
    %v1689 = vunpack.c.h.b16 %v1375
    %v1690 = vunpack.c.l.b16 %v1376
    %v1691 = vunpack.c.h.b16 %v1376
    %v1692 = vunpack.c.l.b16 %v1377
    %v1693 = vunpack.c.h.b16 %v1377
    %v1694 = vunpack.c.l.b16 %v1378
    %v1695 = vunpack.c.h.b16 %v1378
    %v1696 = vunpack.c.l.b16 %v1379
    %v1697 = vunpack.c.h.b16 %v1379
    %v1698 = vunpack.c.l.b16 %v1380
    %v1699 = vunpack.c.h.b16 %v1380
    %v1700 = vunpack.c.l.b16 %v1381
    %v1701 = vunpack.c.h.b16 %v1381
    %v1702 = vunpack.c.l.b16 %v1382
    %v1703 = vunpack.c.h.b16 %v1382
    %v1704 = vunpack.c.l.b16 %v1383
    %v1705 = vunpack.c.h.b16 %v1383
    %v1706 = vunpack.c.l.b16 %v1384
    %v1707 = vunpack.c.h.b16 %v1384
    %v1708 = vunpack.c.l.b16 %v1385
    %v1709 = vunpack.c.h.b16 %v1385
    %v1710 = vunpack.c.l.b16 %v1386
    %v1711 = vunpack.c.h.b16 %v1386
    %v1712 = vunpack.c.l.b16 %v1387
    %v1713 = vunpack.c.h.b16 %v1387
    %v1714 = vunpack.c.l.b16 %v1388
    %v1715 = vunpack.c.h.b16 %v1388
    %v1716 = vunpack.c.l.b16 %v1389
    %v1717 = vunpack.c.h.b16 %v1389
    %v1718 = vunpack.c.l.b16 %v1390
    %v1719 = vunpack.c.h.b16 %v1390
    %v1720 = vunpack.c.l.b16 %v1391
    %v1721 = vunpack.c.h.b16 %v1391
    %v1722 = vunpack.c.l.b16 %v1392
    %v1723 = vunpack.c.h.b16 %v1392
    %v1724 = vunpack.c.l.b16 %v1393
    %v1725 = vunpack.c.h.b16 %v1393
    %v1726 = vunpack.c.l.b16 %v1394
    %v1727 = vunpack.c.h.b16 %v1394
    %v1728 = vpack.c.b16 %v1666, %v1664
    %v1729 = vpack.c.b16 %v1667, %v1665
    %v1730 = vpack.c.b16 %v1670, %v1668
    %v1731 = vpack.c.b16 %v1671, %v1669
    %v1732 = vpack.c.b16 %v1674, %v1672
    %v1733 = vpack.c.b16 %v1675, %v1673
    %v1734 = vpack.c.b16 %v1678, %v1676
    %v1735 = vpack.c.b16 %v1679, %v1677
    %v1736 = vpack.c.b16 %v1682, %v1680
    %v1737 = vpack.c.b16 %v1683, %v1681
    %v1738 = vpack.c.b16 %v1686, %v1684
    %v1739 = vpack.c.b16 %v1687, %v1685
    %v1740 = vpack.c.b16 %v1690, %v1688
    %v1741 = vpack.c.b16 %v1691, %v1689
    %v1742 = vpack.c.b16 %v1694, %v1692
    %v1743 = vpack.c.b16 %v1695, %v1693
    %v1744 = vpack.c.b16 %v1698, %v1696
    %v1745 = vpack.c.b16 %v1699, %v1697
    %v1746 = vpack.c.b16 %v1702, %v1700
    %v1747 = vpack.c.b16 %v1703, %v1701
    %v1748 = vpack.c.b16 %v1706, %v1704
    %v1749 = vpack.c.b16 %v1707, %v1705
    %v1750 = vpack.c.b16 %v1710, %v1708
    %v1751 = vpack.c.b16 %v1711, %v1709
    %v1752 = vpack.c.b16 %v1714, %v1712
    %v1753 = vpack.c.b16 %v1715, %v1713
    %v1754 = vpack.c.b16 %v1718, %v1716
    %v1755 = vpack.c.b16 %v1719, %v1717
    %v1756 = vpack.c.b16 %v1722, %v1720
    %v1757 = vpack.c.b16 %v1723, %v1721
    %v1758 = vpack.c.b16 %v1726, %v1724
    %v1759 = vpack.c.b16 %v1727, %v1725
    %1792 = vmatprep.subr.bf16.mxu0 %v1743
    %1793 = vmatpush1.bf16.msra.mxu0 %v1742
    %1794 = vmatprep.subr.bf16.mxu0 %v1741
    %1795 = vmatpush1.bf16.msra.mxu0 %v1740
    %1796 = vmatprep.subr.bf16.mxu0 %v1739
    %1797 = vmatpush1.bf16.msra.mxu0 %v1738
    %1798 = vmatprep.subr.bf16.mxu0 %v1737
    %1799 = vmatpush1.bf16.msra.mxu0 %v1736
    %1800 = vmatprep.subr.bf16.mxu0 %v1735
    %1801 = vmatpush1.bf16.msra.mxu0 %v1734
    %1802 = vmatprep.subr.bf16.mxu0 %v1733
    %1803 = vmatpush1.bf16.msra.mxu0 %v1732
    %1804 = vmatprep.subr.bf16.mxu0 %v1731
    %1805 = vmatpush1.bf16.msra.mxu0 %v1730
    %1806 = vmatprep.subr.bf16.mxu0 %v1729
    %1807 = vmatpush1.bf16.msra.mxu0 %v1728
    %1808 = vmatprep.subr.bf16.mxu0 %v1759
    %1809 = vmatpush2.bf16.msra.mxu0 %v1758
    %1810 = vmatprep.subr.bf16.mxu0 %v1757
    %1811 = vmatpush2.bf16.msra.mxu0 %v1756
    %1812 = vmatprep.subr.bf16.mxu0 %v1755
    %1813 = vmatpush2.bf16.msra.mxu0 %v1754
    %1814 = vmatprep.subr.bf16.mxu0 %v1753
    %1815 = vmatpush2.bf16.msra.mxu0 %v1752
    %1816 = vmatprep.subr.bf16.mxu0 %v1751
    %1817 = vmatpush2.bf16.msra.mxu0 %v1750
    %1818 = vmatprep.subr.bf16.mxu0 %v1749
    %1819 = vmatpush2.bf16.msra.mxu0 %v1748
    %1820 = vmatprep.subr.bf16.mxu0 %v1747
    %1821 = vmatpush2.bf16.msra.mxu0 %v1746
    %1822 = vmatprep.subr.bf16.mxu0 %v1745
    %1823 = vmatpush2.bf16.msra.mxu0 %v1744
    %1824 = vmatprep.mubr.bf16.mxu0 %v1396
    %1825 = vmatmul.mubr.bf16.gmra.mxu0 %v1395
    %v1826 = vpop.f32.mrf.mxu0
    %v1827 = vadd.f32 %v1626, %v1826
    %v1828 = vpop.f32.mrf.mxu0
    %v1829 = vadd.f32 %v1628, %v1828
    %v1830 = vpop.f32.mrf.mxu0
    %v1831 = vpop.f32.mrf.mxu0
    %1832 = vdwg.mxu0
    %v1833 = vld [vmem:[#allocation2 + $0x200] sm:$0xff]
    %v1834 = vld [vmem:[#allocation2 + $0x208] sm:$0xff]
    %v1835 = vld [vmem:[#allocation2 + $0x210] sm:$0xff]
    %v1836 = vld [vmem:[#allocation2 + $0x218] sm:$0xff]
    %v1837 = vld [vmem:[#allocation2 + $0x220] sm:$0xff]
    %v1838 = vld [vmem:[#allocation2 + $0x228] sm:$0xff]
    %v1839 = vld [vmem:[#allocation2 + $0x230] sm:$0xff]
    %v1840 = vld [vmem:[#allocation2 + $0x238] sm:$0xff]
    %v1841 = vld [vmem:[#allocation2 + $0x240] sm:$0xff]
    %v1842 = vld [vmem:[#allocation2 + $0x248] sm:$0xff]
    %v1843 = vld [vmem:[#allocation2 + $0x250] sm:$0xff]
    %v1844 = vld [vmem:[#allocation2 + $0x258] sm:$0xff]
    %v1845 = vpack.c.bf16 %v1362, %v1362
    %v1858 = vunpack.c.l.b16 %v1833
    %v1859 = vunpack.c.h.b16 %v1833
    %v1860 = vunpack.c.l.b16 %v1834
    %v1861 = vunpack.c.h.b16 %v1834
    %v1862 = vunpack.c.l.b16 %v1835
    %v1863 = vunpack.c.h.b16 %v1835
    %v1864 = vunpack.c.l.b16 %v1836
    %v1865 = vunpack.c.h.b16 %v1836
    %v1866 = vunpack.c.l.b16 %v1837
    %v1867 = vunpack.c.h.b16 %v1837
    %v1868 = vunpack.c.l.b16 %v1838
    %v1869 = vunpack.c.h.b16 %v1838
    %v1870 = vunpack.c.l.b16 %v1839
    %v1871 = vunpack.c.h.b16 %v1839
    %v1872 = vunpack.c.l.b16 %v1840
    %v1873 = vunpack.c.h.b16 %v1840
    %v1874 = vunpack.c.l.b16 %v1841
    %v1875 = vunpack.c.h.b16 %v1841
    %v1876 = vunpack.c.l.b16 %v1842
    %v1877 = vunpack.c.h.b16 %v1842
    %v1878 = vunpack.c.l.b16 %v1843
    %v1879 = vunpack.c.h.b16 %v1843
    %v1880 = vunpack.c.l.b16 %v1844
    %v1881 = vunpack.c.h.b16 %v1844
    %v1882 = vpack.c.b16 %v1860, %v1858
    %v1883 = vpack.c.b16 %v1861, %v1859
    %v1884 = vpack.c.b16 %v1864, %v1862
    %v1885 = vpack.c.b16 %v1865, %v1863
    %v1886 = vpack.c.b16 %v1868, %v1866
    %v1887 = vpack.c.b16 %v1869, %v1867
    %v1888 = vpack.c.b16 %v1872, %v1870
    %v1889 = vpack.c.b16 %v1873, %v1871
    %v1890 = vpack.c.b16 %v1876, %v1874
    %v1891 = vpack.c.b16 %v1877, %v1875
    %v1892 = vpack.c.b16 %v1880, %v1878
    %v1893 = vpack.c.b16 %v1881, %v1879
    %vm1906 = vcmask 785408
    %v1908 = vsel %vm1906, %v1845, 0
    %1910 = vmatprep.subr.bf16.mxu0 0
    %1911 = vmatpush1.bf16.msra.mxu0 0
    %1912 = vmatprep.subr.bf16.mxu0 0
    %1913 = vmatpush1.bf16.msra.mxu0 0
    %1914 = vmatprep.subr.bf16.mxu0 %v1893
    %1915 = vmatpush1.bf16.msra.mxu0 %v1892
    %1916 = vmatprep.subr.bf16.mxu0 %v1891
    %1917 = vmatpush1.bf16.msra.mxu0 %v1890
    %1918 = vmatprep.subr.bf16.mxu0 %v1889
    %1919 = vmatpush1.bf16.msra.mxu0 %v1888
    %1920 = vmatprep.subr.bf16.mxu0 %v1887
    %1921 = vmatpush1.bf16.msra.mxu0 %v1886
    %1922 = vmatprep.subr.bf16.mxu0 %v1885
    %1923 = vmatpush1.bf16.msra.mxu0 %v1884
    %1924 = vmatprep.subr.bf16.mxu0 %v1883
    %1925 = vmatpush1.bf16.msra.mxu0 %v1882
    %1926 = vmatprep.subr.bf16.mxu0 0
    %1927 = vmatpush2.bf16.msra.mxu0 0
    %1928 = vmatprep.subr.bf16.mxu0 0
    %1929 = vmatpush2.bf16.msra.mxu0 0
    %1930 = vmatprep.subr.bf16.mxu0 0
    %1931 = vmatpush2.bf16.msra.mxu0 0
    %1932 = vmatprep.subr.bf16.mxu0 0
    %1933 = vmatpush2.bf16.msra.mxu0 0
    %1934 = vmatprep.subr.bf16.mxu0 0
    %1935 = vmatpush2.bf16.msra.mxu0 0
    %1936 = vmatprep.subr.bf16.mxu0 0
    %1937 = vmatpush2.bf16.msra.mxu0 0
    %1938 = vmatprep.subr.bf16.mxu0 0
    %1939 = vmatpush2.bf16.msra.mxu0 0
    %1940 = vmatprep.subr.bf16.mxu0 0
    %1941 = vmatpush2.bf16.msra.mxu0 0
    %1942 = vmatprep.mubr.bf16.mxu0 0
    %1943 = vmatmul.mubr.bf16.gmra.mxu0 %v1908
    %v1944 = vpop.f32.mrf.mxu0
    %v1945 = vadd.f32 0.0, %v1944
    %v1946 = vpop.f32.mrf.mxu0
    %v1947 = vadd.f32 0.0, %v1946
    %v1948 = vpop.f32.mrf.mxu0
    %v1949 = vpop.f32.mrf.mxu0
    %1950 = vdwg.mxu0
    %v1951 = vadd.f32 %v1827, %v1945
    %v1952 = vadd.f32 %v1829, %v1947
    %v1953 = vadd.f32 %v1951, %v682
    %v1954 = vadd.f32 %v1952, %v684
    %v1955 = vlaneseq
    %v1956 = vshrl.u32 %v1955, 7
    %v1957 = vsub.s32 2, %v1956
    %v1958 = vrot.slane %v40, %v1957
    %v1959 = vlaneseq
    %v1960 = vshrl.u32 %v1959, 7
    %v1961 = vsub.s32 2, %v1960
    %v1962 = vrot.slane %v41, %v1961
    %v1963 = vadd.f32 %v1953, %v1958
    %v1964 = vadd.f32 %v1954, %v1962
    %v1965 = vmax.f32 %v1963, 0.0
    %v1966 = vmax.f32 %v1964, 0.0
    %v1967 = vld [vmem:[#allocation2 + $0x260] sm:$0xff]
    %v1968 = vld [vmem:[#allocation2 + $0x268] sm:$0xff]
    %v1969 = vld [vmem:[#allocation2 + $0x270] sm:$0xff]
    %v1970 = vld [vmem:[#allocation2 + $0x278] sm:$0xff]
    %v1971 = vld [vmem:[#allocation2 + $0x280] sm:$0xff]
    %v1972 = vld [vmem:[#allocation2 + $0x288] sm:$0xff]
    %v1973 = vld [vmem:[#allocation2 + $0x290] sm:$0xff]
    %v1974 = vld [vmem:[#allocation2 + $0x298] sm:$0xff]
    %v1975 = vld [vmem:[#allocation2 + $0x2a0] sm:$0xff]
    %v1976 = vld [vmem:[#allocation2 + $0x2a8] sm:$0xff]
    %v1977 = vld [vmem:[#allocation2 + $0x2b0] sm:$0xff]
    %v1978 = vld [vmem:[#allocation2 + $0x2b8] sm:$0xff]
    %v1979 = vld [vmem:[#allocation2 + $0x2c0] sm:$0xff]
    %v1980 = vld [vmem:[#allocation2 + $0x2c8] sm:$0xff]
    %v1981 = vld [vmem:[#allocation2 + $0x2d0] sm:$0xff]
    %v1982 = vld [vmem:[#allocation2 + $0x2d8] sm:$0xff]
    %v1983 = vld [vmem:[#allocation2 + $0x2e0] sm:$0xff]
    %v1984 = vld [vmem:[#allocation2 + $0x2e8] sm:$0xff]
    %v1985 = vld [vmem:[#allocation2 + $0x2f0] sm:$0xff]
    %v1986 = vld [vmem:[#allocation2 + $0x2f8] sm:$0xff]
    %v1987 = vld [vmem:[#allocation2 + $0x300] sm:$0xff]
    %v1988 = vld [vmem:[#allocation2 + $0x308] sm:$0xff]
    %v1989 = vld [vmem:[#allocation2 + $0x310] sm:$0xff]
    %v1990 = vld [vmem:[#allocation2 + $0x318] sm:$0xff]
    %v1991 = vld [vmem:[#allocation2 + $0x320] sm:$0xff]
    %v1992 = vld [vmem:[#allocation2 + $0x328] sm:$0xff]
    %v1993 = vld [vmem:[#allocation2 + $0x330] sm:$0xff]
    %v1994 = vld [vmem:[#allocation2 + $0x338] sm:$0xff]
    %v1995 = vld [vmem:[#allocation2 + $0x340] sm:$0xff]
    %v1996 = vld [vmem:[#allocation2 + $0x348] sm:$0xff]
    %v1997 = vld [vmem:[#allocation2 + $0x350] sm:$0xff]
    %v1998 = vld [vmem:[#allocation2 + $0x358] sm:$0xff]
    %v1999 = vpack.c.bf16 %v1965, %v1965
    %v2000 = vpack.c.bf16 %v1966, %v1966
    %v2001 = vlaneseq
    %v2002 = vshrl.u32 %v2001, 7
    %v2003 = vsub.s32 3, %v2002
    %v2004 = vrot.slane %v40, %v2003
    %v2005 = vlaneseq
    %v2006 = vshrl.u32 %v2005, 7
    %v2007 = vsub.s32 3, %v2006
    %v2008 = vrot.slane %v41, %v2007
    %v2041 = vunpack.c.l.b16 %v1967
    %v2042 = vunpack.c.h.b16 %v1967
    %v2043 = vunpack.c.l.b16 %v1968
    %v2044 = vunpack.c.h.b16 %v1968
    %v2045 = vunpack.c.l.b16 %v1969
    %v2046 = vunpack.c.h.b16 %v1969
    %v2047 = vunpack.c.l.b16 %v1970
    %v2048 = vunpack.c.h.b16 %v1970
    %v2049 = vunpack.c.l.b16 %v1971
    %v2050 = vunpack.c.h.b16 %v1971
    %v2051 = vunpack.c.l.b16 %v1972
    %v2052 = vunpack.c.h.b16 %v1972
    %v2053 = vunpack.c.l.b16 %v1973
    %v2054 = vunpack.c.h.b16 %v1973
    %v2055 = vunpack.c.l.b16 %v1974
    %v2056 = vunpack.c.h.b16 %v1974
    %v2057 = vunpack.c.l.b16 %v1975
    %v2058 = vunpack.c.h.b16 %v1975
    %v2059 = vunpack.c.l.b16 %v1976
    %v2060 = vunpack.c.h.b16 %v1976
    %v2061 = vunpack.c.l.b16 %v1977
    %v2062 = vunpack.c.h.b16 %v1977
    %v2063 = vunpack.c.l.b16 %v1978
    %v2064 = vunpack.c.h.b16 %v1978
    %v2065 = vunpack.c.l.b16 %v1979
    %v2066 = vunpack.c.h.b16 %v1979
    %v2067 = vunpack.c.l.b16 %v1980
    %v2068 = vunpack.c.h.b16 %v1980
    %v2069 = vunpack.c.l.b16 %v1981
    %v2070 = vunpack.c.h.b16 %v1981
    %v2071 = vunpack.c.l.b16 %v1982
    %v2072 = vunpack.c.h.b16 %v1982
    %v2073 = vunpack.c.l.b16 %v1983
    %v2074 = vunpack.c.h.b16 %v1983
    %v2075 = vunpack.c.l.b16 %v1984
    %v2076 = vunpack.c.h.b16 %v1984
    %v2077 = vunpack.c.l.b16 %v1985
    %v2078 = vunpack.c.h.b16 %v1985
    %v2079 = vunpack.c.l.b16 %v1986
    %v2080 = vunpack.c.h.b16 %v1986
    %v2081 = vunpack.c.l.b16 %v1987
    %v2082 = vunpack.c.h.b16 %v1987
    %v2083 = vunpack.c.l.b16 %v1988
    %v2084 = vunpack.c.h.b16 %v1988
    %v2085 = vunpack.c.l.b16 %v1989
    %v2086 = vunpack.c.h.b16 %v1989
    %v2087 = vunpack.c.l.b16 %v1990
    %v2088 = vunpack.c.h.b16 %v1990
    %v2089 = vunpack.c.l.b16 %v1991
    %v2090 = vunpack.c.h.b16 %v1991
    %v2091 = vunpack.c.l.b16 %v1992
    %v2092 = vunpack.c.h.b16 %v1992
    %v2093 = vunpack.c.l.b16 %v1993
    %v2094 = vunpack.c.h.b16 %v1993
    %v2095 = vunpack.c.l.b16 %v1994
    %v2096 = vunpack.c.h.b16 %v1994
    %v2097 = vunpack.c.l.b16 %v1995
    %v2098 = vunpack.c.h.b16 %v1995
    %v2099 = vunpack.c.l.b16 %v1996
    %v2100 = vunpack.c.h.b16 %v1996
    %v2101 = vunpack.c.l.b16 %v1997
    %v2102 = vunpack.c.h.b16 %v1997
    %v2103 = vunpack.c.l.b16 %v1998
    %v2104 = vunpack.c.h.b16 %v1998
    %v2105 = vpack.c.b16 %v2043, %v2041
    %v2106 = vpack.c.b16 %v2044, %v2042
    %v2107 = vpack.c.b16 %v2047, %v2045
    %v2108 = vpack.c.b16 %v2048, %v2046
    %v2109 = vpack.c.b16 %v2051, %v2049
    %v2110 = vpack.c.b16 %v2052, %v2050
    %v2111 = vpack.c.b16 %v2055, %v2053
    %v2112 = vpack.c.b16 %v2056, %v2054
    %v2113 = vpack.c.b16 %v2059, %v2057
    %v2114 = vpack.c.b16 %v2060, %v2058
    %v2115 = vpack.c.b16 %v2063, %v2061
    %v2116 = vpack.c.b16 %v2064, %v2062
    %v2117 = vpack.c.b16 %v2067, %v2065
    %v2118 = vpack.c.b16 %v2068, %v2066
    %v2119 = vpack.c.b16 %v2071, %v2069
    %v2120 = vpack.c.b16 %v2072, %v2070
    %v2121 = vpack.c.b16 %v2075, %v2073
    %v2122 = vpack.c.b16 %v2076, %v2074
    %v2123 = vpack.c.b16 %v2079, %v2077
    %v2124 = vpack.c.b16 %v2080, %v2078
    %v2125 = vpack.c.b16 %v2083, %v2081
    %v2126 = vpack.c.b16 %v2084, %v2082
    %v2127 = vpack.c.b16 %v2087, %v2085
    %v2128 = vpack.c.b16 %v2088, %v2086
    %v2129 = vpack.c.b16 %v2091, %v2089
    %v2130 = vpack.c.b16 %v2092, %v2090
    %v2131 = vpack.c.b16 %v2095, %v2093
    %v2132 = vpack.c.b16 %v2096, %v2094
    %v2133 = vpack.c.b16 %v2099, %v2097
    %v2134 = vpack.c.b16 %v2100, %v2098
    %v2135 = vpack.c.b16 %v2103, %v2101
    %v2136 = vpack.c.b16 %v2104, %v2102
    %2169 = vmatprep.subr.bf16.mxu0 %v2120
    %2170 = vmatpush1.bf16.msra.mxu0 %v2119
    %2171 = vmatprep.subr.bf16.mxu0 %v2118
    %2172 = vmatpush1.bf16.msra.mxu0 %v2117
    %2173 = vmatprep.subr.bf16.mxu0 %v2116
    %2174 = vmatpush1.bf16.msra.mxu0 %v2115
    %2175 = vmatprep.subr.bf16.mxu0 %v2114
    %2176 = vmatpush1.bf16.msra.mxu0 %v2113
    %2177 = vmatprep.subr.bf16.mxu0 %v2112
    %2178 = vmatpush1.bf16.msra.mxu0 %v2111
    %2179 = vmatprep.subr.bf16.mxu0 %v2110
    %2180 = vmatpush1.bf16.msra.mxu0 %v2109
    %2181 = vmatprep.subr.bf16.mxu0 %v2108
    %2182 = vmatpush1.bf16.msra.mxu0 %v2107
    %2183 = vmatprep.subr.bf16.mxu0 %v2106
    %2184 = vmatpush1.bf16.msra.mxu0 %v2105
    %2185 = vmatprep.subr.bf16.mxu0 %v2136
    %2186 = vmatpush2.bf16.msra.mxu0 %v2135
    %2187 = vmatprep.subr.bf16.mxu0 %v2134
    %2188 = vmatpush2.bf16.msra.mxu0 %v2133
    %2189 = vmatprep.subr.bf16.mxu0 %v2132
    %2190 = vmatpush2.bf16.msra.mxu0 %v2131
    %2191 = vmatprep.subr.bf16.mxu0 %v2130
    %2192 = vmatpush2.bf16.msra.mxu0 %v2129
    %2193 = vmatprep.subr.bf16.mxu0 %v2128
    %2194 = vmatpush2.bf16.msra.mxu0 %v2127
    %2195 = vmatprep.subr.bf16.mxu0 %v2126
    %2196 = vmatpush2.bf16.msra.mxu0 %v2125
    %2197 = vmatprep.subr.bf16.mxu0 %v2124
    %2198 = vmatpush2.bf16.msra.mxu0 %v2123
    %2199 = vmatprep.subr.bf16.mxu0 %v2122
    %2200 = vmatpush2.bf16.msra.mxu0 %v2121
    %2201 = vmatprep.mubr.bf16.mxu0 %v2000
    %2202 = vmatmul.mubr.bf16.gmra.mxu0 %v1999
    %v2203 = vpop.f32.mrf.mxu0
    %v2204 = vadd.f32 %v2004, %v2203
    %v2205 = vpop.f32.mrf.mxu0
    %v2206 = vadd.f32 %v2008, %v2205
    %v2207 = vpop.f32.mrf.mxu0
    %v2208 = vpop.f32.mrf.mxu0
    %2209 = vdwg.mxu0
    %v2210 = vmax.f32 %v2204, 0.0
    %v2211 = vmax.f32 %v2206, 0.0
    %v2212 = vlaneseq
    %v2213 = vshrl.u32 %v2212, 7
    %v2214 = vsub.s32 4, %v2213
    %v2215 = vrot.slane %v40, %v2214
    %v2216 = vlaneseq
    %v2217 = vshrl.u32 %v2216, 7
    %v2218 = vsub.s32 4, %v2217
    %v2219 = vrot.slane %v41, %v2218
    %v2220 = vmul.f32 %v2210, %v2215
    %v2221 = vmul.f32 %v2211, %v2219
    %v2222 = vadd.f32 %v2220, %v2221
    %2223 = vadd.xlane.f32.xlu0 %v2222
    %v2224 = vpop.xlane.xlu0 %2223
    %v2225 = vlaneseq
    %v2226 = vshrl.u32 %v2225, 7
    %v2227 = vsub.s32 3, %v2226
    %v2228 = vrot.slane %v44, %v2227
    %v2229 = vadd.f32 %v2224, %v2228
    %v2230 = vlaneseq
    %v2231 = vshrl.u32 %v2230, 7
    %v2232 = vsub.s32 6, %v2231
    %v2233 = vrot.slane %v40, %v2232
    %v2234 = vlaneseq
    %v2235 = vshrl.u32 %v2234, 7
    %v2236 = vsub.s32 6, %v2235
    %v2237 = vrot.slane %v41, %v2236
    %v2238 = vlaneseq
    %v2239 = vshrl.u32 %v2238, 7
    %v2240 = vsub.s32 6, %v2239
    %v2241 = vrot.slane %v42, %v2240
    %v2242 = vadd.f32 %v807, %v2233
    %v2243 = vadd.f32 %v846, %v2237
    %v2244 = vadd.f32 %v848, %v2241
    %v2245 = vmax.f32 %v2242, 0.0
    %v2246 = vmax.f32 %v2243, 0.0
    %v2247 = vmax.f32 %v2244, 0.0
    %v2248 = vld [vmem:[%s3 + $0x120] sm:$0xff]
    %v2249 = vld [vmem:[%s3 + $0x128] sm:$0xff]
    %v2250 = vld [vmem:[%s3 + $0x130] sm:$0xff]
    %v2251 = vld [vmem:[%s3 + $0x138] sm:$0xff]
    %v2252 = vld [vmem:[%s3 + $0x140] sm:$0xff]
    %v2253 = vld [vmem:[%s3 + $0x148] sm:$0xff]
    %v2254 = vld [vmem:[%s3 + $0x150] sm:$0xff]
    %v2255 = vld [vmem:[%s3 + $0x158] sm:$0xff]
    %v2256 = vld [vmem:[%s3 + $0x160] sm:$0xff]
    %v2257 = vld [vmem:[%s3 + $0x168] sm:$0xff]
    %v2258 = vld [vmem:[%s3 + $0x170] sm:$0xff]
    %v2259 = vld [vmem:[%s3 + $0x178] sm:$0xff]
    %v2260 = vld [vmem:[%s3 + $0x180] sm:$0xff]
    %v2261 = vld [vmem:[%s3 + $0x188] sm:$0xff]
    %v2262 = vld [vmem:[%s3 + $0x190] sm:$0xff]
    %v2263 = vld [vmem:[%s3 + $0x198] sm:$0xff]
    %v2264 = vld [vmem:[%s3 + $0x1a0] sm:$0xff]
    %v2265 = vld [vmem:[%s3 + $0x1a8] sm:$0xff]
    %v2266 = vld [vmem:[%s3 + $0x1b0] sm:$0xff]
    %v2267 = vld [vmem:[%s3 + $0x1b8] sm:$0xff]
    %v2268 = vld [vmem:[%s3 + $0x1c0] sm:$0xff]
    %v2269 = vld [vmem:[%s3 + $0x1c8] sm:$0xff]
    %v2270 = vld [vmem:[%s3 + $0x1d0] sm:$0xff]
    %v2271 = vld [vmem:[%s3 + $0x1d8] sm:$0xff]
    %v2272 = vld [vmem:[%s3 + $0x1e0] sm:$0xff]
    %v2273 = vld [vmem:[%s3 + $0x1e8] sm:$0xff]
    %v2274 = vld [vmem:[%s3 + $0x1f0] sm:$0xff]
    %v2275 = vld [vmem:[%s3 + $0x1f8] sm:$0xff]
    %v2276 = vld [vmem:[%s3 + $0x200] sm:$0xff]
    %v2277 = vld [vmem:[%s3 + $0x208] sm:$0xff]
    %v2278 = vld [vmem:[%s3 + $0x210] sm:$0xff]
    %v2279 = vld [vmem:[%s3 + $0x218] sm:$0xff]
    %v2280 = vld [vmem:[%s3 + $0x220] sm:$0xff]
    %v2281 = vld [vmem:[%s3 + $0x228] sm:$0xff]
    %v2282 = vld [vmem:[%s3 + $0x230] sm:$0xff]
    %v2283 = vld [vmem:[%s3 + $0x238] sm:$0xff]
    %v2284 = vpack.c.bf16 %v2245, %v2245
    %v2285 = vpack.c.bf16 %v2246, %v2246
    %v2286 = vpack.c.bf16 %v2247, %v2247
    %v2287 = vlaneseq
    %v2288 = vshrl.u32 %v2287, 7
    %v2289 = vsub.s32 0, %v2288
    %v2290 = vrot.slane %v44, %v2289
    %v2291 = vlaneseq
    %v2292 = vshrl.u32 %v2291, 7
    %v2293 = vsub.s32 0, %v2292
    %v2294 = vrot.slane %v45, %v2293
    %v2331 = vunpack.c.l.b16 %v2248
    %v2332 = vunpack.c.h.b16 %v2248
    %v2333 = vunpack.c.l.b16 %v2249
    %v2334 = vunpack.c.h.b16 %v2249
    %v2335 = vunpack.c.l.b16 %v2250
    %v2336 = vunpack.c.h.b16 %v2250
    %v2337 = vunpack.c.l.b16 %v2251
    %v2338 = vunpack.c.h.b16 %v2251
    %v2339 = vunpack.c.l.b16 %v2252
    %v2340 = vunpack.c.h.b16 %v2252
    %v2341 = vunpack.c.l.b16 %v2253
    %v2342 = vunpack.c.h.b16 %v2253
    %v2343 = vunpack.c.l.b16 %v2254
    %v2344 = vunpack.c.h.b16 %v2254
    %v2345 = vunpack.c.l.b16 %v2255
    %v2346 = vunpack.c.h.b16 %v2255
    %v2347 = vunpack.c.l.b16 %v2256
    %v2348 = vunpack.c.h.b16 %v2256
    %v2349 = vunpack.c.l.b16 %v2257
    %v2350 = vunpack.c.h.b16 %v2257
    %v2351 = vunpack.c.l.b16 %v2258
    %v2352 = vunpack.c.h.b16 %v2258
    %v2353 = vunpack.c.l.b16 %v2259
    %v2354 = vunpack.c.h.b16 %v2259
    %v2355 = vunpack.c.l.b16 %v2260
    %v2356 = vunpack.c.h.b16 %v2260
    %v2357 = vunpack.c.l.b16 %v2261
    %v2358 = vunpack.c.h.b16 %v2261
    %v2359 = vunpack.c.l.b16 %v2262
    %v2360 = vunpack.c.h.b16 %v2262
    %v2361 = vunpack.c.l.b16 %v2263
    %v2362 = vunpack.c.h.b16 %v2263
    %v2363 = vunpack.c.l.b16 %v2264
    %v2364 = vunpack.c.h.b16 %v2264
    %v2365 = vunpack.c.l.b16 %v2265
    %v2366 = vunpack.c.h.b16 %v2265
    %v2367 = vunpack.c.l.b16 %v2266
    %v2368 = vunpack.c.h.b16 %v2266
    %v2369 = vunpack.c.l.b16 %v2267
    %v2370 = vunpack.c.h.b16 %v2267
    %v2371 = vunpack.c.l.b16 %v2268
    %v2372 = vunpack.c.h.b16 %v2268
    %v2373 = vunpack.c.l.b16 %v2269
    %v2374 = vunpack.c.h.b16 %v2269
    %v2375 = vunpack.c.l.b16 %v2270
    %v2376 = vunpack.c.h.b16 %v2270
    %v2377 = vunpack.c.l.b16 %v2271
    %v2378 = vunpack.c.h.b16 %v2271
    %v2379 = vunpack.c.l.b16 %v2272
    %v2380 = vunpack.c.h.b16 %v2272
    %v2381 = vunpack.c.l.b16 %v2273
    %v2382 = vunpack.c.h.b16 %v2273
    %v2383 = vunpack.c.l.b16 %v2274
    %v2384 = vunpack.c.h.b16 %v2274
    %v2385 = vunpack.c.l.b16 %v2275
    %v2386 = vunpack.c.h.b16 %v2275
    %v2387 = vunpack.c.l.b16 %v2276
    %v2388 = vunpack.c.h.b16 %v2276
    %v2389 = vunpack.c.l.b16 %v2277
    %v2390 = vunpack.c.h.b16 %v2277
    %v2391 = vunpack.c.l.b16 %v2278
    %v2392 = vunpack.c.h.b16 %v2278
    %v2393 = vunpack.c.l.b16 %v2279
    %v2394 = vunpack.c.h.b16 %v2279
    %v2395 = vunpack.c.l.b16 %v2280
    %v2396 = vunpack.c.h.b16 %v2280
    %v2397 = vunpack.c.l.b16 %v2281
    %v2398 = vunpack.c.h.b16 %v2281
    %v2399 = vunpack.c.l.b16 %v2282
    %v2400 = vunpack.c.h.b16 %v2282
    %v2401 = vunpack.c.l.b16 %v2283
    %v2402 = vunpack.c.h.b16 %v2283
    %v2403 = vpack.c.b16 %v2333, %v2331
    %v2404 = vpack.c.b16 %v2334, %v2332
    %v2405 = vpack.c.b16 %v2337, %v2335
    %v2406 = vpack.c.b16 %v2338, %v2336
    %v2407 = vpack.c.b16 %v2341, %v2339
    %v2408 = vpack.c.b16 %v2342, %v2340
    %v2409 = vpack.c.b16 %v2345, %v2343
    %v2410 = vpack.c.b16 %v2346, %v2344
    %v2411 = vpack.c.b16 %v2349, %v2347
    %v2412 = vpack.c.b16 %v2350, %v2348
    %v2413 = vpack.c.b16 %v2353, %v2351
    %v2414 = vpack.c.b16 %v2354, %v2352
    %v2415 = vpack.c.b16 %v2357, %v2355
    %v2416 = vpack.c.b16 %v2358, %v2356
    %v2417 = vpack.c.b16 %v2361, %v2359
    %v2418 = vpack.c.b16 %v2362, %v2360
    %v2419 = vpack.c.b16 %v2365, %v2363
    %v2420 = vpack.c.b16 %v2366, %v2364
    %v2421 = vpack.c.b16 %v2369, %v2367
    %v2422 = vpack.c.b16 %v2370, %v2368
    %v2423 = vpack.c.b16 %v2373, %v2371
    %v2424 = vpack.c.b16 %v2374, %v2372
    %v2425 = vpack.c.b16 %v2377, %v2375
    %v2426 = vpack.c.b16 %v2378, %v2376
    %v2427 = vpack.c.b16 %v2381, %v2379
    %v2428 = vpack.c.b16 %v2382, %v2380
    %v2429 = vpack.c.b16 %v2385, %v2383
    %v2430 = vpack.c.b16 %v2386, %v2384
    %v2431 = vpack.c.b16 %v2389, %v2387
    %v2432 = vpack.c.b16 %v2390, %v2388
    %v2433 = vpack.c.b16 %v2393, %v2391
    %v2434 = vpack.c.b16 %v2394, %v2392
    %v2435 = vpack.c.b16 %v2397, %v2395
    %v2436 = vpack.c.b16 %v2398, %v2396
    %v2437 = vpack.c.b16 %v2401, %v2399
    %v2438 = vpack.c.b16 %v2402, %v2400
    %v2476 = vsel %vm1145, %v2286, 0
    %2478 = vmatprep.subr.bf16.mxu0 %v2418
    %2479 = vmatpush1.bf16.msra.mxu0 %v2417
    %2480 = vmatprep.subr.bf16.mxu0 %v2416
    %2481 = vmatpush1.bf16.msra.mxu0 %v2415
    %2482 = vmatprep.subr.bf16.mxu0 %v2414
    %2483 = vmatpush1.bf16.msra.mxu0 %v2413
    %2484 = vmatprep.subr.bf16.mxu0 %v2412
    %2485 = vmatpush1.bf16.msra.mxu0 %v2411
    %2486 = vmatprep.subr.bf16.mxu0 %v2410
    %2487 = vmatpush1.bf16.msra.mxu0 %v2409
    %2488 = vmatprep.subr.bf16.mxu0 %v2408
    %2489 = vmatpush1.bf16.msra.mxu0 %v2407
    %2490 = vmatprep.subr.bf16.mxu0 %v2406
    %2491 = vmatpush1.bf16.msra.mxu0 %v2405
    %2492 = vmatprep.subr.bf16.mxu0 %v2404
    %2493 = vmatpush1.bf16.msra.mxu0 %v2403
    %2494 = vmatprep.subr.bf16.mxu0 %v2434
    %2495 = vmatpush2.bf16.msra.mxu0 %v2433
    %2496 = vmatprep.subr.bf16.mxu0 %v2432
    %2497 = vmatpush2.bf16.msra.mxu0 %v2431
    %2498 = vmatprep.subr.bf16.mxu0 %v2430
    %2499 = vmatpush2.bf16.msra.mxu0 %v2429
    %2500 = vmatprep.subr.bf16.mxu0 %v2428
    %2501 = vmatpush2.bf16.msra.mxu0 %v2427
    %2502 = vmatprep.subr.bf16.mxu0 %v2426
    %2503 = vmatpush2.bf16.msra.mxu0 %v2425
    %2504 = vmatprep.subr.bf16.mxu0 %v2424
    %2505 = vmatpush2.bf16.msra.mxu0 %v2423
    %2506 = vmatprep.subr.bf16.mxu0 %v2422
    %2507 = vmatpush2.bf16.msra.mxu0 %v2421
    %2508 = vmatprep.subr.bf16.mxu0 %v2420
    %2509 = vmatpush2.bf16.msra.mxu0 %v2419
    %2510 = vmatprep.mubr.bf16.mxu0 %v2285
    %2511 = vmatmul.mubr.bf16.gmra.mxu0 %v2284
    %v2512 = vpop.f32.mrf.mxu0
    %v2513 = vadd.f32 %v2290, %v2512
    %v2514 = vpop.f32.mrf.mxu0
    %v2515 = vadd.f32 %v2294, %v2514
    %v2516 = vpop.f32.mrf.mxu0
    %v2517 = vpop.f32.mrf.mxu0
    %2518 = vdwg.mxu0
    %2519 = vmatprep.subr.bf16.mxu0 0
    %2520 = vmatpush1.bf16.msra.mxu0 0
    %2521 = vmatprep.subr.bf16.mxu0 0
    %2522 = vmatpush1.bf16.msra.mxu0 0
    %2523 = vmatprep.subr.bf16.mxu0 0
    %2524 = vmatpush1.bf16.msra.mxu0 0
    %2525 = vmatprep.subr.bf16.mxu0 0
    %2526 = vmatpush1.bf16.msra.mxu0 0
    %2527 = vmatprep.subr.bf16.mxu0 0
    %2528 = vmatpush1.bf16.msra.mxu0 0
    %2529 = vmatprep.subr.bf16.mxu0 0
    %2530 = vmatpush1.bf16.msra.mxu0 0
    %2531 = vmatprep.subr.bf16.mxu0 %v2438
    %2532 = vmatpush1.bf16.msra.mxu0 %v2437
    %2533 = vmatprep.subr.bf16.mxu0 %v2436
    %2534 = vmatpush1.bf16.msra.mxu0 %v2435
    %2535 = vmatprep.subr.bf16.mxu0 0
    %2536 = vmatpush2.bf16.msra.mxu0 0
    %2537 = vmatprep.subr.bf16.mxu0 0
    %2538 = vmatpush2.bf16.msra.mxu0 0
    %2539 = vmatprep.subr.bf16.mxu0 0
    %2540 = vmatpush2.bf16.msra.mxu0 0
    %2541 = vmatprep.subr.bf16.mxu0 0
    %2542 = vmatpush2.bf16.msra.mxu0 0
    %2543 = vmatprep.subr.bf16.mxu0 0
    %2544 = vmatpush2.bf16.msra.mxu0 0
    %2545 = vmatprep.subr.bf16.mxu0 0
    %2546 = vmatpush2.bf16.msra.mxu0 0
    %2547 = vmatprep.subr.bf16.mxu0 0
    %2548 = vmatpush2.bf16.msra.mxu0 0
    %2549 = vmatprep.subr.bf16.mxu0 0
    %2550 = vmatpush2.bf16.msra.mxu0 0
    %2551 = vmatprep.mubr.bf16.mxu0 0
    %2552 = vmatmul.mubr.bf16.gmra.mxu0 %v2476
    %v2553 = vpop.f32.mrf.mxu0
    %v2554 = vadd.f32 %v2513, %v2553
    %v2555 = vpop.f32.mrf.mxu0
    %v2556 = vadd.f32 %v2515, %v2555
    %v2557 = vpop.f32.mrf.mxu0
    %v2558 = vpop.f32.mrf.mxu0
    %2559 = vdwg.mxu0
    %v2560 = vmax.f32 %v2554, 0.0
    %v2561 = vmax.f32 %v2556, 0.0
    %v2562 = vld [vmem:[%s4 + $0x50] sm:$0xf]
    %v2563 = vld [vmem:[%s4 + $0x54] sm:$0xf]
    %v2564 = vld [vmem:[%s4 + $0x58] sm:$0xf]
    %v2565 = vld [vmem:[%s4 + $0x5c] sm:$0xf]
    %v2566 = vld [vmem:[%s4 + $0x60] sm:$0xf]
    %v2567 = vld [vmem:[%s4 + $0x64] sm:$0xf]
    %v2568 = vld [vmem:[%s4 + $0x68] sm:$0xf]
    %v2569 = vld [vmem:[%s4 + $0x6c] sm:$0xf]
    %v2570 = vld [vmem:[%s4 + $0x70] sm:$0xf]
    %v2571 = vld [vmem:[%s4 + $0x74] sm:$0xf]
    %v2572 = vld [vmem:[%s4 + $0x78] sm:$0xf]
    %v2573 = vld [vmem:[%s4 + $0x7c] sm:$0xf]
    %v2574 = vld [vmem:[%s4 + $0x80] sm:$0xf]
    %v2575 = vld [vmem:[%s4 + $0x84] sm:$0xf]
    %v2576 = vld [vmem:[%s4 + $0x88] sm:$0xf]
    %v2577 = vld [vmem:[%s4 + $0x8c] sm:$0xf]
    %v2578 = vld [vmem:[%s4 + $0x90] sm:$0xf]
    %v2579 = vld [vmem:[%s4 + $0x94] sm:$0xf]
    %v2580 = vld [vmem:[%s4 + $0x98] sm:$0xf]
    %v2581 = vld [vmem:[%s4 + $0x9c] sm:$0xf]
    %v2582 = vpack.c.bf16 %v2560, %v2560
    %v2583 = vpack.c.bf16 %v2561, %v2561
    %v2584 = vlaneseq
    %v2585 = vshrl.u32 %v2584, 7
    %v2586 = vsub.s32 2, %v2585
    %v2587 = vrot.slane %v44, %v2586
    %v2608 = vunpack.c.l.b16 %v2562
    %v2609 = vunpack.c.l.b16 %v2563
    %v2610 = vunpack.c.l.b16 %v2564
    %v2611 = vunpack.c.l.b16 %v2565
    %v2612 = vunpack.c.l.b16 %v2566
    %v2613 = vunpack.c.l.b16 %v2567
    %v2614 = vunpack.c.l.b16 %v2568
    %v2615 = vunpack.c.l.b16 %v2569
    %v2616 = vunpack.c.l.b16 %v2570
    %v2617 = vunpack.c.l.b16 %v2571
    %v2618 = vunpack.c.l.b16 %v2572
    %v2619 = vunpack.c.l.b16 %v2573
    %v2620 = vunpack.c.l.b16 %v2574
    %v2621 = vunpack.c.l.b16 %v2575
    %v2622 = vunpack.c.l.b16 %v2576
    %v2623 = vunpack.c.l.b16 %v2577
    %v2624 = vunpack.c.l.b16 %v2578
    %v2625 = vunpack.c.l.b16 %v2579
    %v2626 = vunpack.c.l.b16 %v2580
    %v2627 = vunpack.c.l.b16 %v2581
    %v2628 = vpack.c.b16 %v2609, %v2608
    %v2629 = vpack.c.b16 %v2611, %v2610
    %v2630 = vpack.c.b16 %v2613, %v2612
    %v2631 = vpack.c.b16 %v2615, %v2614
    %v2632 = vpack.c.b16 %v2617, %v2616
    %v2633 = vpack.c.b16 %v2619, %v2618
    %v2634 = vpack.c.b16 %v2621, %v2620
    %v2635 = vpack.c.b16 %v2623, %v2622
    %v2636 = vpack.c.b16 %v2625, %v2624
    %v2637 = vpack.c.b16 %v2627, %v2626
    %v2649 = vsel %vm1145, %v2583, 0
    %2651 = vmatprep.subr.bf16.mxu0 0
    %2652 = vmatpush1.bf16.msra.mxu0 %v2635
    %2653 = vmatprep.subr.bf16.mxu0 0
    %2654 = vmatpush1.bf16.msra.mxu0 %v2634
    %2655 = vmatprep.subr.bf16.mxu0 0
    %2656 = vmatpush1.bf16.msra.mxu0 %v2633
    %2657 = vmatprep.subr.bf16.mxu0 0
    %2658 = vmatpush1.bf16.msra.mxu0 %v2632
    %2659 = vmatprep.subr.bf16.mxu0 0
    %2660 = vmatpush1.bf16.msra.mxu0 %v2631
    %2661 = vmatprep.subr.bf16.mxu0 0
    %2662 = vmatpush1.bf16.msra.mxu0 %v2630
    %2663 = vmatprep.subr.bf16.mxu0 0
    %2664 = vmatpush1.bf16.msra.mxu0 %v2629
    %2665 = vmatprep.subr.bf16.mxu0 0
    %2666 = vmatpush1.bf16.msra.mxu0 %v2628
    %2667 = vmatprep.subr.bf16.mxu0 0
    %2668 = vmatpush2.bf16.msra.mxu0 0
    %2669 = vmatprep.subr.bf16.mxu0 0
    %2670 = vmatpush2.bf16.msra.mxu0 0
    %2671 = vmatprep.subr.bf16.mxu0 0
    %2672 = vmatpush2.bf16.msra.mxu0 0
    %2673 = vmatprep.subr.bf16.mxu0 0
    %2674 = vmatpush2.bf16.msra.mxu0 0
    %2675 = vmatprep.subr.bf16.mxu0 0
    %2676 = vmatpush2.bf16.msra.mxu0 0
    %2677 = vmatprep.subr.bf16.mxu0 0
    %2678 = vmatpush2.bf16.msra.mxu0 0
    %2679 = vmatprep.subr.bf16.mxu0 0
    %2680 = vmatpush2.bf16.msra.mxu0 %v2637
    %2681 = vmatprep.subr.bf16.mxu0 0
    %2682 = vmatpush2.bf16.msra.mxu0 %v2636
    %2683 = vmatprep.mubr.bf16.mxu0 %v2649
    %2684 = vmatmul.mubr.bf16.gmra.mxu0 %v2582
    %v2685 = vpop.f32.mrf.mxu0
    %v2686 = vadd.f32 %v2587, %v2685
    %v2687 = vpop.f32.mrf.mxu0
    %v2688 = vpop.f32.mrf.mxu0
    %v2689 = vpop.f32.mrf.mxu0
    %2690 = vdwg.mxu0
    %v2691 = vmax.f32 %v2686, 0.0
    %v2692 = vld [vmem:[#allocation2 + $0x360] sm:$0xff]
    %v2693 = vld [vmem:[#allocation2 + $0x368] sm:$0xff]
    %v2694 = vld [vmem:[#allocation2 + $0x370] sm:$0xff]
    %v2695 = vld [vmem:[#allocation2 + $0x378] sm:$0xff]
    %v2696 = vld [vmem:[#allocation2 + $0x380] sm:$0xff]
    %v2697 = vld [vmem:[#allocation2 + $0x388] sm:$0xff]
    %v2698 = vld [vmem:[#allocation2 + $0x390] sm:$0xff]
    %v2699 = vld [vmem:[#allocation2 + $0x398] sm:$0xff]
    %v2700 = vld [vmem:[#allocation2 + $0x3a0] sm:$0xff]
    %v2701 = vld [vmem:[#allocation2 + $0x3a8] sm:$0xff]
    %v2702 = vld [vmem:[#allocation2 + $0x3b0] sm:$0xff]
    %v2703 = vld [vmem:[#allocation2 + $0x3b8] sm:$0xff]
    %v2704 = vld [vmem:[#allocation2 + $0x3c0] sm:$0xff]
    %v2705 = vld [vmem:[#allocation2 + $0x3c8] sm:$0xff]
    %v2706 = vld [vmem:[#allocation2 + $0x3d0] sm:$0xff]
    %v2707 = vld [vmem:[#allocation2 + $0x3d8] sm:$0xff]
    %v2708 = vld [vmem:[#allocation2 + $0x3e0] sm:$0xff]
    %v2709 = vld [vmem:[#allocation2 + $0x3e8] sm:$0xff]
    %v2710 = vld [vmem:[#allocation2 + $0x3f0] sm:$0xff]
    %v2711 = vld [vmem:[#allocation2 + $0x3f8] sm:$0xff]
    %v2712 = vld [vmem:[#allocation2 + $0x400] sm:$0xff]
    %v2713 = vld [vmem:[#allocation2 + $0x408] sm:$0xff]
    %v2714 = vld [vmem:[#allocation2 + $0x410] sm:$0xff]
    %v2715 = vld [vmem:[#allocation2 + $0x418] sm:$0xff]
    %v2716 = vld [vmem:[#allocation2 + $0x420] sm:$0xff]
    %v2717 = vld [vmem:[#allocation2 + $0x428] sm:$0xff]
    %v2718 = vld [vmem:[#allocation2 + $0x430] sm:$0xff]
    %v2719 = vld [vmem:[#allocation2 + $0x438] sm:$0xff]
    %v2720 = vld [vmem:[#allocation2 + $0x440] sm:$0xff]
    %v2721 = vld [vmem:[#allocation2 + $0x448] sm:$0xff]
    %v2722 = vld [vmem:[#allocation2 + $0x450] sm:$0xff]
    %v2723 = vld [vmem:[#allocation2 + $0x458] sm:$0xff]
    %v2724 = vpack.c.bf16 %v874, %v874
    %v2725 = vpack.c.bf16 %v875, %v875
    %v2726 = vld [vmem:[#allocation2 + $0x460] sm:$0xff]
    %v2727 = vld [vmem:[#allocation2 + $0x468] sm:$0xff]
    %v2728 = vld [vmem:[#allocation2 + $0x470] sm:$0xff]
    %v2729 = vld [vmem:[#allocation2 + $0x478] sm:$0xff]
    %v2730 = vld [vmem:[#allocation2 + $0x480] sm:$0xff]
    %v2731 = vld [vmem:[#allocation2 + $0x488] sm:$0xff]
    %v2732 = vld [vmem:[#allocation2 + $0x490] sm:$0xff]
    %v2733 = vld [vmem:[#allocation2 + $0x498] sm:$0xff]
    %v2734 = vld [vmem:[#allocation2 + $0x4a0] sm:$0xff]
    %v2735 = vld [vmem:[#allocation2 + $0x4a8] sm:$0xff]
    %v2736 = vld [vmem:[#allocation2 + $0x4b0] sm:$0xff]
    %v2737 = vld [vmem:[#allocation2 + $0x4b8] sm:$0xff]
    %v2738 = vld [vmem:[#allocation2 + $0x4c0] sm:$0xff]
    %v2739 = vld [vmem:[#allocation2 + $0x4c8] sm:$0xff]
    %v2740 = vld [vmem:[#allocation2 + $0x4d0] sm:$0xff]
    %v2741 = vld [vmem:[#allocation2 + $0x4d8] sm:$0xff]
    %v2742 = vld [vmem:[#allocation2 + $0x4e0] sm:$0xff]
    %v2743 = vld [vmem:[#allocation2 + $0x4e8] sm:$0xff]
    %v2744 = vld [vmem:[#allocation2 + $0x4f0] sm:$0xff]
    %v2745 = vld [vmem:[#allocation2 + $0x4f8] sm:$0xff]
    %v2746 = vld [vmem:[#allocation2 + $0x500] sm:$0xff]
    %v2747 = vld [vmem:[#allocation2 + $0x508] sm:$0xff]
    %v2748 = vld [vmem:[#allocation2 + $0x510] sm:$0xff]
    %v2749 = vld [vmem:[#allocation2 + $0x518] sm:$0xff]
    %v2750 = vld [vmem:[#allocation2 + $0x520] sm:$0xff]
    %v2751 = vld [vmem:[#allocation2 + $0x528] sm:$0xff]
    %v2752 = vld [vmem:[#allocation2 + $0x530] sm:$0xff]
    %v2753 = vld [vmem:[#allocation2 + $0x538] sm:$0xff]
    %v2754 = vld [vmem:[#allocation2 + $0x540] sm:$0xff]
    %v2755 = vld [vmem:[#allocation2 + $0x548] sm:$0xff]
    %v2756 = vld [vmem:[#allocation2 + $0x550] sm:$0xff]
    %v2757 = vld [vmem:[#allocation2 + $0x558] sm:$0xff]
    %v2758 = vpack.c.bf16 %v898, %v898
    %v2759 = vpack.c.bf16 %v899, %v899
    %v2792 = vunpack.c.l.b16 %v2726
    %v2793 = vunpack.c.h.b16 %v2726
    %v2794 = vunpack.c.l.b16 %v2727
    %v2795 = vunpack.c.h.b16 %v2727
    %v2796 = vunpack.c.l.b16 %v2728
    %v2797 = vunpack.c.h.b16 %v2728
    %v2798 = vunpack.c.l.b16 %v2729
    %v2799 = vunpack.c.h.b16 %v2729
    %v2800 = vunpack.c.l.b16 %v2730
    %v2801 = vunpack.c.h.b16 %v2730
    %v2802 = vunpack.c.l.b16 %v2731
    %v2803 = vunpack.c.h.b16 %v2731
    %v2804 = vunpack.c.l.b16 %v2732
    %v2805 = vunpack.c.h.b16 %v2732
    %v2806 = vunpack.c.l.b16 %v2733
    %v2807 = vunpack.c.h.b16 %v2733
    %v2808 = vunpack.c.l.b16 %v2734
    %v2809 = vunpack.c.h.b16 %v2734
    %v2810 = vunpack.c.l.b16 %v2735
    %v2811 = vunpack.c.h.b16 %v2735
    %v2812 = vunpack.c.l.b16 %v2736
    %v2813 = vunpack.c.h.b16 %v2736
    %v2814 = vunpack.c.l.b16 %v2737
    %v2815 = vunpack.c.h.b16 %v2737
    %v2816 = vunpack.c.l.b16 %v2738
    %v2817 = vunpack.c.h.b16 %v2738
    %v2818 = vunpack.c.l.b16 %v2739
    %v2819 = vunpack.c.h.b16 %v2739
    %v2820 = vunpack.c.l.b16 %v2740
    %v2821 = vunpack.c.h.b16 %v2740
    %v2822 = vunpack.c.l.b16 %v2741
    %v2823 = vunpack.c.h.b16 %v2741
    %v2824 = vunpack.c.l.b16 %v2742
    %v2825 = vunpack.c.h.b16 %v2742
    %v2826 = vunpack.c.l.b16 %v2743
    %v2827 = vunpack.c.h.b16 %v2743
    %v2828 = vunpack.c.l.b16 %v2744
    %v2829 = vunpack.c.h.b16 %v2744
    %v2830 = vunpack.c.l.b16 %v2745
    %v2831 = vunpack.c.h.b16 %v2745
    %v2832 = vunpack.c.l.b16 %v2746
    %v2833 = vunpack.c.h.b16 %v2746
    %v2834 = vunpack.c.l.b16 %v2747
    %v2835 = vunpack.c.h.b16 %v2747
    %v2836 = vunpack.c.l.b16 %v2748
    %v2837 = vunpack.c.h.b16 %v2748
    %v2838 = vunpack.c.l.b16 %v2749
    %v2839 = vunpack.c.h.b16 %v2749
    %v2840 = vunpack.c.l.b16 %v2750
    %v2841 = vunpack.c.h.b16 %v2750
    %v2842 = vunpack.c.l.b16 %v2751
    %v2843 = vunpack.c.h.b16 %v2751
    %v2844 = vunpack.c.l.b16 %v2752
    %v2845 = vunpack.c.h.b16 %v2752
    %v2846 = vunpack.c.l.b16 %v2753
    %v2847 = vunpack.c.h.b16 %v2753
    %v2848 = vunpack.c.l.b16 %v2754
    %v2849 = vunpack.c.h.b16 %v2754
    %v2850 = vunpack.c.l.b16 %v2755
    %v2851 = vunpack.c.h.b16 %v2755
    %v2852 = vunpack.c.l.b16 %v2756
    %v2853 = vunpack.c.h.b16 %v2756
    %v2854 = vunpack.c.l.b16 %v2757
    %v2855 = vunpack.c.h.b16 %v2757
    %v2856 = vpack.c.b16 %v2794, %v2792
    %v2857 = vpack.c.b16 %v2795, %v2793
    %v2858 = vpack.c.b16 %v2798, %v2796
    %v2859 = vpack.c.b16 %v2799, %v2797
    %v2860 = vpack.c.b16 %v2802, %v2800
    %v2861 = vpack.c.b16 %v2803, %v2801
    %v2862 = vpack.c.b16 %v2806, %v2804
    %v2863 = vpack.c.b16 %v2807, %v2805
    %v2864 = vpack.c.b16 %v2810, %v2808
    %v2865 = vpack.c.b16 %v2811, %v2809
    %v2866 = vpack.c.b16 %v2814, %v2812
    %v2867 = vpack.c.b16 %v2815, %v2813
    %v2868 = vpack.c.b16 %v2818, %v2816
    %v2869 = vpack.c.b16 %v2819, %v2817
    %v2870 = vpack.c.b16 %v2822, %v2820
    %v2871 = vpack.c.b16 %v2823, %v2821
    %v2872 = vpack.c.b16 %v2826, %v2824
    %v2873 = vpack.c.b16 %v2827, %v2825
    %v2874 = vpack.c.b16 %v2830, %v2828
    %v2875 = vpack.c.b16 %v2831, %v2829
    %v2876 = vpack.c.b16 %v2834, %v2832
    %v2877 = vpack.c.b16 %v2835, %v2833
    %v2878 = vpack.c.b16 %v2838, %v2836
    %v2879 = vpack.c.b16 %v2839, %v2837
    %v2880 = vpack.c.b16 %v2842, %v2840
    %v2881 = vpack.c.b16 %v2843, %v2841
    %v2882 = vpack.c.b16 %v2846, %v2844
    %v2883 = vpack.c.b16 %v2847, %v2845
    %v2884 = vpack.c.b16 %v2850, %v2848
    %v2885 = vpack.c.b16 %v2851, %v2849
    %v2886 = vpack.c.b16 %v2854, %v2852
    %v2887 = vpack.c.b16 %v2855, %v2853
    %2920 = vmatprep.subr.bf16.mxu0 %v2871
    %2921 = vmatpush1.bf16.msra.mxu0 %v2870
    %2922 = vmatprep.subr.bf16.mxu0 %v2869
    %2923 = vmatpush1.bf16.msra.mxu0 %v2868
    %2924 = vmatprep.subr.bf16.mxu0 %v2867
    %2925 = vmatpush1.bf16.msra.mxu0 %v2866
    %2926 = vmatprep.subr.bf16.mxu0 %v2865
    %2927 = vmatpush1.bf16.msra.mxu0 %v2864
    %2928 = vmatprep.subr.bf16.mxu0 %v2863
    %2929 = vmatpush1.bf16.msra.mxu0 %v2862
    %2930 = vmatprep.subr.bf16.mxu0 %v2861
    %2931 = vmatpush1.bf16.msra.mxu0 %v2860
    %2932 = vmatprep.subr.bf16.mxu0 %v2859
    %2933 = vmatpush1.bf16.msra.mxu0 %v2858
    %2934 = vmatprep.subr.bf16.mxu0 %v2857
    %2935 = vmatpush1.bf16.msra.mxu0 %v2856
    %2936 = vmatprep.subr.bf16.mxu0 %v2887
    %2937 = vmatpush2.bf16.msra.mxu0 %v2886
    %2938 = vmatprep.subr.bf16.mxu0 %v2885
    %2939 = vmatpush2.bf16.msra.mxu0 %v2884
    %2940 = vmatprep.subr.bf16.mxu0 %v2883
    %2941 = vmatpush2.bf16.msra.mxu0 %v2882
    %2942 = vmatprep.subr.bf16.mxu0 %v2881
    %2943 = vmatpush2.bf16.msra.mxu0 %v2880
    %2944 = vmatprep.subr.bf16.mxu0 %v2879
    %2945 = vmatpush2.bf16.msra.mxu0 %v2878
    %2946 = vmatprep.subr.bf16.mxu0 %v2877
    %2947 = vmatpush2.bf16.msra.mxu0 %v2876
    %2948 = vmatprep.subr.bf16.mxu0 %v2875
    %2949 = vmatpush2.bf16.msra.mxu0 %v2874
    %2950 = vmatprep.subr.bf16.mxu0 %v2873
    %2951 = vmatpush2.bf16.msra.mxu0 %v2872
    %2952 = vmatprep.mubr.bf16.mxu0 %v2759
    %2953 = vmatmul.mubr.bf16.gmra.mxu0 %v2758
    %v2954 = vpop.f32.mrf.mxu0
    %v2955 = vadd.f32 0.0, %v2954
    %v2956 = vpop.f32.mrf.mxu0
    %v2957 = vadd.f32 0.0, %v2956
    %v2958 = vpop.f32.mrf.mxu0
    %v2959 = vpop.f32.mrf.mxu0
    %2960 = vdwg.mxu0
    %v2993 = vunpack.c.l.b16 %v2692
    %v2994 = vunpack.c.h.b16 %v2692
    %v2995 = vunpack.c.l.b16 %v2693
    %v2996 = vunpack.c.h.b16 %v2693
    %v2997 = vunpack.c.l.b16 %v2694
    %v2998 = vunpack.c.h.b16 %v2694
    %v2999 = vunpack.c.l.b16 %v2695
    %v3000 = vunpack.c.h.b16 %v2695
    %v3001 = vunpack.c.l.b16 %v2696
    %v3002 = vunpack.c.h.b16 %v2696
    %v3003 = vunpack.c.l.b16 %v2697
    %v3004 = vunpack.c.h.b16 %v2697
    %v3005 = vunpack.c.l.b16 %v2698
    %v3006 = vunpack.c.h.b16 %v2698
    %v3007 = vunpack.c.l.b16 %v2699
    %v3008 = vunpack.c.h.b16 %v2699
    %v3009 = vunpack.c.l.b16 %v2700
    %v3010 = vunpack.c.h.b16 %v2700
    %v3011 = vunpack.c.l.b16 %v2701
    %v3012 = vunpack.c.h.b16 %v2701
    %v3013 = vunpack.c.l.b16 %v2702
    %v3014 = vunpack.c.h.b16 %v2702
    %v3015 = vunpack.c.l.b16 %v2703
    %v3016 = vunpack.c.h.b16 %v2703
    %v3017 = vunpack.c.l.b16 %v2704
    %v3018 = vunpack.c.h.b16 %v2704
    %v3019 = vunpack.c.l.b16 %v2705
    %v3020 = vunpack.c.h.b16 %v2705
    %v3021 = vunpack.c.l.b16 %v2706
    %v3022 = vunpack.c.h.b16 %v2706
    %v3023 = vunpack.c.l.b16 %v2707
    %v3024 = vunpack.c.h.b16 %v2707
    %v3025 = vunpack.c.l.b16 %v2708
    %v3026 = vunpack.c.h.b16 %v2708
    %v3027 = vunpack.c.l.b16 %v2709
    %v3028 = vunpack.c.h.b16 %v2709
    %v3029 = vunpack.c.l.b16 %v2710
    %v3030 = vunpack.c.h.b16 %v2710
    %v3031 = vunpack.c.l.b16 %v2711
    %v3032 = vunpack.c.h.b16 %v2711
    %v3033 = vunpack.c.l.b16 %v2712
    %v3034 = vunpack.c.h.b16 %v2712
    %v3035 = vunpack.c.l.b16 %v2713
    %v3036 = vunpack.c.h.b16 %v2713
    %v3037 = vunpack.c.l.b16 %v2714
    %v3038 = vunpack.c.h.b16 %v2714
    %v3039 = vunpack.c.l.b16 %v2715
    %v3040 = vunpack.c.h.b16 %v2715
    %v3041 = vunpack.c.l.b16 %v2716
    %v3042 = vunpack.c.h.b16 %v2716
    %v3043 = vunpack.c.l.b16 %v2717
    %v3044 = vunpack.c.h.b16 %v2717
    %v3045 = vunpack.c.l.b16 %v2718
    %v3046 = vunpack.c.h.b16 %v2718
    %v3047 = vunpack.c.l.b16 %v2719
    %v3048 = vunpack.c.h.b16 %v2719
    %v3049 = vunpack.c.l.b16 %v2720
    %v3050 = vunpack.c.h.b16 %v2720
    %v3051 = vunpack.c.l.b16 %v2721
    %v3052 = vunpack.c.h.b16 %v2721
    %v3053 = vunpack.c.l.b16 %v2722
    %v3054 = vunpack.c.h.b16 %v2722
    %v3055 = vunpack.c.l.b16 %v2723
    %v3056 = vunpack.c.h.b16 %v2723
    %v3057 = vpack.c.b16 %v2995, %v2993
    %v3058 = vpack.c.b16 %v2996, %v2994
    %v3059 = vpack.c.b16 %v2999, %v2997
    %v3060 = vpack.c.b16 %v3000, %v2998
    %v3061 = vpack.c.b16 %v3003, %v3001
    %v3062 = vpack.c.b16 %v3004, %v3002
    %v3063 = vpack.c.b16 %v3007, %v3005
    %v3064 = vpack.c.b16 %v3008, %v3006
    %v3065 = vpack.c.b16 %v3011, %v3009
    %v3066 = vpack.c.b16 %v3012, %v3010
    %v3067 = vpack.c.b16 %v3015, %v3013
    %v3068 = vpack.c.b16 %v3016, %v3014
    %v3069 = vpack.c.b16 %v3019, %v3017
    %v3070 = vpack.c.b16 %v3020, %v3018
    %v3071 = vpack.c.b16 %v3023, %v3021
    %v3072 = vpack.c.b16 %v3024, %v3022
    %v3073 = vpack.c.b16 %v3027, %v3025
    %v3074 = vpack.c.b16 %v3028, %v3026
    %v3075 = vpack.c.b16 %v3031, %v3029
    %v3076 = vpack.c.b16 %v3032, %v3030
    %v3077 = vpack.c.b16 %v3035, %v3033
    %v3078 = vpack.c.b16 %v3036, %v3034
    %v3079 = vpack.c.b16 %v3039, %v3037
    %v3080 = vpack.c.b16 %v3040, %v3038
    %v3081 = vpack.c.b16 %v3043, %v3041
    %v3082 = vpack.c.b16 %v3044, %v3042
    %v3083 = vpack.c.b16 %v3047, %v3045
    %v3084 = vpack.c.b16 %v3048, %v3046
    %v3085 = vpack.c.b16 %v3051, %v3049
    %v3086 = vpack.c.b16 %v3052, %v3050
    %v3087 = vpack.c.b16 %v3055, %v3053
    %v3088 = vpack.c.b16 %v3056, %v3054
    %3121 = vmatprep.subr.bf16.mxu0 %v3072
    %3122 = vmatpush1.bf16.msra.mxu0 %v3071
    %3123 = vmatprep.subr.bf16.mxu0 %v3070
    %3124 = vmatpush1.bf16.msra.mxu0 %v3069
    %3125 = vmatprep.subr.bf16.mxu0 %v3068
    %3126 = vmatpush1.bf16.msra.mxu0 %v3067
    %3127 = vmatprep.subr.bf16.mxu0 %v3066
    %3128 = vmatpush1.bf16.msra.mxu0 %v3065
    %3129 = vmatprep.subr.bf16.mxu0 %v3064
    %3130 = vmatpush1.bf16.msra.mxu0 %v3063
    %3131 = vmatprep.subr.bf16.mxu0 %v3062
    %3132 = vmatpush1.bf16.msra.mxu0 %v3061
    %3133 = vmatprep.subr.bf16.mxu0 %v3060
    %3134 = vmatpush1.bf16.msra.mxu0 %v3059
    %3135 = vmatprep.subr.bf16.mxu0 %v3058
    %3136 = vmatpush1.bf16.msra.mxu0 %v3057
    %3137 = vmatprep.subr.bf16.mxu0 %v3088
    %3138 = vmatpush2.bf16.msra.mxu0 %v3087
    %3139 = vmatprep.subr.bf16.mxu0 %v3086
    %3140 = vmatpush2.bf16.msra.mxu0 %v3085
    %3141 = vmatprep.subr.bf16.mxu0 %v3084
    %3142 = vmatpush2.bf16.msra.mxu0 %v3083
    %3143 = vmatprep.subr.bf16.mxu0 %v3082
    %3144 = vmatpush2.bf16.msra.mxu0 %v3081
    %3145 = vmatprep.subr.bf16.mxu0 %v3080
    %3146 = vmatpush2.bf16.msra.mxu0 %v3079
    %3147 = vmatprep.subr.bf16.mxu0 %v3078
    %3148 = vmatpush2.bf16.msra.mxu0 %v3077
    %3149 = vmatprep.subr.bf16.mxu0 %v3076
    %3150 = vmatpush2.bf16.msra.mxu0 %v3075
    %3151 = vmatprep.subr.bf16.mxu0 %v3074
    %3152 = vmatpush2.bf16.msra.mxu0 %v3073
    %3153 = vmatprep.mubr.bf16.mxu0 %v2725
    %3154 = vmatmul.mubr.bf16.gmra.mxu0 %v2724
    %v3155 = vpop.f32.mrf.mxu0
    %v3156 = vadd.f32 %v2955, %v3155
    %v3157 = vpop.f32.mrf.mxu0
    %v3158 = vadd.f32 %v2957, %v3157
    %v3159 = vpop.f32.mrf.mxu0
    %v3160 = vpop.f32.mrf.mxu0
    %3161 = vdwg.mxu0
    %v3162 = vld [vmem:[#allocation2 + $0x560] sm:$0xff]
    %v3163 = vld [vmem:[#allocation2 + $0x568] sm:$0xff]
    %v3164 = vld [vmem:[#allocation2 + $0x570] sm:$0xff]
    %v3165 = vld [vmem:[#allocation2 + $0x578] sm:$0xff]
    %v3166 = vld [vmem:[#allocation2 + $0x580] sm:$0xff]
    %v3167 = vld [vmem:[#allocation2 + $0x588] sm:$0xff]
    %v3168 = vld [vmem:[#allocation2 + $0x590] sm:$0xff]
    %v3169 = vld [vmem:[#allocation2 + $0x598] sm:$0xff]
    %v3170 = vld [vmem:[#allocation2 + $0x5a0] sm:$0xff]
    %v3171 = vld [vmem:[#allocation2 + $0x5a8] sm:$0xff]
    %v3172 = vld [vmem:[#allocation2 + $0x5b0] sm:$0xff]
    %v3173 = vld [vmem:[#allocation2 + $0x5b8] sm:$0xff]
    %v3174 = vpack.c.bf16 %v2691, %v2691
    %v3187 = vunpack.c.l.b16 %v3162
    %v3188 = vunpack.c.h.b16 %v3162
    %v3189 = vunpack.c.l.b16 %v3163
    %v3190 = vunpack.c.h.b16 %v3163
    %v3191 = vunpack.c.l.b16 %v3164
    %v3192 = vunpack.c.h.b16 %v3164
    %v3193 = vunpack.c.l.b16 %v3165
    %v3194 = vunpack.c.h.b16 %v3165
    %v3195 = vunpack.c.l.b16 %v3166
    %v3196 = vunpack.c.h.b16 %v3166
    %v3197 = vunpack.c.l.b16 %v3167
    %v3198 = vunpack.c.h.b16 %v3167
    %v3199 = vunpack.c.l.b16 %v3168
    %v3200 = vunpack.c.h.b16 %v3168
    %v3201 = vunpack.c.l.b16 %v3169
    %v3202 = vunpack.c.h.b16 %v3169
    %v3203 = vunpack.c.l.b16 %v3170
    %v3204 = vunpack.c.h.b16 %v3170
    %v3205 = vunpack.c.l.b16 %v3171
    %v3206 = vunpack.c.h.b16 %v3171
    %v3207 = vunpack.c.l.b16 %v3172
    %v3208 = vunpack.c.h.b16 %v3172
    %v3209 = vunpack.c.l.b16 %v3173
    %v3210 = vunpack.c.h.b16 %v3173
    %v3211 = vpack.c.b16 %v3189, %v3187
    %v3212 = vpack.c.b16 %v3190, %v3188
    %v3213 = vpack.c.b16 %v3193, %v3191
    %v3214 = vpack.c.b16 %v3194, %v3192
    %v3215 = vpack.c.b16 %v3197, %v3195
    %v3216 = vpack.c.b16 %v3198, %v3196
    %v3217 = vpack.c.b16 %v3201, %v3199
    %v3218 = vpack.c.b16 %v3202, %v3200
    %v3219 = vpack.c.b16 %v3205, %v3203
    %v3220 = vpack.c.b16 %v3206, %v3204
    %v3221 = vpack.c.b16 %v3209, %v3207
    %v3222 = vpack.c.b16 %v3210, %v3208
    %v3236 = vsel %vm1906, %v3174, 0
    %3238 = vmatprep.subr.bf16.mxu0 0
    %3239 = vmatpush1.bf16.msra.mxu0 0
    %3240 = vmatprep.subr.bf16.mxu0 0
    %3241 = vmatpush1.bf16.msra.mxu0 0
    %3242 = vmatprep.subr.bf16.mxu0 %v3222
    %3243 = vmatpush1.bf16.msra.mxu0 %v3221
    %3244 = vmatprep.subr.bf16.mxu0 %v3220
    %3245 = vmatpush1.bf16.msra.mxu0 %v3219
    %3246 = vmatprep.subr.bf16.mxu0 %v3218
    %3247 = vmatpush1.bf16.msra.mxu0 %v3217
    %3248 = vmatprep.subr.bf16.mxu0 %v3216
    %3249 = vmatpush1.bf16.msra.mxu0 %v3215
    %3250 = vmatprep.subr.bf16.mxu0 %v3214
    %3251 = vmatpush1.bf16.msra.mxu0 %v3213
    %3252 = vmatprep.subr.bf16.mxu0 %v3212
    %3253 = vmatpush1.bf16.msra.mxu0 %v3211
    %3254 = vmatprep.subr.bf16.mxu0 0
    %3255 = vmatpush2.bf16.msra.mxu0 0
    %3256 = vmatprep.subr.bf16.mxu0 0
    %3257 = vmatpush2.bf16.msra.mxu0 0
    %3258 = vmatprep.subr.bf16.mxu0 0
    %3259 = vmatpush2.bf16.msra.mxu0 0
    %3260 = vmatprep.subr.bf16.mxu0 0
    %3261 = vmatpush2.bf16.msra.mxu0 0
    %3262 = vmatprep.subr.bf16.mxu0 0
    %3263 = vmatpush2.bf16.msra.mxu0 0
    %3264 = vmatprep.subr.bf16.mxu0 0
    %3265 = vmatpush2.bf16.msra.mxu0 0
    %3266 = vmatprep.subr.bf16.mxu0 0
    %3267 = vmatpush2.bf16.msra.mxu0 0
    %3268 = vmatprep.subr.bf16.mxu0 0
    %3269 = vmatpush2.bf16.msra.mxu0 0
    %3270 = vmatprep.mubr.bf16.mxu0 0
    %3271 = vmatmul.mubr.bf16.gmra.mxu0 %v3236
    %v3272 = vpop.f32.mrf.mxu0
    %v3273 = vadd.f32 0.0, %v3272
    %v3274 = vpop.f32.mrf.mxu0
    %v3275 = vadd.f32 0.0, %v3274
    %v3276 = vpop.f32.mrf.mxu0
    %v3277 = vpop.f32.mrf.mxu0
    %3278 = vdwg.mxu0
    %v3279 = vadd.f32 %v3156, %v3273
    %v3280 = vadd.f32 %v3158, %v3275
    %v3281 = vadd.f32 %v3279, %v723
    %v3282 = vadd.f32 %v3280, %v725
    %v3283 = vlaneseq
    %v3284 = vshrl.u32 %v3283, 7
    %v3285 = vsub.s32 2, %v3284
    %v3286 = vrot.slane %v42, %v3285
    %v3287 = vlaneseq
    %v3288 = vshrl.u32 %v3287, 7
    %v3289 = vsub.s32 2, %v3288
    %v3290 = vrot.slane %v43, %v3289
    %v3291 = vadd.f32 %v3281, %v3286
    %v3292 = vadd.f32 %v3282, %v3290
    %v3293 = vmax.f32 %v3291, 0.0
    %v3294 = vmax.f32 %v3292, 0.0
    %v3295 = vld [vmem:[#allocation2 + $0x5c0] sm:$0xff]
    %v3296 = vld [vmem:[#allocation2 + $0x5c8] sm:$0xff]
    %v3297 = vld [vmem:[#allocation2 + $0x5d0] sm:$0xff]
    %v3298 = vld [vmem:[#allocation2 + $0x5d8] sm:$0xff]
    %v3299 = vld [vmem:[#allocation2 + $0x5e0] sm:$0xff]
    %v3300 = vld [vmem:[#allocation2 + $0x5e8] sm:$0xff]
    %v3301 = vld [vmem:[#allocation2 + $0x5f0] sm:$0xff]
    %v3302 = vld [vmem:[#allocation2 + $0x5f8] sm:$0xff]
    %v3303 = vld [vmem:[#allocation2 + $0x600] sm:$0xff]
    %v3304 = vld [vmem:[#allocation2 + $0x608] sm:$0xff]
    %v3305 = vld [vmem:[#allocation2 + $0x610] sm:$0xff]
    %v3306 = vld [vmem:[#allocation2 + $0x618] sm:$0xff]
    %v3307 = vld [vmem:[#allocation2 + $0x620] sm:$0xff]
    %v3308 = vld [vmem:[#allocation2 + $0x628] sm:$0xff]
    %v3309 = vld [vmem:[#allocation2 + $0x630] sm:$0xff]
    %v3310 = vld [vmem:[#allocation2 + $0x638] sm:$0xff]
    %v3311 = vld [vmem:[#allocation2 + $0x640] sm:$0xff]
    %v3312 = vld [vmem:[#allocation2 + $0x648] sm:$0xff]
    %v3313 = vld [vmem:[#allocation2 + $0x650] sm:$0xff]
    %v3314 = vld [vmem:[#allocation2 + $0x658] sm:$0xff]
    %v3315 = vld [vmem:[#allocation2 + $0x660] sm:$0xff]
    %v3316 = vld [vmem:[#allocation2 + $0x668] sm:$0xff]
    %v3317 = vld [vmem:[#allocation2 + $0x670] sm:$0xff]
    %v3318 = vld [vmem:[#allocation2 + $0x678] sm:$0xff]
    %v3319 = vld [vmem:[#allocation2 + $0x680] sm:$0xff]
    %v3320 = vld [vmem:[#allocation2 + $0x688] sm:$0xff]
    %v3321 = vld [vmem:[#allocation2 + $0x690] sm:$0xff]
    %v3322 = vld [vmem:[#allocation2 + $0x698] sm:$0xff]
    %v3323 = vld [vmem:[#allocation2 + $0x6a0] sm:$0xff]
    %v3324 = vld [vmem:[#allocation2 + $0x6a8] sm:$0xff]
    %v3325 = vld [vmem:[#allocation2 + $0x6b0] sm:$0xff]
    %v3326 = vld [vmem:[#allocation2 + $0x6b8] sm:$0xff]
    %v3327 = vpack.c.bf16 %v3293, %v3293
    %v3328 = vpack.c.bf16 %v3294, %v3294
    %v3329 = vlaneseq
    %v3330 = vshrl.u32 %v3329, 7
    %v3331 = vsub.s32 3, %v3330
    %v3332 = vrot.slane %v42, %v3331
    %v3333 = vlaneseq
    %v3334 = vshrl.u32 %v3333, 7
    %v3335 = vsub.s32 3, %v3334
    %v3336 = vrot.slane %v43, %v3335
    %v3369 = vunpack.c.l.b16 %v3295
    %v3370 = vunpack.c.h.b16 %v3295
    %v3371 = vunpack.c.l.b16 %v3296
    %v3372 = vunpack.c.h.b16 %v3296
    %v3373 = vunpack.c.l.b16 %v3297
    %v3374 = vunpack.c.h.b16 %v3297
    %v3375 = vunpack.c.l.b16 %v3298
    %v3376 = vunpack.c.h.b16 %v3298
    %v3377 = vunpack.c.l.b16 %v3299
    %v3378 = vunpack.c.h.b16 %v3299
    %v3379 = vunpack.c.l.b16 %v3300
    %v3380 = vunpack.c.h.b16 %v3300
    %v3381 = vunpack.c.l.b16 %v3301
    %v3382 = vunpack.c.h.b16 %v3301
    %v3383 = vunpack.c.l.b16 %v3302
    %v3384 = vunpack.c.h.b16 %v3302
    %v3385 = vunpack.c.l.b16 %v3303
    %v3386 = vunpack.c.h.b16 %v3303
    %v3387 = vunpack.c.l.b16 %v3304
    %v3388 = vunpack.c.h.b16 %v3304
    %v3389 = vunpack.c.l.b16 %v3305
    %v3390 = vunpack.c.h.b16 %v3305
    %v3391 = vunpack.c.l.b16 %v3306
    %v3392 = vunpack.c.h.b16 %v3306
    %v3393 = vunpack.c.l.b16 %v3307
    %v3394 = vunpack.c.h.b16 %v3307
    %v3395 = vunpack.c.l.b16 %v3308
    %v3396 = vunpack.c.h.b16 %v3308
    %v3397 = vunpack.c.l.b16 %v3309
    %v3398 = vunpack.c.h.b16 %v3309
    %v3399 = vunpack.c.l.b16 %v3310
    %v3400 = vunpack.c.h.b16 %v3310
    %v3401 = vunpack.c.l.b16 %v3311
    %v3402 = vunpack.c.h.b16 %v3311
    %v3403 = vunpack.c.l.b16 %v3312
    %v3404 = vunpack.c.h.b16 %v3312
    %v3405 = vunpack.c.l.b16 %v3313
    %v3406 = vunpack.c.h.b16 %v3313
    %v3407 = vunpack.c.l.b16 %v3314
    %v3408 = vunpack.c.h.b16 %v3314
    %v3409 = vunpack.c.l.b16 %v3315
    %v3410 = vunpack.c.h.b16 %v3315
    %v3411 = vunpack.c.l.b16 %v3316
    %v3412 = vunpack.c.h.b16 %v3316
    %v3413 = vunpack.c.l.b16 %v3317
    %v3414 = vunpack.c.h.b16 %v3317
    %v3415 = vunpack.c.l.b16 %v3318
    %v3416 = vunpack.c.h.b16 %v3318
    %v3417 = vunpack.c.l.b16 %v3319
    %v3418 = vunpack.c.h.b16 %v3319
    %v3419 = vunpack.c.l.b16 %v3320
    %v3420 = vunpack.c.h.b16 %v3320
    %v3421 = vunpack.c.l.b16 %v3321
    %v3422 = vunpack.c.h.b16 %v3321
    %v3423 = vunpack.c.l.b16 %v3322
    %v3424 = vunpack.c.h.b16 %v3322
    %v3425 = vunpack.c.l.b16 %v3323
    %v3426 = vunpack.c.h.b16 %v3323
    %v3427 = vunpack.c.l.b16 %v3324
    %v3428 = vunpack.c.h.b16 %v3324
    %v3429 = vunpack.c.l.b16 %v3325
    %v3430 = vunpack.c.h.b16 %v3325
    %v3431 = vunpack.c.l.b16 %v3326
    %v3432 = vunpack.c.h.b16 %v3326
    %v3433 = vpack.c.b16 %v3371, %v3369
    %v3434 = vpack.c.b16 %v3372, %v3370
    %v3435 = vpack.c.b16 %v3375, %v3373
    %v3436 = vpack.c.b16 %v3376, %v3374
    %v3437 = vpack.c.b16 %v3379, %v3377
    %v3438 = vpack.c.b16 %v3380, %v3378
    %v3439 = vpack.c.b16 %v3383, %v3381
    %v3440 = vpack.c.b16 %v3384, %v3382
    %v3441 = vpack.c.b16 %v3387, %v3385
    %v3442 = vpack.c.b16 %v3388, %v3386
    %v3443 = vpack.c.b16 %v3391, %v3389
    %v3444 = vpack.c.b16 %v3392, %v3390
    %v3445 = vpack.c.b16 %v3395, %v3393
    %v3446 = vpack.c.b16 %v3396, %v3394
    %v3447 = vpack.c.b16 %v3399, %v3397
    %v3448 = vpack.c.b16 %v3400, %v3398
    %v3449 = vpack.c.b16 %v3403, %v3401
    %v3450 = vpack.c.b16 %v3404, %v3402
    %v3451 = vpack.c.b16 %v3407, %v3405
    %v3452 = vpack.c.b16 %v3408, %v3406
    %v3453 = vpack.c.b16 %v3411, %v3409
    %v3454 = vpack.c.b16 %v3412, %v3410
    %v3455 = vpack.c.b16 %v3415, %v3413
    %v3456 = vpack.c.b16 %v3416, %v3414
    %v3457 = vpack.c.b16 %v3419, %v3417
    %v3458 = vpack.c.b16 %v3420, %v3418
    %v3459 = vpack.c.b16 %v3423, %v3421
    %v3460 = vpack.c.b16 %v3424, %v3422
    %v3461 = vpack.c.b16 %v3427, %v3425
    %v3462 = vpack.c.b16 %v3428, %v3426
    %v3463 = vpack.c.b16 %v3431, %v3429
    %v3464 = vpack.c.b16 %v3432, %v3430
    %3497 = vmatprep.subr.bf16.mxu0 %v3448
    %3498 = vmatpush1.bf16.msra.mxu0 %v3447
    %3499 = vmatprep.subr.bf16.mxu0 %v3446
    %3500 = vmatpush1.bf16.msra.mxu0 %v3445
    %3501 = vmatprep.subr.bf16.mxu0 %v3444
    %3502 = vmatpush1.bf16.msra.mxu0 %v3443
    %3503 = vmatprep.subr.bf16.mxu0 %v3442
    %3504 = vmatpush1.bf16.msra.mxu0 %v3441
    %3505 = vmatprep.subr.bf16.mxu0 %v3440
    %3506 = vmatpush1.bf16.msra.mxu0 %v3439
    %3507 = vmatprep.subr.bf16.mxu0 %v3438
    %3508 = vmatpush1.bf16.msra.mxu0 %v3437
    %3509 = vmatprep.subr.bf16.mxu0 %v3436
    %3510 = vmatpush1.bf16.msra.mxu0 %v3435
    %3511 = vmatprep.subr.bf16.mxu0 %v3434
    %3512 = vmatpush1.bf16.msra.mxu0 %v3433
    %3513 = vmatprep.subr.bf16.mxu0 %v3464
    %3514 = vmatpush2.bf16.msra.mxu0 %v3463
    %3515 = vmatprep.subr.bf16.mxu0 %v3462
    %3516 = vmatpush2.bf16.msra.mxu0 %v3461
    %3517 = vmatprep.subr.bf16.mxu0 %v3460
    %3518 = vmatpush2.bf16.msra.mxu0 %v3459
    %3519 = vmatprep.subr.bf16.mxu0 %v3458
    %3520 = vmatpush2.bf16.msra.mxu0 %v3457
    %3521 = vmatprep.subr.bf16.mxu0 %v3456
    %3522 = vmatpush2.bf16.msra.mxu0 %v3455
    %3523 = vmatprep.subr.bf16.mxu0 %v3454
    %3524 = vmatpush2.bf16.msra.mxu0 %v3453
    %3525 = vmatprep.subr.bf16.mxu0 %v3452
    %3526 = vmatpush2.bf16.msra.mxu0 %v3451
    %3527 = vmatprep.subr.bf16.mxu0 %v3450
    %3528 = vmatpush2.bf16.msra.mxu0 %v3449
    %3529 = vmatprep.mubr.bf16.mxu0 %v3328
    %3530 = vmatmul.mubr.bf16.gmra.mxu0 %v3327
    %v3531 = vpop.f32.mrf.mxu0
    %v3532 = vadd.f32 %v3332, %v3531
    %v3533 = vpop.f32.mrf.mxu0
    %v3534 = vadd.f32 %v3336, %v3533
    %v3535 = vpop.f32.mrf.mxu0
    %v3536 = vpop.f32.mrf.mxu0
    %3537 = vdwg.mxu0
    %v3538 = vmax.f32 %v3532, 0.0
    %v3539 = vmax.f32 %v3534, 0.0
    %v3540 = vlaneseq
    %v3541 = vshrl.u32 %v3540, 7
    %v3542 = vsub.s32 4, %v3541
    %v3543 = vrot.slane %v42, %v3542
    %v3544 = vlaneseq
    %v3545 = vshrl.u32 %v3544, 7
    %v3546 = vsub.s32 4, %v3545
    %v3547 = vrot.slane %v43, %v3546
    %v3548 = vmul.f32 %v3538, %v3543
    %v3549 = vmul.f32 %v3539, %v3547
    %v3550 = vadd.f32 %v3548, %v3549
    %3551 = vadd.xlane.f32.xlu0 %v3550
    %v3552 = vpop.xlane.xlu0 %3551
    %v3553 = vadd.f32 %v3552, %v2228
    %v3554 = vlaneseq
    %v3555 = vand.u32 %v3554, 127
    %vm3556 = vcmp.eq.s32.totalorder %v3555, 0
    %vm3557 = vcmp.eq.s32.totalorder %v3555, 1
    %3559 = vset.pattern.permute.xlu0 1
    %3560 = vperm.xlu0 %3559, %v3553
    %v3561 = vpop.permute.xlu0 %3560
    %v3563 = vsel %vm3557, %v3561, 0.0
    %3565 = vset.pattern.permute.xlu0 0
    %3566 = vperm.xlu0 %3565, %v2229
    %v3567 = vpop.permute.xlu0 %3566
    %v3569 = vsel %vm3556, %v3567, %v3563
    %3570 = vst [vmem:[#allocation5] sm:$0xff] %v3569
    // Predicated region
    $region30: #{tpu_custom_call.1} parent=1 // pred_check
      _
    $region31: #{tpu_custom_call.1} parent=1 // pred_check_branch
      %3572 = sbr.rel (0) target = $region33
    $region32: #{tpu_custom_call.1} parent=1 // pred_region
      %s3574 = ssub.s32 128, 128
      %3575 = vsyncadd [#allocation4], %s3574
      %s3577 = sshll.u32 [#allocation5], 4
      %s3578 = int_to_ptr.vmem [resolvable:$true] %s3577
      %3580 = dma.vmem_to_hbm [thread:$0]  %s3578, 128, %s6, [#allocation4]
    $region33: #{tpu_custom_call.1} parent=1 // pred_fallthru
      _
    // Predicated region
    $region34: #{tpu_custom_call.1} parent=1 // pred_check
      _
    $region35: #{tpu_custom_call.1} parent=1 // pred_check_branch
      %3582 = sbr.rel (0) target = $region37
    $region36: #{tpu_custom_call.1} parent=1 // pred_region
      %3583 = dma.done [#allocation4], 128
    $region37: #{tpu_custom_call.1} parent=1 // pred_fallthru
      _
    %3584 = vsyncpa [#allocation3], 1
    %3585 = vsyncpa [#allocation4], 1

</llo_original>
